<compile_context>
chip_gen: v5e
topology: v5e:2x2
jax: 0.10.0
libtpu: 0.0.40
codegen_flags: <defaults>
</compile_context>

<pallas_src>
import jax
import jax.numpy as jnp
from jax import lax
from jax.experimental import pallas as pl
from jax.experimental.pallas import tpu as pltpu


VMEM_LIMIT_BYTES = 64 * 1024 * 1024  # v7x per-core physical; v5e/v6e (128 MiB) could go higher


def round_up(x, m):
    return (x + m - 1) // m * m


# ----------------------------------------------------------------------------
# Feature probe: single-buffered (pipeline_mode=pl.Buffered(1)) weight operands
# ----------------------------------------------------------------------------
_SINGLE_BUFFER = {"checked": False, "ok": False}


def _probe_buffered_single():
    """Check whether this JAX accepts pl.Buffered(buffer_count=1) on a grid-invariant input."""
    try:
        def k(w_ref, x_ref, o_ref):
            o_ref[...] = x_ref[...] + w_ref[...]

        f = pl.pallas_call(
            k,
            out_shape=jax.ShapeDtypeStruct((16, 128), jnp.float32),
            grid_spec=pltpu.PrefetchScalarGridSpec(
                num_scalar_prefetch=0,
                grid=(2,),
                in_specs=[
                    pl.BlockSpec((8, 128), lambda i: (0, 0),
                                 pipeline_mode=pl.Buffered(buffer_count=1)),
                    pl.BlockSpec((8, 128), lambda i: (i, 0)),
                ],
                out_specs=pl.BlockSpec((8, 128), lambda i: (i, 0)),
            ),
        )
        out = jax.block_until_ready(f(jnp.ones((8, 128), jnp.float32),
                                      jnp.ones((16, 128), jnp.float32)))
        return bool(jnp.all(out == 2.0))
    except Exception:
        return False


def _single_buffer_weights_supported():
    if not _SINGLE_BUFFER["checked"]:
        _SINGLE_BUFFER["ok"] = _probe_buffered_single()
        _SINGLE_BUFFER["checked"] = True
    return _SINGLE_BUFFER["ok"]


def weight_spec(block_shape, index_map):
    """BlockSpec for grid-invariant weights; single-buffered when supported (halves VMEM)."""
    if _single_buffer_weights_supported():
        return pl.BlockSpec(block_shape, index_map,
                            pipeline_mode=pl.Buffered(buffer_count=1))
    return pl.BlockSpec(block_shape, index_map)


# ----------------------------------------------------------------------------
# Pallas kernels
# ----------------------------------------------------------------------------
def gates_precompute_kernel(x_ref, w_ref, b_ref, o_ref):
    """One MXU matmul per time tile, both directions folded: G = X @ [Wf|Wb] + b.

    x_ref: (Tt, Bp, Din) f32    w_ref: (Din, 8Hp) bf16    b_ref: (1, 8Hp) f32
    o_ref: (Tt, Bp, 8Hp) f32
    """
    Tt, Bp, Din = x_ref.shape
    x2 = x_ref[...].reshape(Tt * Bp, Din).astype(jnp.bfloat16)       # bf16 MXU operand
    g = jnp.dot(x2, w_ref[...], preferred_element_type=jnp.float32) + b_ref[...]
    o_ref[...] = g.reshape(Tt, Bp, -1).astype(o_ref.dtype)


def gates_precompute_pair_kernel(xf_ref, xb_ref, wf_ref, wb_ref, b_ref, o_ref):
    """Layer > 0 input projection: G = Hf @ Wf_rows + Hb @ Wb_rows + b (no concat needed).

    xf/xb: (Tt, Bp, Hp) f32    wf/wb: (Hp, 8Hp) bf16    b: (1, 8Hp) f32    o: (Tt, Bp, 8Hp) f32
    """
    Tt, Bp, Hp = xf_ref.shape
    xf = xf_ref[...].reshape(Tt * Bp, Hp).astype(jnp.bfloat16)
    xb = xb_ref[...].reshape(Tt * Bp, Hp).astype(jnp.bfloat16)
    g = jnp.dot(xf, wf_ref[...], preferred_element_type=jnp.float32)
    g = g + jnp.dot(xb, wb_ref[...], preferred_element_type=jnp.float32)
    g = g + b_ref[...]
    o_ref[...] = g.reshape(Tt, Bp, -1).astype(o_ref.dtype)


def lstm_chunk_kernel(gxf_ref, gxb_ref, whh_ref, hf_out_ref, hb_out_ref,
                      hf_sc, cf_sc, hb_sc, cb_sc):
    """One grid step == `chunk` timesteps of BOTH directions, interleaved (gate order i,f,g,o).

    gxf_ref: (Tc, Bp, 4Hp) f32  forward  gate preacts for time chunk t         (increasing time)
    gxb_ref: (Tc, Bp, 4Hp) f32  backward gate preacts for time chunk nT-1-t    (walked in reverse)
    whh_ref: (2, Hp, 4Hp) bf16  recurrent weights [0]=fwd, [1]=bwd (grid-invariant, resident)
    hf_out/hb_out: (Tc, Bp, Hp) f32  hidden states, time-aligned per direction
    *_sc: (Bp, Hp) f32 scratch  h/c state carried across time chunks; reset at chunk 0.

    NOTE: the h/c carry relies on the (single) grid axis being the sequential time axis;
    do not add an outer grid axis in front of it without re-deriving the reset condition.
    """
    t = pl.program_id(0)

    @pl.when(t == 0)
    def _init():
        hf_sc[...] = jnp.zeros_like(hf_sc)
        cf_sc[...] = jnp.zeros_like(cf_sc)
        hb_sc[...] = jnp.zeros_like(hb_sc)
        cb_sc[...] = jnp.zeros_like(cb_sc)

    Tc = gxf_ref.shape[0]
    Hp = hf_sc.shape[-1]
    whh_f = whh_ref[0]                      # (Hp, 4Hp) bf16, hoisted out of the step loop
    whh_b = whh_ref[1]

    def sig(x):                              # sigmoid via tanh: 1 EUP op instead of exp+recip
        return 0.5 * jnp.tanh(0.5 * x) + 0.5

    def cell(g, c):
        i = sig(g[:, 0 * Hp:1 * Hp])         # Hp is a lane multiple -> whole-vreg slices
        f = sig(g[:, 1 * Hp:2 * Hp])
        u = jnp.tanh(g[:, 2 * Hp:3 * Hp])
        o = sig(g[:, 3 * Hp:4 * Hp])
        c = f * c + i * u
        h = o * jnp.tanh(c)
        return h, c

    def step(j, carry):
        hf, cf, hb, cb = carry
        jb = Tc - 1 - j                      # backward walks the chunk in reverse
        # Two independent dependency chains: issue both matmuls, then both gate updates,
        # so MXU / EUP latency of one chain hides under the other.
        gf = gxf_ref[j] + jnp.dot(hf.astype(jnp.bfloat16), whh_f,
                                  preferred_element_type=jnp.float32)
        gb = gxb_ref[jb] + jnp.dot(hb.astype(jnp.bfloat16), whh_b,
                                   preferred_element_type=jnp.float32)
        hf, cf = cell(gf, cf)
        hb, cb = cell(gb, cb)
        hf_out_ref[j] = hf.astype(hf_out_ref.dtype)
        hb_out_ref[jb] = hb.astype(hb_out_ref.dtype)
        return hf, cf, hb, cb

    carry0 = (hf_sc[...], cf_sc[...], hb_sc[...], cb_sc[...])
    hf, cf, hb, cb = lax.fori_loop(0, Tc, step, carry0, unroll=min(Tc, 8))
    hf_sc[...] = hf
    cf_sc[...] = cf
    hb_sc[...] = hb
    cb_sc[...] = cb


def linear_pair_kernel(xf_ref, xb_ref, wf_ref, wb_ref, b_ref, o_ref):
    """logits = h_fwd_last @ Wf + h_bwd_last @ Wb + b  (no concat; bf16 MXU operands)."""
    o = jnp.dot(xf_ref[...].astype(jnp.bfloat16), wf_ref[...],
                preferred_element_type=jnp.float32)
    o = o + jnp.dot(xb_ref[...].astype(jnp.bfloat16), wb_ref[...],
                    preferred_element_type=jnp.float32)
    o_ref[...] = (o + b_ref[...]).astype(o_ref.dtype)


# ----------------------------------------------------------------------------
# Pallas wrappers
# ----------------------------------------------------------------------------
def gates_precompute(x, w, b, *, t_tile):
    """x: (T, Bp, Din) f32; w: (Din, 8Hp) bf16; b: (1, 8Hp) f32 -> (T, Bp, 8Hp) f32."""
    T, Bp, Din = x.shape
    G8 = w.shape[-1]
    assert T % t_tile == 0
    return pl.pallas_call(
        gates_precompute_kernel,
        out_shape=jax.ShapeDtypeStruct((T, Bp, G8), jnp.float32),
        grid_spec=pltpu.PrefetchScalarGridSpec(
            num_scalar_prefetch=0,
            grid=(T // t_tile,),
            in_specs=[
                pl.BlockSpec((t_tile, Bp, Din), lambda i: (i, 0, 0)),
                weight_spec((Din, G8), lambda i: (0, 0)),
                weight_spec((1, G8), lambda i: (0, 0)),
            ],
            out_specs=pl.BlockSpec((t_tile, Bp, G8), lambda i: (i, 0, 0)),
        ),
        compiler_params=pltpu.CompilerParams(
            dimension_semantics=("parallel",),
            vmem_limit_bytes=VMEM_LIMIT_BYTES,
        ),
    )(x, w, b)


def gates_precompute_pair(xf, xb, wf, wb, b, *, t_tile):
    """xf/xb: (T, Bp, Hp) f32; wf/wb: (Hp, 8Hp) bf16; b: (1, 8Hp) f32 -> (T, Bp, 8Hp) f32."""
    T, Bp, Hp = xf.shape
    G8 = wf.shape[-1]
    assert T % t_tile == 0
    return pl.pallas_call(
        gates_precompute_pair_kernel,
        out_shape=jax.ShapeDtypeStruct((T, Bp, G8), jnp.float32),
        grid_spec=pltpu.PrefetchScalarGridSpec(
            num_scalar_prefetch=0,
            grid=(T // t_tile,),
            in_specs=[
                pl.BlockSpec((t_tile, Bp, Hp), lambda i: (i, 0, 0)),
                pl.BlockSpec((t_tile, Bp, Hp), lambda i: (i, 0, 0)),
                weight_spec((Hp, G8), lambda i: (0, 0)),
                weight_spec((Hp, G8), lambda i: (0, 0)),
                weight_spec((1, G8), lambda i: (0, 0)),
            ],
            out_specs=pl.BlockSpec((t_tile, Bp, G8), lambda i: (i, 0, 0)),
        ),
        compiler_params=pltpu.CompilerParams(
            dimension_semantics=("parallel",),
            vmem_limit_bytes=VMEM_LIMIT_BYTES,
        ),
    )(xf, xb, wf, wb, b)


def lstm_bidir_layer(gx, whh, *, hidden_pad, chunk):
    """gx: (T, Bp, 8Hp) f32; whh: (2, Hp, 4Hp) bf16 -> (hf, hb) each (T, Bp, Hp) f32.

    Grid walks time chunks only ("arbitrary"); forward reads chunk t, backward reads chunk
    nT-1-t, both handled in the same kernel body (interleaved chains).  Use chunk=32..128 in
    production to amortize per-grid-step overhead (bounded by VMEM for the two gx blocks).
    """
    T, Bp, G8 = gx.shape
    Hp = hidden_pad
    G4 = 4 * Hp
    assert G8 == 8 * Hp
    assert T % chunk == 0
    nT = T // chunk

    return pl.pallas_call(
        lstm_chunk_kernel,
        out_shape=(jax.ShapeDtypeStruct((T, Bp, Hp), jnp.float32),
                   jax.ShapeDtypeStruct((T, Bp, Hp), jnp.float32)),
        grid_spec=pltpu.PrefetchScalarGridSpec(
            num_scalar_prefetch=0,
            grid=(nT,),
            in_specs=[
                # forward gate preacts: time chunk t, columns [0:4Hp]
                pl.BlockSpec((chunk, Bp, G4), lambda t: (t, 0, 0)),
                # backward gate preacts: time chunk nT-1-t, columns [4Hp:8Hp]
                pl.BlockSpec((chunk, Bp, G4), lambda t: (nT - 1 - t, 0, 1)),
                # recurrent weights for both directions, grid-invariant
                weight_spec((2, Hp, G4), lambda t: (0, 0, 0)),
            ],
            out_specs=[
                pl.BlockSpec((chunk, Bp, Hp), lambda t: (t, 0, 0)),
                pl.BlockSpec((chunk, Bp, Hp), lambda t: (nT - 1 - t, 0, 0)),
            ],
            scratch_shapes=[pltpu.VMEM((Bp, Hp), jnp.float32)] * 4,   # hf, cf, hb, cb
        ),
        compiler_params=pltpu.CompilerParams(
            dimension_semantics=("arbitrary",),
            vmem_limit_bytes=VMEM_LIMIT_BYTES,
        ),
    )(gx, gx, whh)


def run_linear(xf, xb, wf, wb, b):
    """xf/xb: (Bp, Hp) f32; wf/wb: (Hp, Cp) bf16; b: (1, Cp) f32 -> (Bp, Cp) f32."""
    Bp = xf.shape[0]
    Cp = wf.shape[1]
    return pl.pallas_call(
        linear_pair_kernel,
        out_shape=jax.ShapeDtypeStruct((Bp, Cp), jnp.float32),
    )(xf, xb, wf, wb, b)


# ----------------------------------------------------------------------------
# Parameters (PyTorch-equivalent) + zero-padding / bf16 packing for the kernels
# ----------------------------------------------------------------------------
def init_params(key, vocab_size, emb_dim, hidden_dim, num_layers, num_classes):
    params = {}
    k_emb, key = jax.random.split(key)
    params["embedding"] = jax.random.normal(k_emb, (vocab_size, emb_dim), jnp.float32)

    bound = 1.0 / (hidden_dim ** 0.5)
    lstm = []
    for layer in range(num_layers):
        in_dim = emb_dim if layer == 0 else 2 * hidden_dim
        dirs = []
        for _direction in range(2):                    # 0 = forward, 1 = reverse
            k1, k2, k3, k4, key = jax.random.split(key, 5)
            # PyTorch weight_ih: (4H, in_dim) — stored transposed for x @ W.
            wih_t = jax.random.uniform(k1, (in_dim, 4 * hidden_dim), jnp.float32, -bound, bound)
            whh_t = jax.random.uniform(k2, (hidden_dim, 4 * hidden_dim), jnp.float32, -bound, bound)
            b_ih = jax.random.uniform(k3, (4 * hidden_dim,), jnp.float32, -bound, bound)
            b_hh = jax.random.uniform(k4, (4 * hidden_dim,), jnp.float32, -bound, bound)
            dirs.append((wih_t, whh_t, b_ih + b_hh))
        lstm.append(dirs)
    params["lstm"] = lstm

    fc_in = 2 * hidden_dim  # TODO(synk): widened from hidden_dim so the forward is runnable
    kw, kb, key = jax.random.split(key, 3)
    fb = 1.0 / (fc_in ** 0.5)
    params["fc_w_t"] = jax.random.uniform(kw, (fc_in, num_classes), jnp.float32, -fb, fb)
    params["fc_b"] = jax.random.uniform(kb, (num_classes,), jnp.float32, -fb, fb)
    return params


def pad_params(params, *, hidden_dim, num_layers, num_classes, hidden_pad, class_pad):
    """Zero-pad H -> Hp (lane-dense), fold fwd|bwd gate columns into one (.., 8Hp) weight,
    and cast all matmul weights to bf16 (biases stay f32).

    Correctness invariant (do not break): padded gate columns AND padded bias entries are
    zero and h0/c0 start at zero, so padded hidden/cell units stay exactly 0 forever
    (i=f=o=sigmoid(0)=0.5, g=tanh(0)=0, c_pad = 0.5*0 + 0.5*0 = 0, h_pad = 0.5*tanh(0) = 0).
    If bias padding or nonzero initial states are ever introduced this no longer holds.
    """
    H, Hp = hidden_dim, hidden_pad

    def gate_cols(w):  # (..., 4H) -> (..., 4Hp): gate k lives at [k*Hp : k*Hp+H]
        parts = []
        for k in range(4):
            gk = w[..., k * H:(k + 1) * H]
            parts.append(jnp.pad(gk, [(0, 0)] * (w.ndim - 1) + [(0, Hp - H)]))
        return jnp.concatenate(parts, axis=-1)

    def pad_rows(w, rows):  # zero-pad first axis up to `rows`
        return jnp.pad(w, ((0, rows - w.shape[0]),) + ((0, 0),) * (w.ndim - 1))

    padded = {"embedding": params["embedding"], "layers": []}
    for layer in range(num_layers):
        (wih_f_t, whh_f_t, b_f), (wih_b_t, whh_b_t, b_b) = params["lstm"][layer]

        # bias (1, 8Hp) f32 = [fwd gates | bwd gates]
        b = jnp.concatenate([gate_cols(b_f), gate_cols(b_b)], axis=-1).reshape(1, -1)
        # recurrent weights (2, Hp, 4Hp) bf16
        whh = jnp.stack([pad_rows(gate_cols(whh_f_t), Hp),
                         pad_rows(gate_cols(whh_b_t), Hp)]).astype(jnp.bfloat16)
        entry = {"b": b, "whh": whh}

        if layer == 0:
            # (E, 8Hp): columns [0:4Hp] from the forward direction, [4Hp:8Hp] from the backward
            wih = jnp.concatenate([gate_cols(wih_f_t), gate_cols(wih_b_t)], axis=-1)
            entry["wih"] = wih.astype(jnp.bfloat16)
        else:
            # rows [0:H] act on the fwd-half of the layer input, [H:2H] on the bwd-half
            wf = jnp.concatenate([gate_cols(wih_f_t[:H]), gate_cols(wih_b_t[:H])], axis=-1)
            wb = jnp.concatenate([gate_cols(wih_f_t[H:]), gate_cols(wih_b_t[H:])], axis=-1)
            entry["wih_f"] = pad_rows(wf, Hp).astype(jnp.bfloat16)   # (Hp, 8Hp)
            entry["wih_b"] = pad_rows(wb, Hp).astype(jnp.bfloat16)   # (Hp, 8Hp)
        padded["layers"].append(entry)

    fc_w = params["fc_w_t"]                                          # (2H, C)
    padded["fc_w_f"] = pad_rows(
        jnp.pad(fc_w[:H], ((0, 0), (0, class_pad - num_classes))), Hp).astype(jnp.bfloat16)
    padded["fc_w_b"] = pad_rows(
        jnp.pad(fc_w[H:], ((0, 0), (0, class_pad - num_classes))), Hp).astype(jnp.bfloat16)
    padded["fc_b"] = jnp.pad(params["fc_b"], (0, class_pad - num_classes)).reshape(1, -1)
    return padded


# ----------------------------------------------------------------------------
# Forward pass (Pallas) and a pure-JAX reference for cross-checking
# ----------------------------------------------------------------------------
def make_forward(*, batch, hidden_pad, batch_pad, num_layers, num_classes, chunk):
    Hp, Bp = hidden_pad, batch_pad

    @jax.jit
    def forward(padded, tokens):
        # Embedding lookup (irregular gather) + layout plumbing stay as XLA glue.
        emb = jnp.take(padded["embedding"], tokens, axis=0)           # (B, T, E)
        x = jnp.transpose(emb, (1, 0, 2))                             # (T, B, E) time-major
        x = jnp.pad(x, ((0, 0), (0, Bp - batch), (0, 0)))             # (T, Bp, E) sublane-dense
        # NOTE: Bp tracks the real batch rounded to 8; recurrence MXU utilization scales
        # linearly with Bp up to 128/256 rows at essentially no extra latency per step.

        lp0 = padded["layers"][0]
        gx = gates_precompute(x, lp0["wih"], lp0["b"], t_tile=chunk)           # (T, Bp, 8Hp)
        hf, hb = lstm_bidir_layer(gx, lp0["whh"], hidden_pad=Hp, chunk=chunk)  # 2x (T, Bp, Hp)

        for layer in range(1, num_layers):
            lp = padded["layers"][layer]
            gx = gates_precompute_pair(hf, hb, lp["wih_f"], lp["wih_b"], lp["b"], t_tile=chunk)
            hf, hb = lstm_bidir_layer(gx, lp["whh"], hidden_pad=Hp, chunk=chunk)

        # output[:, -1, :] == concat(h_fwd[T-1], h_bwd[T-1]); the FC consumes the halves directly.
        logits = run_linear(hf[-1], hb[-1],
                            padded["fc_w_f"], padded["fc_w_b"], padded["fc_b"])
        return logits[:batch, :num_classes]

    return forward


def _ref_lstm_dir(x_seq, wih_t, whh_t, b, H):
    B = x_seq.shape[1]

    def step(carry, x_t):
        h, c = carry
        gates = x_t @ wih_t + h @ whh_t + b
        i = jax.nn.sigmoid(gates[:, 0 * H:1 * H])
        f = jax.nn.sigmoid(gates[:, 1 * H:2 * H])
        g = jnp.tanh(gates[:, 2 * H:3 * H])
        o = jax.nn.sigmoid(gates[:, 3 * H:4 * H])
        c = f * c + i * g
        h = o * jnp.tanh(c)
        return (h, c), h

    init = (jnp.zeros((B, H), jnp.float32), jnp.zeros((B, H), jnp.float32))
    _, hs = lax.scan(step, init, x_seq)
    return hs


def reference_forward(params, tokens, *, hidden_dim, num_layers):
    emb = jnp.take(params["embedding"], tokens, axis=0)
    x = jnp.transpose(emb, (1, 0, 2))
    for layer in range(num_layers):
        (wih_f, whh_f, b_f), (wih_b, whh_b, b_b) = params["lstm"][layer]
        fwd = _ref_lstm_dir(x, wih_f, whh_f, b_f, hidden_dim)
        bwd = _ref_lstm_dir(x[::-1], wih_b, whh_b, b_b, hidden_dim)[::-1]
        x = jnp.concatenate([fwd, bwd], axis=-1)
    return x[-1] @ params["fc_w_t"] + params["fc_b"]


# ----------------------------------------------------------------------------
# main
# ----------------------------------------------------------------------------
if __name__ == "__main__":
    vocab_size, emb_dim, hidden_dim, num_layers, num_classes = 50, 16, 32, 2, 4
    batch, seq_len = 2, 8
    # chunk=4 (with T=8) keeps two time chunks so the cross-chunk h/c carry is exercised;
    # use chunk in [32, 128] for production sequence lengths.
    chunk = 4

    key = jax.random.PRNGKey(0)
    k_tok, k_par = jax.random.split(key)
    tokens = jax.random.randint(k_tok, (batch, seq_len), 0, vocab_size, jnp.int32)
    params = init_params(k_par, vocab_size, emb_dim, hidden_dim, num_layers, num_classes)

    Hp = round_up(hidden_dim, 128)  # lane-dense hidden
    Bp = round_up(batch, 8)         # sublane-dense batch
    Cp = round_up(num_classes, 128)
    assert seq_len % chunk == 0

    padded = pad_params(params, hidden_dim=hidden_dim, num_layers=num_layers,
                        num_classes=num_classes, hidden_pad=Hp, class_pad=Cp)

    # Resolve the single-buffered-weights feature probe before tracing the jitted forward.
    _single_buffer_weights_supported()

    forward = make_forward(batch=batch, hidden_pad=Hp, batch_pad=Bp,
                           num_layers=num_layers, num_classes=num_classes, chunk=chunk)

    logits = jax.block_until_ready(forward(padded, tokens))
    assert logits.shape == (batch, num_classes)
    assert bool(jnp.all(jnp.isfinite(logits)))

    # Cross-check against a pure-JAX f32 reference of the same forward pass.
    ref = jax.block_until_ready(
        reference_forward(params, tokens, hidden_dim=hidden_dim, num_layers=num_layers))
    # bf16 matmul operands (f32 accumulation) -> slightly looser tolerance than pure f32.
    assert bool(jnp.allclose(logits, ref, atol=3e-2, rtol=3e-2)), (logits, ref)

    print("KERNEL_OK")
</pallas_src>

<mosaic_0001>
module attributes {stable_mosaic.version = 11 : i64} {
  func.func @k(%arg0: i32, %arg1: memref<8x128xf32, #tpu.memory_space<vmem>>, %arg2: memref<8x128xf32, #tpu.memory_space<vmem>>, %arg3: memref<8x128xf32, #tpu.memory_space<vmem>>) attributes {dimension_semantics = [#tpu.dimension_semantics<arbitrary>], iteration_bounds = array<i64: 2>, scalar_prefetch = 0 : i64, scratch_operands = 0 : i64, tpu.core_type = #tpu.core_type<tc>, window_params = [{pipeline_mode = #tpu.pipeline_mode<synchronous>, transform_indices = @transform_0, window_bounds = array<i64: 8, 128>}, {transform_indices = @transform_1, window_bounds = array<i64: 8, 128>}, {transform_indices = @transform_2, window_bounds = array<i64: 8, 128>}]} {
    %c0 = arith.constant 0 : index
    %c0_0 = arith.constant 0 : index
    %0 = vector.load %arg2[%c0, %c0_0] : memref<8x128xf32, #tpu.memory_space<vmem>>, vector<8x128xf32>
    %c0_1 = arith.constant 0 : index
    %c0_2 = arith.constant 0 : index
    %1 = vector.load %arg1[%c0_1, %c0_2] : memref<8x128xf32, #tpu.memory_space<vmem>>, vector<8x128xf32>
    %2 = arith.addf %0, %1 : vector<8x128xf32>
    %c0_3 = arith.constant 0 : index
    %c0_4 = arith.constant 0 : index
    %3 = vector.load %arg3[%c0_3, %c0_4] : memref<8x128xf32, #tpu.memory_space<vmem>>, vector<8x128xf32>
    tpu.vector_store %arg3[%c0_3, %c0_4], %2 {strides = array<i32>} : memref<8x128xf32, #tpu.memory_space<vmem>>, vector<8x128xf32>,
    return
  }
  func.func @transform_0(%arg0: i32) -> (i32, i32) {
    %c0_i32 = arith.constant 0 : i32
    %c0_i32_0 = arith.constant 0 : i32
    %c0_i32_1 = arith.constant 0 : i32
    return %c0_i32, %c0_i32_0 : i32, i32
  }
  func.func @transform_1(%arg0: i32) -> (i32, i32) {
    %c0_i32 = arith.constant 0 : i32
    %c0_i32_0 = arith.constant 0 : i32
    return %arg0, %c0_i32 : i32, i32
  }
  func.func @transform_2(%arg0: i32) -> (i32, i32) {
    %c0_i32 = arith.constant 0 : i32
    %c0_i32_0 = arith.constant 0 : i32
    return %arg0, %c0_i32 : i32, i32
  }
}

module attributes {stable_mosaic.version = 11 : i64} {
  func.func @gates_precompute_kernel(%arg0: i32, %arg1: memref<4x8x16xf32, #tpu.memory_space<vmem>>, %arg2: memref<16x1024xbf16, #tpu.memory_space<vmem>>, %arg3: memref<1x1024xf32, #tpu.memory_space<vmem>>, %arg4: memref<4x8x1024xf32, #tpu.memory_space<vmem>>) attributes {dimension_semantics = [#tpu.dimension_semantics<parallel>], iteration_bounds = array<i64: 2>, scalar_prefetch = 0 : i64, scratch_operands = 0 : i64, tpu.core_type = #tpu.core_type<tc>, window_params = [{transform_indices = @transform_0, window_bounds = array<i64: 4, 8, 16>}, {pipeline_mode = #tpu.pipeline_mode<synchronous>, transform_indices = @transform_1, window_bounds = array<i64: 16, 1024>}, {pipeline_mode = #tpu.pipeline_mode<synchronous>, transform_indices = @transform_2, window_bounds = array<i64: 1, 1024>}, {transform_indices = @transform_3, window_bounds = array<i64: 4, 8, 1024>}]} {
    %c0 = arith.constant 0 : index
    %c0_0 = arith.constant 0 : index
    %c0_1 = arith.constant 0 : index
    %0 = vector.load %arg1[%c0, %c0_0, %c0_1] : memref<4x8x16xf32, #tpu.memory_space<vmem>>, vector<4x8x16xf32>
    %1 = vector.shape_cast %0 : vector<4x8x16xf32> to vector<32x16xf32>
    %2 = arith.truncf %1 : vector<32x16xf32> to vector<32x16xbf16>
    %c0_2 = arith.constant 0 : index
    %c0_3 = arith.constant 0 : index
    %3 = vector.load %arg2[%c0_2, %c0_3] : memref<16x1024xbf16, #tpu.memory_space<vmem>>, vector<16x1024xbf16>
    %cst = arith.constant dense<0.000000e+00> : vector<32x1024xf32>
    %4 = tpu.matmul %2, %3, %cst {dimension_numbers = #tpu.dot_dimension_numbers<[1], [0], [0], [1], [0, 0, 1, 1], [], []>} : vector<32x16xbf16>, vector<16x1024xbf16>, vector<32x1024xf32> -> vector<32x1024xf32>
    %c0_4 = arith.constant 0 : index
    %c0_5 = arith.constant 0 : index
    %5 = vector.load %arg3[%c0_4, %c0_5] : memref<1x1024xf32, #tpu.memory_space<vmem>>, vector<1x1024xf32>
    %6 = vector.broadcast %5 : vector<1x1024xf32> to vector<32x1024xf32>
    %7 = arith.addf %4, %6 : vector<32x1024xf32>
    %8 = vector.shape_cast %7 : vector<32x1024xf32> to vector<4x8x1024xf32>
    %c0_6 = arith.constant 0 : index
    %c0_7 = arith.constant 0 : index
    %c0_8 = arith.constant 0 : index
    %9 = vector.load %arg4[%c0_6, %c0_7, %c0_8] : memref<4x8x1024xf32, #tpu.memory_space<vmem>>, vector<4x8x1024xf32>
    tpu.vector_store %arg4[%c0_6, %c0_7, %c0_8], %8 {strides = array<i32>} : memref<4x8x1024xf32, #tpu.memory_space<vmem>>, vector<4x8x1024xf32>,
    return
  }
  func.func @transform_0(%arg0: i32) -> (i32, i32, i32) {
    %c0_i32 = arith.constant 0 : i32
    %c0_i32_0 = arith.constant 0 : i32
    %c0_i32_1 = arith.constant 0 : i32
    return %arg0, %c0_i32, %c0_i32_0 : i32, i32, i32
  }
  func.func @transform_1(%arg0: i32) -> (i32, i32) {
    %c0_i32 = arith.constant 0 : i32
    %c0_i32_0 = arith.constant 0 : i32
    %c0_i32_1 = arith.constant 0 : i32
    return %c0_i32, %c0_i32_0 : i32, i32
  }
  func.func @transform_2(%arg0: i32) -> (i32, i32) {
    %c0_i32 = arith.constant 0 : i32
    %c0_i32_0 = arith.constant 0 : i32
    %c0_i32_1 = arith.constant 0 : i32
    return %c0_i32, %c0_i32_0 : i32, i32
  }
  func.func @transform_3(%arg0: i32) -> (i32, i32, i32) {
    %c0_i32 = arith.constant 0 : i32
    %c0_i32_0 = arith.constant 0 : i32
    %c0_i32_1 = arith.constant 0 : i32
    return %arg0, %c0_i32, %c0_i32_0 : i32, i32, i32
  }
}

module attributes {stable_mosaic.version = 11 : i64} {
  func.func @gates_precompute_pair_kernel(%arg0: i32, %arg1: memref<4x8x128xf32, #tpu.memory_space<vmem>>, %arg2: memref<4x8x128xf32, #tpu.memory_space<vmem>>, %arg3: memref<128x1024xbf16, #tpu.memory_space<vmem>>, %arg4: memref<128x1024xbf16, #tpu.memory_space<vmem>>, %arg5: memref<1x1024xf32, #tpu.memory_space<vmem>>, %arg6: memref<4x8x1024xf32, #tpu.memory_space<vmem>>) attributes {dimension_semantics = [#tpu.dimension_semantics<parallel>], iteration_bounds = array<i64: 2>, scalar_prefetch = 0 : i64, scratch_operands = 0 : i64, tpu.core_type = #tpu.core_type<tc>, window_params = [{transform_indices = @transform_0, window_bounds = array<i64: 4, 8, 128>}, {transform_indices = @transform_1, window_bounds = array<i64: 4, 8, 128>}, {pipeline_mode = #tpu.pipeline_mode<synchronous>, transform_indices = @transform_2, window_bounds = array<i64: 128, 1024>}, {pipeline_mode = #tpu.pipeline_mode<synchronous>, transform_indices = @transform_3, window_bounds = array<i64: 128, 1024>}, {pipeline_mode = #tpu.pipeline_mode<synchronous>, transform_indices = @transform_4, window_bounds = array<i64: 1, 1024>}, {transform_indices = @transform_5, window_bounds = array<i64: 4, 8, 1024>}]} {
    %c0 = arith.constant 0 : index
    %c0_0 = arith.constant 0 : index
    %c0_1 = arith.constant 0 : index
    %0 = vector.load %arg1[%c0, %c0_0, %c0_1] : memref<4x8x128xf32, #tpu.memory_space<vmem>>, vector<4x8x128xf32>
    %1 = vector.shape_cast %0 : vector<4x8x128xf32> to vector<32x128xf32>
    %2 = arith.truncf %1 : vector<32x128xf32> to vector<32x128xbf16>
    %c0_2 = arith.constant 0 : index
    %c0_3 = arith.constant 0 : index
    %c0_4 = arith.constant 0 : index
    %3 = vector.load %arg2[%c0_2, %c0_3, %c0_4] : memref<4x8x128xf32, #tpu.memory_space<vmem>>, vector<4x8x128xf32>
    %4 = vector.shape_cast %3 : vector<4x8x128xf32> to vector<32x128xf32>
    %5 = arith.truncf %4 : vector<32x128xf32> to vector<32x128xbf16>
    %c0_5 = arith.constant 0 : index
    %c0_6 = arith.constant 0 : index
    %6 = vector.load %arg3[%c0_5, %c0_6] : memref<128x1024xbf16, #tpu.memory_space<vmem>>, vector<128x1024xbf16>
    %cst = arith.constant dense<0.000000e+00> : vector<32x1024xf32>
    %7 = tpu.matmul %2, %6, %cst {dimension_numbers = #tpu.dot_dimension_numbers<[1], [0], [0], [1], [0, 0, 1, 1], [], []>} : vector<32x128xbf16>, vector<128x1024xbf16>, vector<32x1024xf32> -> vector<32x1024xf32>
    %c0_7 = arith.constant 0 : index
    %c0_8 = arith.constant 0 : index
    %8 = vector.load %arg4[%c0_7, %c0_8] : memref<128x1024xbf16, #tpu.memory_space<vmem>>, vector<128x1024xbf16>
    %cst_9 = arith.constant dense<0.000000e+00> : vector<32x1024xf32>
    %9 = tpu.matmul %5, %8, %cst_9 {dimension_numbers = #tpu.dot_dimension_numbers<[1], [0], [0], [1], [0, 0, 1, 1], [], []>} : vector<32x128xbf16>, vector<128x1024xbf16>, vector<32x1024xf32> -> vector<32x1024xf32>
    %10 = arith.addf %7, %9 : vector<32x1024xf32>
    %c0_10 = arith.constant 0 : index
    %c0_11 = arith.constant 0 : index
    %11 = vector.load %arg5[%c0_10, %c0_11] : memref<1x1024xf32, #tpu.memory_space<vmem>>, vector<1x1024xf32>
    %12 = vector.broadcast %11 : vector<1x1024xf32> to vector<32x1024xf32>
    %13 = arith.addf %10, %12 : vector<32x1024xf32>
    %14 = vector.shape_cast %13 : vector<32x1024xf32> to vector<4x8x1024xf32>
    %c0_12 = arith.constant 0 : index
    %c0_13 = arith.constant 0 : index
    %c0_14 = arith.constant 0 : index
    %15 = vector.load %arg6[%c0_12, %c0_13, %c0_14] : memref<4x8x1024xf32, #tpu.memory_space<vmem>>, vector<4x8x1024xf32>
    tpu.vector_store %arg6[%c0_12, %c0_13, %c0_14], %14 {strides = array<i32>} : memref<4x8x1024xf32, #tpu.memory_space<vmem>>, vector<4x8x1024xf32>,
    return
  }
  func.func @transform_0(%arg0: i32) -> (i32, i32, i32) {
    %c0_i32 = arith.constant 0 : i32
    %c0_i32_0 = arith.constant 0 : i32
    %c0_i32_1 = arith.constant 0 : i32
    return %arg0, %c0_i32, %c0_i32_0 : i32, i32, i32
  }
  func.func @transform_1(%arg0: i32) -> (i32, i32, i32) {
    %c0_i32 = arith.constant 0 : i32
    %c0_i32_0 = arith.constant 0 : i32
    %c0_i32_1 = arith.constant 0 : i32
    return %arg0, %c0_i32, %c0_i32_0 : i32, i32, i32
  }
  func.func @transform_2(%arg0: i32) -> (i32, i32) {
    %c0_i32 = arith.constant 0 : i32
    %c0_i32_0 = arith.constant 0 : i32
    %c0_i32_1 = arith.constant 0 : i32
    return %c0_i32, %c0_i32_0 : i32, i32
  }
  func.func @transform_3(%arg0: i32) -> (i32, i32) {
    %c0_i32 = arith.constant 0 : i32
    %c0_i32_0 = arith.constant 0 : i32
    %c0_i32_1 = arith.constant 0 : i32
    return %c0_i32, %c0_i32_0 : i32, i32
  }
  func.func @transform_4(%arg0: i32) -> (i32, i32) {
    %c0_i32 = arith.constant 0 : i32
    %c0_i32_0 = arith.constant 0 : i32
    %c0_i32_1 = arith.constant 0 : i32
    return %c0_i32, %c0_i32_0 : i32, i32
  }
  func.func @transform_5(%arg0: i32) -> (i32, i32, i32) {
    %c0_i32 = arith.constant 0 : i32
    %c0_i32_0 = arith.constant 0 : i32
    %c0_i32_1 = arith.constant 0 : i32
    return %arg0, %c0_i32, %c0_i32_0 : i32, i32, i32
  }
}

module attributes {stable_mosaic.version = 11 : i64} {
  func.func @linear_pair_kernel(%arg0: memref<8x128xf32, #tpu.memory_space<vmem>>, %arg1: memref<8x128xf32, #tpu.memory_space<vmem>>, %arg2: memref<128x128xbf16, #tpu.memory_space<vmem>>, %arg3: memref<128x128xbf16, #tpu.memory_space<vmem>>, %arg4: memref<1x128xf32, #tpu.memory_space<vmem>>, %arg5: memref<8x128xf32, #tpu.memory_space<vmem>>) attributes {dimension_semantics = [], scalar_prefetch = 0 : i64, scratch_operands = 0 : i64, tpu.core_type = #tpu.core_type<tc>} {
    %c0 = arith.constant 0 : index
    %c0_0 = arith.constant 0 : index
    %0 = vector.load %arg0[%c0, %c0_0] : memref<8x128xf32, #tpu.memory_space<vmem>>, vector<8x128xf32>
    %1 = arith.truncf %0 : vector<8x128xf32> to vector<8x128xbf16>
    %c0_1 = arith.constant 0 : index
    %c0_2 = arith.constant 0 : index
    %2 = vector.load %arg2[%c0_1, %c0_2] : memref<128x128xbf16, #tpu.memory_space<vmem>>, vector<128x128xbf16>
    %cst = arith.constant dense<0.000000e+00> : vector<8x128xf32>
    %3 = tpu.matmul %1, %2, %cst {dimension_numbers = #tpu.dot_dimension_numbers<[1], [0], [0], [1], [0, 0, 1, 1], [], []>} : vector<8x128xbf16>, vector<128x128xbf16>, vector<8x128xf32> -> vector<8x128xf32>
    %c0_3 = arith.constant 0 : index
    %c0_4 = arith.constant 0 : index
    %4 = vector.load %arg1[%c0_3, %c0_4] : memref<8x128xf32, #tpu.memory_space<vmem>>, vector<8x128xf32>
    %5 = arith.truncf %4 : vector<8x128xf32> to vector<8x128xbf16>
    %c0_5 = arith.constant 0 : index
    %c0_6 = arith.constant 0 : index
    %6 = vector.load %arg3[%c0_5, %c0_6] : memref<128x128xbf16, #tpu.memory_space<vmem>>, vector<128x128xbf16>
    %cst_7 = arith.constant dense<0.000000e+00> : vector<8x128xf32>
    %7 = tpu.matmul %5, %6, %cst_7 {dimension_numbers = #tpu.dot_dimension_numbers<[1], [0], [0], [1], [0, 0, 1, 1], [], []>} : vector<8x128xbf16>, vector<128x128xbf16>, vector<8x128xf32> -> vector<8x128xf32>
    %8 = arith.addf %3, %7 : vector<8x128xf32>
    %c0_8 = arith.constant 0 : index
    %c0_9 = arith.constant 0 : index
    %9 = vector.load %arg4[%c0_8, %c0_9] : memref<1x128xf32, #tpu.memory_space<vmem>>, vector<1x128xf32>
    %10 = vector.broadcast %9 : vector<1x128xf32> to vector<8x128xf32>
    %11 = arith.addf %8, %10 : vector<8x128xf32>
    %c0_10 = arith.constant 0 : index
    %c0_11 = arith.constant 0 : index
    %12 = vector.load %arg5[%c0_10, %c0_11] : memref<8x128xf32, #tpu.memory_space<vmem>>, vector<8x128xf32>
    tpu.vector_store %arg5[%c0_10, %c0_11], %11 {strides = array<i32>} : memref<8x128xf32, #tpu.memory_space<vmem>>, vector<8x128xf32>,
    return
  }
}

module attributes {stable_mosaic.version = 11 : i64} {
  func.func @lstm_chunk_kernel(%arg0: i32, %arg1: memref<4x8x512xf32, #tpu.memory_space<vmem>>, %arg2: memref<4x8x512xf32, #tpu.memory_space<vmem>>, %arg3: memref<2x128x512xbf16, #tpu.memory_space<vmem>>, %arg4: memref<4x8x128xf32, #tpu.memory_space<vmem>>, %arg5: memref<4x8x128xf32, #tpu.memory_space<vmem>>, %arg6: memref<8x128xf32, #tpu.memory_space<vmem>>, %arg7: memref<8x128xf32, #tpu.memory_space<vmem>>, %arg8: memref<8x128xf32, #tpu.memory_space<vmem>>, %arg9: memref<8x128xf32, #tpu.memory_space<vmem>>) attributes {dimension_semantics = [#tpu.dimension_semantics<arbitrary>], iteration_bounds = array<i64: 2>, scalar_prefetch = 0 : i64, scratch_operands = 4 : i64, tpu.core_type = #tpu.core_type<tc>, window_params = [{transform_indices = @transform_0, window_bounds = array<i64: 4, 8, 512>}, {transform_indices = @transform_1, window_bounds = array<i64: 4, 8, 512>}, {pipeline_mode = #tpu.pipeline_mode<synchronous>, transform_indices = @transform_2, window_bounds = array<i64: 2, 128, 512>}, {transform_indices = @transform_3, window_bounds = array<i64: 4, 8, 128>}, {transform_indices = @transform_4, window_bounds = array<i64: 4, 8, 128>}]} {
    %c0_i32 = arith.constant 0 : i32
    %0 = arith.cmpi eq, %arg0, %c0_i32 : i32
    %1 = arith.extui %0 : i1 to i32
    %c0_i32_0 = arith.constant 0 : i32
    %2 = arith.cmpi ne, %1, %c0_i32_0 : i32
    scf.if %2 {
      %cst_137 = arith.constant 0.000000e+00 : f32
      %347 = vector.broadcast %cst_137 : f32 to vector<8x128xf32>
      %c0_138 = arith.constant 0 : index
      %c0_139 = arith.constant 0 : index
      %348 = vector.load %arg6[%c0_138, %c0_139] : memref<8x128xf32, #tpu.memory_space<vmem>>, vector<8x128xf32>
      tpu.vector_store %arg6[%c0_138, %c0_139], %347 {strides = array<i32>} : memref<8x128xf32, #tpu.memory_space<vmem>>, vector<8x128xf32>,
      %cst_140 = arith.constant 0.000000e+00 : f32
      %349 = vector.broadcast %cst_140 : f32 to vector<8x128xf32>
      %c0_141 = arith.constant 0 : index
      %c0_142 = arith.constant 0 : index
      %350 = vector.load %arg7[%c0_141, %c0_142] : memref<8x128xf32, #tpu.memory_space<vmem>>, vector<8x128xf32>
      tpu.vector_store %arg7[%c0_141, %c0_142], %349 {strides = array<i32>} : memref<8x128xf32, #tpu.memory_space<vmem>>, vector<8x128xf32>,
      %cst_143 = arith.constant 0.000000e+00 : f32
      %351 = vector.broadcast %cst_143 : f32 to vector<8x128xf32>
      %c0_144 = arith.constant 0 : index
      %c0_145 = arith.constant 0 : index
      %352 = vector.load %arg8[%c0_144, %c0_145] : memref<8x128xf32, #tpu.memory_space<vmem>>, vector<8x128xf32>
      tpu.vector_store %arg8[%c0_144, %c0_145], %351 {strides = array<i32>} : memref<8x128xf32, #tpu.memory_space<vmem>>, vector<8x128xf32>,
      %cst_146 = arith.constant 0.000000e+00 : f32
      %353 = vector.broadcast %cst_146 : f32 to vector<8x128xf32>
      %c0_147 = arith.constant 0 : index
      %c0_148 = arith.constant 0 : index
      %354 = vector.load %arg9[%c0_147, %c0_148] : memref<8x128xf32, #tpu.memory_space<vmem>>, vector<8x128xf32>
      tpu.vector_store %arg9[%c0_147, %c0_148], %353 {strides = array<i32>} : memref<8x128xf32, #tpu.memory_space<vmem>>, vector<8x128xf32>,
    } else {
    }
    %c0 = arith.constant 0 : index
    %c0_1 = arith.constant 0 : index
    %c0_2 = arith.constant 0 : index
    %3 = vector.load %arg3[%c0, %c0_1, %c0_2] : memref<2x128x512xbf16, #tpu.memory_space<vmem>>, vector<1x128x512xbf16>
    %4 = vector.shape_cast %3 : vector<1x128x512xbf16> to vector<128x512xbf16>
    %c1 = arith.constant 1 : index
    %c0_3 = arith.constant 0 : index
    %c0_4 = arith.constant 0 : index
    %5 = vector.load %arg3[%c1, %c0_3, %c0_4] : memref<2x128x512xbf16, #tpu.memory_space<vmem>>, vector<1x128x512xbf16>
    %6 = vector.shape_cast %5 : vector<1x128x512xbf16> to vector<128x512xbf16>
    %c0_5 = arith.constant 0 : index
    %c0_6 = arith.constant 0 : index
    %7 = vector.load %arg6[%c0_5, %c0_6] : memref<8x128xf32, #tpu.memory_space<vmem>>, vector<8x128xf32>
    %c0_7 = arith.constant 0 : index
    %c0_8 = arith.constant 0 : index
    %8 = vector.load %arg7[%c0_7, %c0_8] : memref<8x128xf32, #tpu.memory_space<vmem>>, vector<8x128xf32>
    %c0_9 = arith.constant 0 : index
    %c0_10 = arith.constant 0 : index
    %9 = vector.load %arg8[%c0_9, %c0_10] : memref<8x128xf32, #tpu.memory_space<vmem>>, vector<8x128xf32>
    %c0_11 = arith.constant 0 : index
    %c0_12 = arith.constant 0 : index
    %10 = vector.load %arg9[%c0_11, %c0_12] : memref<8x128xf32, #tpu.memory_space<vmem>>, vector<8x128xf32>
    %c0_i32_13 = arith.constant 0 : i32
    %c3_i32 = arith.constant 3 : i32
    %11 = arith.subi %c3_i32, %c0_i32_13 : i32
    %12 = arith.index_cast %c0_i32_13 : i32 to index
    %c0_14 = arith.constant 0 : index
    %c0_15 = arith.constant 0 : index
    %13 = vector.load %arg1[%12, %c0_14, %c0_15] : memref<4x8x512xf32, #tpu.memory_space<vmem>>, vector<1x8x512xf32>
    %14 = vector.shape_cast %13 : vector<1x8x512xf32> to vector<8x512xf32>
    %15 = arith.truncf %7 : vector<8x128xf32> to vector<8x128xbf16>
    %cst = arith.constant dense<0.000000e+00> : vector<8x512xf32>
    %16 = tpu.matmul %15, %4, %cst {dimension_numbers = #tpu.dot_dimension_numbers<[1], [0], [0], [1], [0, 0, 1, 1], [], []>} : vector<8x128xbf16>, vector<128x512xbf16>, vector<8x512xf32> -> vector<8x512xf32>
    %17 = arith.addf %14, %16 : vector<8x512xf32>
    %18 = arith.index_cast %11 : i32 to index
    %c0_16 = arith.constant 0 : index
    %c0_17 = arith.constant 0 : index
    %19 = vector.load %arg2[%18, %c0_16, %c0_17] : memref<4x8x512xf32, #tpu.memory_space<vmem>>, vector<1x8x512xf32>
    %20 = vector.shape_cast %19 : vector<1x8x512xf32> to vector<8x512xf32>
    %21 = arith.truncf %9 : vector<8x128xf32> to vector<8x128xbf16>
    %cst_18 = arith.constant dense<0.000000e+00> : vector<8x512xf32>
    %22 = tpu.matmul %21, %6, %cst_18 {dimension_numbers = #tpu.dot_dimension_numbers<[1], [0], [0], [1], [0, 0, 1, 1], [], []>} : vector<8x128xbf16>, vector<128x512xbf16>, vector<8x512xf32> -> vector<8x512xf32>
    %23 = arith.addf %20, %22 : vector<8x512xf32>
    %24 = vector.extract_strided_slice %17 {offsets = [0, 0], sizes = [8, 128], strides = [1, 1]} : vector<8x512xf32> to vector<8x128xf32>
    %cst_19 = arith.constant 5.000000e-01 : f32
    %25 = vector.broadcast %cst_19 : f32 to vector<8x128xf32>
    %26 = arith.mulf %25, %24 : vector<8x128xf32>
    %27 = math.tanh %26 : vector<8x128xf32>
    %cst_20 = arith.constant 5.000000e-01 : f32
    %28 = vector.broadcast %cst_20 : f32 to vector<8x128xf32>
    %29 = arith.mulf %28, %27 : vector<8x128xf32>
    %cst_21 = arith.constant 5.000000e-01 : f32
    %30 = vector.broadcast %cst_21 : f32 to vector<8x128xf32>
    %31 = arith.addf %29, %30 : vector<8x128xf32>
    %32 = vector.extract_strided_slice %17 {offsets = [0, 128], sizes = [8, 128], strides = [1, 1]} : vector<8x512xf32> to vector<8x128xf32>
    %cst_22 = arith.constant 5.000000e-01 : f32
    %33 = vector.broadcast %cst_22 : f32 to vector<8x128xf32>
    %34 = arith.mulf %33, %32 : vector<8x128xf32>
    %35 = math.tanh %34 : vector<8x128xf32>
    %cst_23 = arith.constant 5.000000e-01 : f32
    %36 = vector.broadcast %cst_23 : f32 to vector<8x128xf32>
    %37 = arith.mulf %36, %35 : vector<8x128xf32>
    %cst_24 = arith.constant 5.000000e-01 : f32
    %38 = vector.broadcast %cst_24 : f32 to vector<8x128xf32>
    %39 = arith.addf %37, %38 : vector<8x128xf32>
    %40 = vector.extract_strided_slice %17 {offsets = [0, 256], sizes = [8, 128], strides = [1, 1]} : vector<8x512xf32> to vector<8x128xf32>
    %41 = math.tanh %40 : vector<8x128xf32>
    %42 = vector.extract_strided_slice %17 {offsets = [0, 384], sizes = [8, 128], strides = [1, 1]} : vector<8x512xf32> to vector<8x128xf32>
    %cst_25 = arith.constant 5.000000e-01 : f32
    %43 = vector.broadcast %cst_25 : f32 to vector<8x128xf32>
    %44 = arith.mulf %43, %42 : vector<8x128xf32>
    %45 = math.tanh %44 : vector<8x128xf32>
    %cst_26 = arith.constant 5.000000e-01 : f32
    %46 = vector.broadcast %cst_26 : f32 to vector<8x128xf32>
    %47 = arith.mulf %46, %45 : vector<8x128xf32>
    %cst_27 = arith.constant 5.000000e-01 : f32
    %48 = vector.broadcast %cst_27 : f32 to vector<8x128xf32>
    %49 = arith.addf %47, %48 : vector<8x128xf32>
    %50 = arith.mulf %39, %8 : vector<8x128xf32>
    %51 = arith.mulf %31, %41 : vector<8x128xf32>
    %52 = arith.addf %50, %51 : vector<8x128xf32>
    %53 = math.tanh %52 : vector<8x128xf32>
    %54 = arith.mulf %49, %53 : vector<8x128xf32>
    %55 = vector.extract_strided_slice %23 {offsets = [0, 0], sizes = [8, 128], strides = [1, 1]} : vector<8x512xf32> to vector<8x128xf32>
    %cst_28 = arith.constant 5.000000e-01 : f32
    %56 = vector.broadcast %cst_28 : f32 to vector<8x128xf32>
    %57 = arith.mulf %56, %55 : vector<8x128xf32>
    %58 = math.tanh %57 : vector<8x128xf32>
    %cst_29 = arith.constant 5.000000e-01 : f32
    %59 = vector.broadcast %cst_29 : f32 to vector<8x128xf32>
    %60 = arith.mulf %59, %58 : vector<8x128xf32>
    %cst_30 = arith.constant 5.000000e-01 : f32
    %61 = vector.broadcast %cst_30 : f32 to vector<8x128xf32>
    %62 = arith.addf %60, %61 : vector<8x128xf32>
    %63 = vector.extract_strided_slice %23 {offsets = [0, 128], sizes = [8, 128], strides = [1, 1]} : vector<8x512xf32> to vector<8x128xf32>
    %cst_31 = arith.constant 5.000000e-01 : f32
    %64 = vector.broadcast %cst_31 : f32 to vector<8x128xf32>
    %65 = arith.mulf %64, %63 : vector<8x128xf32>
    %66 = math.tanh %65 : vector<8x128xf32>
    %cst_32 = arith.constant 5.000000e-01 : f32
    %67 = vector.broadcast %cst_32 : f32 to vector<8x128xf32>
    %68 = arith.mulf %67, %66 : vector<8x128xf32>
    %cst_33 = arith.constant 5.000000e-01 : f32
    %69 = vector.broadcast %cst_33 : f32 to vector<8x128xf32>
    %70 = arith.addf %68, %69 : vector<8x128xf32>
    %71 = vector.extract_strided_slice %23 {offsets = [0, 256], sizes = [8, 128], strides = [1, 1]} : vector<8x512xf32> to vector<8x128xf32>
    %72 = math.tanh %71 : vector<8x128xf32>
    %73 = vector.extract_strided_slice %23 {offsets = [0, 384], sizes = [8, 128], strides = [1, 1]} : vector<8x512xf32> to vector<8x128xf32>
    %cst_34 = arith.constant 5.000000e-01 : f32
    %74 = vector.broadcast %cst_34 : f32 to vector<8x128xf32>
    %75 = arith.mulf %74, %73 : vector<8x128xf32>
    %76 = math.tanh %75 : vector<8x128xf32>
    %cst_35 = arith.constant 5.000000e-01 : f32
    %77 = vector.broadcast %cst_35 : f32 to vector<8x128xf32>
    %78 = arith.mulf %77, %76 : vector<8x128xf32>
    %cst_36 = arith.constant 5.000000e-01 : f32
    %79 = vector.broadcast %cst_36 : f32 to vector<8x128xf32>
    %80 = arith.addf %78, %79 : vector<8x128xf32>
    %81 = arith.mulf %70, %10 : vector<8x128xf32>
    %82 = arith.mulf %62, %72 : vector<8x128xf32>
    %83 = arith.addf %81, %82 : vector<8x128xf32>
    %84 = math.tanh %83 : vector<8x128xf32>
    %85 = arith.mulf %80, %84 : vector<8x128xf32>
    %86 = arith.index_cast %c0_i32_13 : i32 to index
    %c0_37 = arith.constant 0 : index
    %c0_38 = arith.constant 0 : index
    %87 = vector.load %arg4[%86, %c0_37, %c0_38] : memref<4x8x128xf32, #tpu.memory_space<vmem>>, vector<1x8x128xf32>
    %88 = vector.shape_cast %87 : vector<1x8x128xf32> to vector<8x128xf32>
    %89 = vector.shape_cast %54 : vector<8x128xf32> to vector<1x8x128xf32>
    tpu.vector_store %arg4[%86, %c0_37, %c0_38], %89 {strides = array<i32>} : memref<4x8x128xf32, #tpu.memory_space<vmem>>, vector<1x8x128xf32>,
    %90 = arith.index_cast %11 : i32 to index
    %c0_39 = arith.constant 0 : index
    %c0_40 = arith.constant 0 : index
    %91 = vector.load %arg5[%90, %c0_39, %c0_40] : memref<4x8x128xf32, #tpu.memory_space<vmem>>, vector<1x8x128xf32>
    %92 = vector.shape_cast %91 : vector<1x8x128xf32> to vector<8x128xf32>
    %93 = vector.shape_cast %85 : vector<8x128xf32> to vector<1x8x128xf32>
    tpu.vector_store %arg5[%90, %c0_39, %c0_40], %93 {strides = array<i32>} : memref<4x8x128xf32, #tpu.memory_space<vmem>>, vector<1x8x128xf32>,
    %c1_i32 = arith.constant 1 : i32
    %c3_i32_41 = arith.constant 3 : i32
    %94 = arith.subi %c3_i32_41, %c1_i32 : i32
    %95 = arith.index_cast %c1_i32 : i32 to index
    %c0_42 = arith.constant 0 : index
    %c0_43 = arith.constant 0 : index
    %96 = vector.load %arg1[%95, %c0_42, %c0_43] : memref<4x8x512xf32, #tpu.memory_space<vmem>>, vector<1x8x512xf32>
    %97 = vector.shape_cast %96 : vector<1x8x512xf32> to vector<8x512xf32>
    %98 = arith.truncf %54 : vector<8x128xf32> to vector<8x128xbf16>
    %cst_44 = arith.constant dense<0.000000e+00> : vector<8x512xf32>
    %99 = tpu.matmul %98, %4, %cst_44 {dimension_numbers = #tpu.dot_dimension_numbers<[1], [0], [0], [1], [0, 0, 1, 1], [], []>} : vector<8x128xbf16>, vector<128x512xbf16>, vector<8x512xf32> -> vector<8x512xf32>
    %100 = arith.addf %97, %99 : vector<8x512xf32>
    %101 = arith.index_cast %94 : i32 to index
    %c0_45 = arith.constant 0 : index
    %c0_46 = arith.constant 0 : index
    %102 = vector.load %arg2[%101, %c0_45, %c0_46] : memref<4x8x512xf32, #tpu.memory_space<vmem>>, vector<1x8x512xf32>
    %103 = vector.shape_cast %102 : vector<1x8x512xf32> to vector<8x512xf32>
    %104 = arith.truncf %85 : vector<8x128xf32> to vector<8x128xbf16>
    %cst_47 = arith.constant dense<0.000000e+00> : vector<8x512xf32>
    %105 = tpu.matmul %104, %6, %cst_47 {dimension_numbers = #tpu.dot_dimension_numbers<[1], [0], [0], [1], [0, 0, 1, 1], [], []>} : vector<8x128xbf16>, vector<128x512xbf16>, vector<8x512xf32> -> vector<8x512xf32>
    %106 = arith.addf %103, %105 : vector<8x512xf32>
    %107 = vector.extract_strided_slice %100 {offsets = [0, 0], sizes = [8, 128], strides = [1, 1]} : vector<8x512xf32> to vector<8x128xf32>
    %cst_48 = arith.constant 5.000000e-01 : f32
    %108 = vector.broadcast %cst_48 : f32 to vector<8x128xf32>
    %109 = arith.mulf %108, %107 : vector<8x128xf32>
    %110 = math.tanh %109 : vector<8x128xf32>
    %cst_49 = arith.constant 5.000000e-01 : f32
    %111 = vector.broadcast %cst_49 : f32 to vector<8x128xf32>
    %112 = arith.mulf %111, %110 : vector<8x128xf32>
    %cst_50 = arith.constant 5.000000e-01 : f32
    %113 = vector.broadcast %cst_50 : f32 to vector<8x128xf32>
    %114 = arith.addf %112, %113 : vector<8x128xf32>
    %115 = vector.extract_strided_slice %100 {offsets = [0, 128], sizes = [8, 128], strides = [1, 1]} : vector<8x512xf32> to vector<8x128xf32>
    %cst_51 = arith.constant 5.000000e-01 : f32
    %116 = vector.broadcast %cst_51 : f32 to vector<8x128xf32>
    %117 = arith.mulf %116, %115 : vector<8x128xf32>
    %118 = math.tanh %117 : vector<8x128xf32>
    %cst_52 = arith.constant 5.000000e-01 : f32
    %119 = vector.broadcast %cst_52 : f32 to vector<8x128xf32>
    %120 = arith.mulf %119, %118 : vector<8x128xf32>
    %cst_53 = arith.constant 5.000000e-01 : f32
    %121 = vector.broadcast %cst_53 : f32 to vector<8x128xf32>
    %122 = arith.addf %120, %121 : vector<8x128xf32>
    %123 = vector.extract_strided_slice %100 {offsets = [0, 256], sizes = [8, 128], strides = [1, 1]} : vector<8x512xf32> to vector<8x128xf32>
    %124 = math.tanh %123 : vector<8x128xf32>
    %125 = vector.extract_strided_slice %100 {offsets = [0, 384], sizes = [8, 128], strides = [1, 1]} : vector<8x512xf32> to vector<8x128xf32>
    %cst_54 = arith.constant 5.000000e-01 : f32
    %126 = vector.broadcast %cst_54 : f32 to vector<8x128xf32>
    %127 = arith.mulf %126, %125 : vector<8x128xf32>
    %128 = math.tanh %127 : vector<8x128xf32>
    %cst_55 = arith.constant 5.000000e-01 : f32
    %129 = vector.broadcast %cst_55 : f32 to vector<8x128xf32>
    %130 = arith.mulf %129, %128 : vector<8x128xf32>
    %cst_56 = arith.constant 5.000000e-01 : f32
    %131 = vector.broadcast %cst_56 : f32 to vector<8x128xf32>
    %132 = arith.addf %130, %131 : vector<8x128xf32>
    %133 = arith.mulf %122, %52 : vector<8x128xf32>
    %134 = arith.mulf %114, %124 : vector<8x128xf32>
    %135 = arith.addf %133, %134 : vector<8x128xf32>
    %136 = math.tanh %135 : vector<8x128xf32>
    %137 = arith.mulf %132, %136 : vector<8x128xf32>
    %138 = vector.extract_strided_slice %106 {offsets = [0, 0], sizes = [8, 128], strides = [1, 1]} : vector<8x512xf32> to vector<8x128xf32>
    %cst_57 = arith.constant 5.000000e-01 : f32
    %139 = vector.broadcast %cst_57 : f32 to vector<8x128xf32>
    %140 = arith.mulf %139, %138 : vector<8x128xf32>
    %141 = math.tanh %140 : vector<8x128xf32>
    %cst_58 = arith.constant 5.000000e-01 : f32
    %142 = vector.broadcast %cst_58 : f32 to vector<8x128xf32>
    %143 = arith.mulf %142, %141 : vector<8x128xf32>
    %cst_59 = arith.constant 5.000000e-01 : f32
    %144 = vector.broadcast %cst_59 : f32 to vector<8x128xf32>
    %145 = arith.addf %143, %144 : vector<8x128xf32>
    %146 = vector.extract_strided_slice %106 {offsets = [0, 128], sizes = [8, 128], strides = [1, 1]} : vector<8x512xf32> to vector<8x128xf32>
    %cst_60 = arith.constant 5.000000e-01 : f32
    %147 = vector.broadcast %cst_60 : f32 to vector<8x128xf32>
    %148 = arith.mulf %147, %146 : vector<8x128xf32>
    %149 = math.tanh %148 : vector<8x128xf32>
    %cst_61 = arith.constant 5.000000e-01 : f32
    %150 = vector.broadcast %cst_61 : f32 to vector<8x128xf32>
    %151 = arith.mulf %150, %149 : vector<8x128xf32>
    %cst_62 = arith.constant 5.000000e-01 : f32
    %152 = vector.broadcast %cst_62 : f32 to vector<8x128xf32>
    %153 = arith.addf %151, %152 : vector<8x128xf32>
    %154 = vector.extract_strided_slice %106 {offsets = [0, 256], sizes = [8, 128], strides = [1, 1]} : vector<8x512xf32> to vector<8x128xf32>
    %155 = math.tanh %154 : vector<8x128xf32>
    %156 = vector.extract_strided_slice %106 {offsets = [0, 384], sizes = [8, 128], strides = [1, 1]} : vector<8x512xf32> to vector<8x128xf32>
    %cst_63 = arith.constant 5.000000e-01 : f32
    %157 = vector.broadcast %cst_63 : f32 to vector<8x128xf32>
    %158 = arith.mulf %157, %156 : vector<8x128xf32>
    %159 = math.tanh %158 : vector<8x128xf32>
    %cst_64 = arith.constant 5.000000e-01 : f32
    %160 = vector.broadcast %cst_64 : f32 to vector<8x128xf32>
    %161 = arith.mulf %160, %159 : vector<8x128xf32>
    %cst_65 = arith.constant 5.000000e-01 : f32
    %162 = vector.broadcast %cst_65 : f32 to vector<8x128xf32>
    %163 = arith.addf %161, %162 : vector<8x128xf32>
    %164 = arith.mulf %153, %83 : vector<8x128xf32>
    %165 = arith.mulf %145, %155 : vector<8x128xf32>
    %166 = arith.addf %164, %165 : vector<8x128xf32>
    %167 = math.tanh %166 : vector<8x128xf32>
    %168 = arith.mulf %163, %167 : vector<8x128xf32>
    %169 = arith.index_cast %c1_i32 : i32 to index
    %c0_66 = arith.constant 0 : index
    %c0_67 = arith.constant 0 : index
    %170 = vector.load %arg4[%169, %c0_66, %c0_67] : memref<4x8x128xf32, #tpu.memory_space<vmem>>, vector<1x8x128xf32>
    %171 = vector.shape_cast %170 : vector<1x8x128xf32> to vector<8x128xf32>
    %172 = vector.shape_cast %137 : vector<8x128xf32> to vector<1x8x128xf32>
    tpu.vector_store %arg4[%169, %c0_66, %c0_67], %172 {strides = array<i32>} : memref<4x8x128xf32, #tpu.memory_space<vmem>>, vector<1x8x128xf32>,
    %173 = arith.index_cast %94 : i32 to index
    %c0_68 = arith.constant 0 : index
    %c0_69 = arith.constant 0 : index
    %174 = vector.load %arg5[%173, %c0_68, %c0_69] : memref<4x8x128xf32, #tpu.memory_space<vmem>>, vector<1x8x128xf32>
    %175 = vector.shape_cast %174 : vector<1x8x128xf32> to vector<8x128xf32>
    %176 = vector.shape_cast %168 : vector<8x128xf32> to vector<1x8x128xf32>
    tpu.vector_store %arg5[%173, %c0_68, %c0_69], %176 {strides = array<i32>} : memref<4x8x128xf32, #tpu.memory_space<vmem>>, vector<1x8x128xf32>,
    %c2_i32 = arith.constant 2 : i32
    %c3_i32_70 = arith.constant 3 : i32
    %177 = arith.subi %c3_i32_70, %c2_i32 : i32
    %178 = arith.index_cast %c2_i32 : i32 to index
    %c0_71 = arith.constant 0 : index
    %c0_72 = arith.constant 0 : index
    %179 = vector.load %arg1[%178, %c0_71, %c0_72] : memref<4x8x512xf32, #tpu.memory_space<vmem>>, vector<1x8x512xf32>
    %180 = vector.shape_cast %179 : vector<1x8x512xf32> to vector<8x512xf32>
    %181 = arith.truncf %137 : vector<8x128xf32> to vector<8x128xbf16>
    %cst_73 = arith.constant dense<0.000000e+00> : vector<8x512xf32>
    %182 = tpu.matmul %181, %4, %cst_73 {dimension_numbers = #tpu.dot_dimension_numbers<[1], [0], [0], [1], [0, 0, 1, 1], [], []>} : vector<8x128xbf16>, vector<128x512xbf16>, vector<8x512xf32> -> vector<8x512xf32>
    %183 = arith.addf %180, %182 : vector<8x512xf32>
    %184 = arith.index_cast %177 : i32 to index
    %c0_74 = arith.constant 0 : index
    %c0_75 = arith.constant 0 : index
    %185 = vector.load %arg2[%184, %c0_74, %c0_75] : memref<4x8x512xf32, #tpu.memory_space<vmem>>, vector<1x8x512xf32>
    %186 = vector.shape_cast %185 : vector<1x8x512xf32> to vector<8x512xf32>
    %187 = arith.truncf %168 : vector<8x128xf32> to vector<8x128xbf16>
    %cst_76 = arith.constant dense<0.000000e+00> : vector<8x512xf32>
    %188 = tpu.matmul %187, %6, %cst_76 {dimension_numbers = #tpu.dot_dimension_numbers<[1], [0], [0], [1], [0, 0, 1, 1], [], []>} : vector<8x128xbf16>, vector<128x512xbf16>, vector<8x512xf32> -> vector<8x512xf32>
    %189 = arith.addf %186, %188 : vector<8x512xf32>
    %190 = vector.extract_strided_slice %183 {offsets = [0, 0], sizes = [8, 128], strides = [1, 1]} : vector<8x512xf32> to vector<8x128xf32>
    %cst_77 = arith.constant 5.000000e-01 : f32
    %191 = vector.broadcast %cst_77 : f32 to vector<8x128xf32>
    %192 = arith.mulf %191, %190 : vector<8x128xf32>
    %193 = math.tanh %192 : vector<8x128xf32>
    %cst_78 = arith.constant 5.000000e-01 : f32
    %194 = vector.broadcast %cst_78 : f32 to vector<8x128xf32>
    %195 = arith.mulf %194, %193 : vector<8x128xf32>
    %cst_79 = arith.constant 5.000000e-01 : f32
    %196 = vector.broadcast %cst_79 : f32 to vector<8x128xf32>
    %197 = arith.addf %195, %196 : vector<8x128xf32>
    %198 = vector.extract_strided_slice %183 {offsets = [0, 128], sizes = [8, 128], strides = [1, 1]} : vector<8x512xf32> to vector<8x128xf32>
    %cst_80 = arith.constant 5.000000e-01 : f32
    %199 = vector.broadcast %cst_80 : f32 to vector<8x128xf32>
    %200 = arith.mulf %199, %198 : vector<8x128xf32>
    %201 = math.tanh %200 : vector<8x128xf32>
    %cst_81 = arith.constant 5.000000e-01 : f32
    %202 = vector.broadcast %cst_81 : f32 to vector<8x128xf32>
    %203 = arith.mulf %202, %201 : vector<8x128xf32>
    %cst_82 = arith.constant 5.000000e-01 : f32
    %204 = vector.broadcast %cst_82 : f32 to vector<8x128xf32>
    %205 = arith.addf %203, %204 : vector<8x128xf32>
    %206 = vector.extract_strided_slice %183 {offsets = [0, 256], sizes = [8, 128], strides = [1, 1]} : vector<8x512xf32> to vector<8x128xf32>
    %207 = math.tanh %206 : vector<8x128xf32>
    %208 = vector.extract_strided_slice %183 {offsets = [0, 384], sizes = [8, 128], strides = [1, 1]} : vector<8x512xf32> to vector<8x128xf32>
    %cst_83 = arith.constant 5.000000e-01 : f32
    %209 = vector.broadcast %cst_83 : f32 to vector<8x128xf32>
    %210 = arith.mulf %209, %208 : vector<8x128xf32>
    %211 = math.tanh %210 : vector<8x128xf32>
    %cst_84 = arith.constant 5.000000e-01 : f32
    %212 = vector.broadcast %cst_84 : f32 to vector<8x128xf32>
    %213 = arith.mulf %212, %211 : vector<8x128xf32>
    %cst_85 = arith.constant 5.000000e-01 : f32
    %214 = vector.broadcast %cst_85 : f32 to vector<8x128xf32>
    %215 = arith.addf %213, %214 : vector<8x128xf32>
    %216 = arith.mulf %205, %135 : vector<8x128xf32>
    %217 = arith.mulf %197, %207 : vector<8x128xf32>
    %218 = arith.addf %216, %217 : vector<8x128xf32>
    %219 = math.tanh %218 : vector<8x128xf32>
    %220 = arith.mulf %215, %219 : vector<8x128xf32>
    %221 = vector.extract_strided_slice %189 {offsets = [0, 0], sizes = [8, 128], strides = [1, 1]} : vector<8x512xf32> to vector<8x128xf32>
    %cst_86 = arith.constant 5.000000e-01 : f32
    %222 = vector.broadcast %cst_86 : f32 to vector<8x128xf32>
    %223 = arith.mulf %222, %221 : vector<8x128xf32>
    %224 = math.tanh %223 : vector<8x128xf32>
    %cst_87 = arith.constant 5.000000e-01 : f32
    %225 = vector.broadcast %cst_87 : f32 to vector<8x128xf32>
    %226 = arith.mulf %225, %224 : vector<8x128xf32>
    %cst_88 = arith.constant 5.000000e-01 : f32
    %227 = vector.broadcast %cst_88 : f32 to vector<8x128xf32>
    %228 = arith.addf %226, %227 : vector<8x128xf32>
    %229 = vector.extract_strided_slice %189 {offsets = [0, 128], sizes = [8, 128], strides = [1, 1]} : vector<8x512xf32> to vector<8x128xf32>
    %cst_89 = arith.constant 5.000000e-01 : f32
    %230 = vector.broadcast %cst_89 : f32 to vector<8x128xf32>
    %231 = arith.mulf %230, %229 : vector<8x128xf32>
    %232 = math.tanh %231 : vector<8x128xf32>
    %cst_90 = arith.constant 5.000000e-01 : f32
    %233 = vector.broadcast %cst_90 : f32 to vector<8x128xf32>
    %234 = arith.mulf %233, %232 : vector<8x128xf32>
    %cst_91 = arith.constant 5.000000e-01 : f32
    %235 = vector.broadcast %cst_91 : f32 to vector<8x128xf32>
    %236 = arith.addf %234, %235 : vector<8x128xf32>
    %237 = vector.extract_strided_slice %189 {offsets = [0, 256], sizes = [8, 128], strides = [1, 1]} : vector<8x512xf32> to vector<8x128xf32>
    %238 = math.tanh %237 : vector<8x128xf32>
    %239 = vector.extract_strided_slice %189 {offsets = [0, 384], sizes = [8, 128], strides = [1, 1]} : vector<8x512xf32> to vector<8x128xf32>
    %cst_92 = arith.constant 5.000000e-01 : f32
    %240 = vector.broadcast %cst_92 : f32 to vector<8x128xf32>
    %241 = arith.mulf %240, %239 : vector<8x128xf32>
    %242 = math.tanh %241 : vector<8x128xf32>
    %cst_93 = arith.constant 5.000000e-01 : f32
    %243 = vector.broadcast %cst_93 : f32 to vector<8x128xf32>
    %244 = arith.mulf %243, %242 : vector<8x128xf32>
    %cst_94 = arith.constant 5.000000e-01 : f32
    %245 = vector.broadcast %cst_94 : f32 to vector<8x128xf32>
    %246 = arith.addf %244, %245 : vector<8x128xf32>
    %247 = arith.mulf %236, %166 : vector<8x128xf32>
    %248 = arith.mulf %228, %238 : vector<8x128xf32>
    %249 = arith.addf %247, %248 : vector<8x128xf32>
    %250 = math.tanh %249 : vector<8x128xf32>
    %251 = arith.mulf %246, %250 : vector<8x128xf32>
    %252 = arith.index_cast %c2_i32 : i32 to index
    %c0_95 = arith.constant 0 : index
    %c0_96 = arith.constant 0 : index
    %253 = vector.load %arg4[%252, %c0_95, %c0_96] : memref<4x8x128xf32, #tpu.memory_space<vmem>>, vector<1x8x128xf32>
    %254 = vector.shape_cast %253 : vector<1x8x128xf32> to vector<8x128xf32>
    %255 = vector.shape_cast %220 : vector<8x128xf32> to vector<1x8x128xf32>
    tpu.vector_store %arg4[%252, %c0_95, %c0_96], %255 {strides = array<i32>} : memref<4x8x128xf32, #tpu.memory_space<vmem>>, vector<1x8x128xf32>,
    %256 = arith.index_cast %177 : i32 to index
    %c0_97 = arith.constant 0 : index
    %c0_98 = arith.constant 0 : index
    %257 = vector.load %arg5[%256, %c0_97, %c0_98] : memref<4x8x128xf32, #tpu.memory_space<vmem>>, vector<1x8x128xf32>
    %258 = vector.shape_cast %257 : vector<1x8x128xf32> to vector<8x128xf32>
    %259 = vector.shape_cast %251 : vector<8x128xf32> to vector<1x8x128xf32>
    tpu.vector_store %arg5[%256, %c0_97, %c0_98], %259 {strides = array<i32>} : memref<4x8x128xf32, #tpu.memory_space<vmem>>, vector<1x8x128xf32>,
    %c3_i32_99 = arith.constant 3 : i32
    %c3_i32_100 = arith.constant 3 : i32
    %260 = arith.subi %c3_i32_100, %c3_i32_99 : i32
    %261 = arith.index_cast %c3_i32_99 : i32 to index
    %c0_101 = arith.constant 0 : index
    %c0_102 = arith.constant 0 : index
    %262 = vector.load %arg1[%261, %c0_101, %c0_102] : memref<4x8x512xf32, #tpu.memory_space<vmem>>, vector<1x8x512xf32>
    %263 = vector.shape_cast %262 : vector<1x8x512xf32> to vector<8x512xf32>
    %264 = arith.truncf %220 : vector<8x128xf32> to vector<8x128xbf16>
    %cst_103 = arith.constant dense<0.000000e+00> : vector<8x512xf32>
    %265 = tpu.matmul %264, %4, %cst_103 {dimension_numbers = #tpu.dot_dimension_numbers<[1], [0], [0], [1], [0, 0, 1, 1], [], []>} : vector<8x128xbf16>, vector<128x512xbf16>, vector<8x512xf32> -> vector<8x512xf32>
    %266 = arith.addf %263, %265 : vector<8x512xf32>
    %267 = arith.index_cast %260 : i32 to index
    %c0_104 = arith.constant 0 : index
    %c0_105 = arith.constant 0 : index
    %268 = vector.load %arg2[%267, %c0_104, %c0_105] : memref<4x8x512xf32, #tpu.memory_space<vmem>>, vector<1x8x512xf32>
    %269 = vector.shape_cast %268 : vector<1x8x512xf32> to vector<8x512xf32>
    %270 = arith.truncf %251 : vector<8x128xf32> to vector<8x128xbf16>
    %cst_106 = arith.constant dense<0.000000e+00> : vector<8x512xf32>
    %271 = tpu.matmul %270, %6, %cst_106 {dimension_numbers = #tpu.dot_dimension_numbers<[1], [0], [0], [1], [0, 0, 1, 1], [], []>} : vector<8x128xbf16>, vector<128x512xbf16>, vector<8x512xf32> -> vector<8x512xf32>
    %272 = arith.addf %269, %271 : vector<8x512xf32>
    %273 = vector.extract_strided_slice %266 {offsets = [0, 0], sizes = [8, 128], strides = [1, 1]} : vector<8x512xf32> to vector<8x128xf32>
    %cst_107 = arith.constant 5.000000e-01 : f32
    %274 = vector.broadcast %cst_107 : f32 to vector<8x128xf32>
    %275 = arith.mulf %274, %273 : vector<8x128xf32>
    %276 = math.tanh %275 : vector<8x128xf32>
    %cst_108 = arith.constant 5.000000e-01 : f32
    %277 = vector.broadcast %cst_108 : f32 to vector<8x128xf32>
    %278 = arith.mulf %277, %276 : vector<8x128xf32>
    %cst_109 = arith.constant 5.000000e-01 : f32
    %279 = vector.broadcast %cst_109 : f32 to vector<8x128xf32>
    %280 = arith.addf %278, %279 : vector<8x128xf32>
    %281 = vector.extract_strided_slice %266 {offsets = [0, 128], sizes = [8, 128], strides = [1, 1]} : vector<8x512xf32> to vector<8x128xf32>
    %cst_110 = arith.constant 5.000000e-01 : f32
    %282 = vector.broadcast %cst_110 : f32 to vector<8x128xf32>
    %283 = arith.mulf %282, %281 : vector<8x128xf32>
    %284 = math.tanh %283 : vector<8x128xf32>
    %cst_111 = arith.constant 5.000000e-01 : f32
    %285 = vector.broadcast %cst_111 : f32 to vector<8x128xf32>
    %286 = arith.mulf %285, %284 : vector<8x128xf32>
    %cst_112 = arith.constant 5.000000e-01 : f32
    %287 = vector.broadcast %cst_112 : f32 to vector<8x128xf32>
    %288 = arith.addf %286, %287 : vector<8x128xf32>
    %289 = vector.extract_strided_slice %266 {offsets = [0, 256], sizes = [8, 128], strides = [1, 1]} : vector<8x512xf32> to vector<8x128xf32>
    %290 = math.tanh %289 : vector<8x128xf32>
    %291 = vector.extract_strided_slice %266 {offsets = [0, 384], sizes = [8, 128], strides = [1, 1]} : vector<8x512xf32> to vector<8x128xf32>
    %cst_113 = arith.constant 5.000000e-01 : f32
    %292 = vector.broadcast %cst_113 : f32 to vector<8x128xf32>
    %293 = arith.mulf %292, %291 : vector<8x128xf32>
    %294 = math.tanh %293 : vector<8x128xf32>
    %cst_114 = arith.constant 5.000000e-01 : f32
    %295 = vector.broadcast %cst_114 : f32 to vector<8x128xf32>
    %296 = arith.mulf %295, %294 : vector<8x128xf32>
    %cst_115 = arith.constant 5.000000e-01 : f32
    %297 = vector.broadcast %cst_115 : f32 to vector<8x128xf32>
    %298 = arith.addf %296, %297 : vector<8x128xf32>
    %299 = arith.mulf %288, %218 : vector<8x128xf32>
    %300 = arith.mulf %280, %290 : vector<8x128xf32>
    %301 = arith.addf %299, %300 : vector<8x128xf32>
    %302 = math.tanh %301 : vector<8x128xf32>
    %303 = arith.mulf %298, %302 : vector<8x128xf32>
    %304 = vector.extract_strided_slice %272 {offsets = [0, 0], sizes = [8, 128], strides = [1, 1]} : vector<8x512xf32> to vector<8x128xf32>
    %cst_116 = arith.constant 5.000000e-01 : f32
    %305 = vector.broadcast %cst_116 : f32 to vector<8x128xf32>
    %306 = arith.mulf %305, %304 : vector<8x128xf32>
    %307 = math.tanh %306 : vector<8x128xf32>
    %cst_117 = arith.constant 5.000000e-01 : f32
    %308 = vector.broadcast %cst_117 : f32 to vector<8x128xf32>
    %309 = arith.mulf %308, %307 : vector<8x128xf32>
    %cst_118 = arith.constant 5.000000e-01 : f32
    %310 = vector.broadcast %cst_118 : f32 to vector<8x128xf32>
    %311 = arith.addf %309, %310 : vector<8x128xf32>
    %312 = vector.extract_strided_slice %272 {offsets = [0, 128], sizes = [8, 128], strides = [1, 1]} : vector<8x512xf32> to vector<8x128xf32>
    %cst_119 = arith.constant 5.000000e-01 : f32
    %313 = vector.broadcast %cst_119 : f32 to vector<8x128xf32>
    %314 = arith.mulf %313, %312 : vector<8x128xf32>
    %315 = math.tanh %314 : vector<8x128xf32>
    %cst_120 = arith.constant 5.000000e-01 : f32
    %316 = vector.broadcast %cst_120 : f32 to vector<8x128xf32>
    %317 = arith.mulf %316, %315 : vector<8x128xf32>
    %cst_121 = arith.constant 5.000000e-01 : f32
    %318 = vector.broadcast %cst_121 : f32 to vector<8x128xf32>
    %319 = arith.addf %317, %318 : vector<8x128xf32>
    %320 = vector.extract_strided_slice %272 {offsets = [0, 256], sizes = [8, 128], strides = [1, 1]} : vector<8x512xf32> to vector<8x128xf32>
    %321 = math.tanh %320 : vector<8x128xf32>
    %322 = vector.extract_strided_slice %272 {offsets = [0, 384], sizes = [8, 128], strides = [1, 1]} : vector<8x512xf32> to vector<8x128xf32>
    %cst_122 = arith.constant 5.000000e-01 : f32
    %323 = vector.broadcast %cst_122 : f32 to vector<8x128xf32>
    %324 = arith.mulf %323, %322 : vector<8x128xf32>
    %325 = math.tanh %324 : vector<8x128xf32>
    %cst_123 = arith.constant 5.000000e-01 : f32
    %326 = vector.broadcast %cst_123 : f32 to vector<8x128xf32>
    %327 = arith.mulf %326, %325 : vector<8x128xf32>
    %cst_124 = arith.constant 5.000000e-01 : f32
    %328 = vector.broadcast %cst_124 : f32 to vector<8x128xf32>
    %329 = arith.addf %327, %328 : vector<8x128xf32>
    %330 = arith.mulf %319, %249 : vector<8x128xf32>
    %331 = arith.mulf %311, %321 : vector<8x128xf32>
    %332 = arith.addf %330, %331 : vector<8x128xf32>
    %333 = math.tanh %332 : vector<8x128xf32>
    %334 = arith.mulf %329, %333 : vector<8x128xf32>
    %335 = arith.index_cast %c3_i32_99 : i32 to index
    %c0_125 = arith.constant 0 : index
    %c0_126 = arith.constant 0 : index
    %336 = vector.load %arg4[%335, %c0_125, %c0_126] : memref<4x8x128xf32, #tpu.memory_space<vmem>>, vector<1x8x128xf32>
    %337 = vector.shape_cast %336 : vector<1x8x128xf32> to vector<8x128xf32>
    %338 = vector.shape_cast %303 : vector<8x128xf32> to vector<1x8x128xf32>
    tpu.vector_store %arg4[%335, %c0_125, %c0_126], %338 {strides = array<i32>} : memref<4x8x128xf32, #tpu.memory_space<vmem>>, vector<1x8x128xf32>,
    %339 = arith.index_cast %260 : i32 to index
    %c0_127 = arith.constant 0 : index
    %c0_128 = arith.constant 0 : index
    %340 = vector.load %arg5[%339, %c0_127, %c0_128] : memref<4x8x128xf32, #tpu.memory_space<vmem>>, vector<1x8x128xf32>
    %341 = vector.shape_cast %340 : vector<1x8x128xf32> to vector<8x128xf32>
    %342 = vector.shape_cast %334 : vector<8x128xf32> to vector<1x8x128xf32>
    tpu.vector_store %arg5[%339, %c0_127, %c0_128], %342 {strides = array<i32>} : memref<4x8x128xf32, #tpu.memory_space<vmem>>, vector<1x8x128xf32>,
    %c4_i32 = arith.constant 4 : i32
    %c0_129 = arith.constant 0 : index
    %c0_130 = arith.constant 0 : index
    %343 = vector.load %arg6[%c0_129, %c0_130] : memref<8x128xf32, #tpu.memory_space<vmem>>, vector<8x128xf32>
    tpu.vector_store %arg6[%c0_129, %c0_130], %303 {strides = array<i32>} : memref<8x128xf32, #tpu.memory_space<vmem>>, vector<8x128xf32>,
    %c0_131 = arith.constant 0 : index
    %c0_132 = arith.constant 0 : index
    %344 = vector.load %arg7[%c0_131, %c0_132] : memref<8x128xf32, #tpu.memory_space<vmem>>, vector<8x128xf32>
    tpu.vector_store %arg7[%c0_131, %c0_132], %301 {strides = array<i32>} : memref<8x128xf32, #tpu.memory_space<vmem>>, vector<8x128xf32>,
    %c0_133 = arith.constant 0 : index
    %c0_134 = arith.constant 0 : index
    %345 = vector.load %arg8[%c0_133, %c0_134] : memref<8x128xf32, #tpu.memory_space<vmem>>, vector<8x128xf32>
    tpu.vector_store %arg8[%c0_133, %c0_134], %334 {strides = array<i32>} : memref<8x128xf32, #tpu.memory_space<vmem>>, vector<8x128xf32>,
    %c0_135 = arith.constant 0 : index
    %c0_136 = arith.constant 0 : index
    %346 = vector.load %arg9[%c0_135, %c0_136] : memref<8x128xf32, #tpu.memory_space<vmem>>, vector<8x128xf32>
    tpu.vector_store %arg9[%c0_135, %c0_136], %332 {strides = array<i32>} : memref<8x128xf32, #tpu.memory_space<vmem>>, vector<8x128xf32>,
    return
  }
  func.func @transform_0(%arg0: i32) -> (i32, i32, i32) {
    %c0_i32 = arith.constant 0 : i32
    %c0_i32_0 = arith.constant 0 : i32
    %c0_i32_1 = arith.constant 0 : i32
    return %arg0, %c0_i32, %c0_i32_0 : i32, i32, i32
  }
  func.func @transform_1(%arg0: i32) -> (i32, i32, i32) {
    %c1_i32 = arith.constant 1 : i32
    %0 = arith.subi %c1_i32, %arg0 : i32
    %c0_i32 = arith.constant 0 : i32
    %c1_i32_0 = arith.constant 1 : i32
    %c0_i32_1 = arith.constant 0 : i32
    return %0, %c0_i32, %c1_i32_0 : i32, i32, i32
  }
  func.func @transform_2(%arg0: i32) -> (i32, i32, i32) {
    %c0_i32 = arith.constant 0 : i32
    %c0_i32_0 = arith.constant 0 : i32
    %c0_i32_1 = arith.constant 0 : i32
    %c0_i32_2 = arith.constant 0 : i32
    return %c0_i32, %c0_i32_0, %c0_i32_1 : i32, i32, i32
  }
  func.func @transform_3(%arg0: i32) -> (i32, i32, i32) {
    %c0_i32 = arith.constant 0 : i32
    %c0_i32_0 = arith.constant 0 : i32
    %c0_i32_1 = arith.constant 0 : i32
    return %arg0, %c0_i32, %c0_i32_0 : i32, i32, i32
  }
  func.func @transform_4(%arg0: i32) -> (i32, i32, i32) {
    %c1_i32 = arith.constant 1 : i32
    %0 = arith.subi %c1_i32, %arg0 : i32
    %c0_i32 = arith.constant 0 : i32
    %c0_i32_0 = arith.constant 0 : i32
    %c0_i32_1 = arith.constant 0 : i32
    return %0, %c0_i32, %c0_i32_0 : i32, i32, i32
  }
}

</mosaic_0001>

<llo_original>
// kernel: tpu_custom_call.1
$region0: #{tpu_custom_call.1}
  #allocation0 [shape = 'u32[]', space=smem, size = 0x4, offset = 0x4, fixed_abs, tag = 'smem constant byte address 0x4 - core index']
  #allocation1 [shape = 'u32[72,128]{1,0:T(1,128)}', space=vmem, size = 0x9000, scoped, tag = 'internal scratch']
  %s0 = inlined_call_operand.hbm [shape: f32[8,128], index: 0, kind: input, shape index: {}]
  %s1 = inlined_call_operand.hbm [shape: f32[16,128], index: 1, kind: input, shape index: {}]
  %s2 = inlined_call_operand.hbm [shape: f32[16,128], index: 2, kind: output, shape index: {}]
  %s3 = sld [smem:[#allocation0]]
  $region49: #{tpu_custom_call.1} parent=0
    _
  %s5 = ssub.s32 1, %s3
  %s6 = scalar_select 0, %s5, %s3
  $region1: #{tpu_custom_call.1} parent=0
    #allocation2 [shape = 'u8[4096]{0}', space=vmem, size = 0x1000, scoped, tag = 'input window, operand 0, single buffered']
    #allocation3 [shape = 's32[2]{0}', space=sflag, size = 0x8, scoped, tag = 'scoped memory for tpu_custom_call.1']
    #allocation4 [shape = 's32[2]{0}', space=sflag, size = 0x8, scoped, tag = 'scoped memory for tpu_custom_call.1']
    #allocation5 [shape = 'u8[8192]{0}', space=vmem, size = 0x2000, scoped, tag = 'input window, operand 1']
    #allocation6 [shape = 's32[2]{0}', space=sflag, size = 0x8, scoped, tag = 'scoped memory for tpu_custom_call.1']
    #allocation7 [shape = 'u8[8192]{0}', space=vmem, size = 0x2000, scoped, tag = 'output window, operand 0']
    %7 = vsyncpa [#allocation3], 0
    %8 = vsyncpa [#allocation6], 0
    %s9 = scalar_lea.sflag [#allocation6], 1
    %10 = vsyncpa %s9, 0
    %11 = vsyncpa [#allocation4], 0
    %s12 = scalar_lea.sflag [#allocation4], 1
    %13 = vsyncpa %s12, 0
    loop: start=0, step=1, limit=4
    $region2: #{tpu_custom_call.1} parent=1 // loop_pre_header
      _
    $region3: #{tpu_custom_call.1} parent=1 // loop_header
      %s15 = sphi 0, %s19
      %p16 = scmp.ge.s32.totalorder %s15, 4
      %s23 = sphi 0, %s23
      %s25 = sphi 0, %s23
      %s26 = sphi 0, %s25
      %s40 = sphi 0, %s26
      %s46 = sphi 0, %s48
      %s49 = sphi 0, %s46
      %s50 = sphi 0, %s49
      %s66 = sphi 0, %s50
      %s72 = sphi 0, %s74
      %s75 = sphi 0, %s72
      %s76 = sphi 0, %s75
      %s92 = sphi 0, %s76
    $region4: #{tpu_custom_call.1} parent=1 // loop_header_branch
      %18 = sbr.rel (%p16) target = $region8
    $region5: #{tpu_custom_call.1} parent=1 // loop_body
      %s20 = ssub.s32 %s15, 1
      %s21 = ssub.s32 %s15, 2
      %s22 = sadd.s32 %s15, 1
      %s24 = sadd.s32 %s23, 1
      %p27 = scmp.eq.s32.totalorder %s15, 1
      %p28 = scmp.ne.s32.totalorder %s23, %s25
      %p29 = scmp.eq.s32.totalorder %s15, 0
      %p30 = por %p28, %p29
      %p31 = scmp.ne.s32.totalorder %s23, %s25
      %p32 = scmp.eq.s32.totalorder %s20, 1
      %p33 = por %p31, %p32
      %p34 = scmp.ne.s32.totalorder %s25, %s26
      %p35 = scmp.eq.s32.totalorder %s20, 0
      %p36 = por %p34, %p35
      %p37 = scmp.ne.s32.totalorder %s25, %s26
      %p38 = scmp.eq.s32.totalorder %s21, 1
      %p39 = por %p37, %p38
      %p41 = scmp.ne.s32.totalorder %s26, %s40
      %p42 = scmp.eq.s32.totalorder %s21, 0
      %p43 = por %p41, %p42
      %s44 = ssub.s32 %s15, %s22
      %p45 = scmp.eq.s32.totalorder %s44, 0
      %s47 = sadd.s32 %s46, 1
      %s48 = scalar_select %p45, %s46, %s47
      %p51 = pneg %p45
      %p52 = scmp.eq.s32.totalorder %s15, 1
      %p53 = por %p51, %p52
      %p54 = scmp.ne.s32.totalorder %s46, %s49
      %p55 = scmp.eq.s32.totalorder %s15, 0
      %p56 = por %p54, %p55
      %p57 = scmp.ne.s32.totalorder %s46, %s49
      %p58 = scmp.eq.s32.totalorder %s20, 1
      %p59 = por %p57, %p58
      %p60 = scmp.ne.s32.totalorder %s49, %s50
      %p61 = scmp.eq.s32.totalorder %s20, 0
      %p62 = por %p60, %p61
      %p63 = scmp.ne.s32.totalorder %s49, %s50
      %p64 = scmp.eq.s32.totalorder %s21, 1
      %p65 = por %p63, %p64
      %p67 = scmp.ne.s32.totalorder %s50, %s66
      %p68 = scmp.eq.s32.totalorder %s21, 0
      %p69 = por %p67, %p68
      %s70 = ssub.s32 %s15, %s22
      %p71 = scmp.eq.s32.totalorder %s70, 0
      %s73 = sadd.s32 %s72, 1
      %s74 = scalar_select %p71, %s72, %s73
      %p77 = pneg %p71
      %p78 = scmp.eq.s32.totalorder %s15, 1
      %p79 = por %p77, %p78
      %p80 = scmp.ne.s32.totalorder %s72, %s75
      %p81 = scmp.eq.s32.totalorder %s15, 0
      %p82 = por %p80, %p81
      %p83 = scmp.ne.s32.totalorder %s72, %s75
      %p84 = scmp.eq.s32.totalorder %s20, 1
      %p85 = por %p83, %p84
      %p86 = scmp.ne.s32.totalorder %s75, %s76
      %p87 = scmp.eq.s32.totalorder %s20, 0
      %p88 = por %p86, %p87
      %p89 = scmp.ne.s32.totalorder %s75, %s76
      %p90 = scmp.eq.s32.totalorder %s21, 1
      %p91 = por %p89, %p90
      %p93 = scmp.ne.s32.totalorder %s76, %s92
      %p94 = scmp.eq.s32.totalorder %s21, 0
      %p95 = por %p93, %p94
      %p96 = scmp.le.s32.totalorder 1, %s15
      %p97 = scmp.lt.s32.totalorder %s15, 3
      %p98 = pnand %p96, %p97
      %p99 = pneg %p98
      // Predicated region
      $region9: #{tpu_custom_call.1} parent=5 // pred_check
        _
      $region10: #{tpu_custom_call.1} parent=5 // pred_check_branch
        %101 = sbr.rel (%p98) target = $region12
      $region11: #{tpu_custom_call.1} parent=5 // pred_region
        %s102 = ssub.s32 %s15, 1
        // Predicated region
        $region13: #{tpu_custom_call.1} parent=11 // pred_check
          %p103 = pneg %p36
        $region14: #{tpu_custom_call.1} parent=11 // pred_check_branch
          %105 = sbr.rel (%p103) target = $region16
        $region15: #{tpu_custom_call.1} parent=11 // pred_region
          %107 = vsyncadd [#allocation3], 0
          %s109 = sshll.u32 %s0, 4
          %s110 = int_to_ptr.hbm [resolvable:$true] %s109
          %s111 = sshll.u32 [#allocation2], 4
          %s112 = int_to_ptr.vmem [resolvable:$true] %s111
          %114 = dma.hbm_to_vmem [thread:$0]  %s110, 128, %s112, [#allocation3]
        $region16: #{tpu_custom_call.1} parent=11 // pred_fallthru
          _
      $region12: #{tpu_custom_call.1} parent=5 // pred_fallthru
        _
      %p115 = scmp.lt.s32.totalorder %s15, 2
      // Predicated region
      $region17: #{tpu_custom_call.1} parent=5 // pred_check
        %p116 = pneg %p115
      $region18: #{tpu_custom_call.1} parent=5 // pred_check_branch
        %118 = sbr.rel (%p116) target = $region20
      $region19: #{tpu_custom_call.1} parent=5 // pred_region
        // Predicated region
        $region21: #{tpu_custom_call.1} parent=19 // pred_check
          %p119 = pneg %p56
        $region22: #{tpu_custom_call.1} parent=19 // pred_check_branch
          %121 = sbr.rel (%p119) target = $region24
        $region23: #{tpu_custom_call.1} parent=19 // pred_region
          %s122 = sand.u32 %s46, 1
          %s123 = scalar_lea.sflag [#allocation6], %s122
          %s124 = sand.u32 %s46, 1
          %s125 = smul.addr %s124, 8
          %s126 = scalar_lea.vmem [#allocation5], %s125
          %128 = vsyncadd %s123, 0
          %s129 = smul.addr %s15, 8
          %s130 = scalar_lea.hbm %s1, %s129
          %s132 = sshll.u32 %s130, 4
          %s133 = int_to_ptr.hbm [resolvable:$true] %s132
          %s134 = sshll.u32 %s126, 4
          %s135 = int_to_ptr.vmem [resolvable:$true] %s134
          %137 = dma.hbm_to_vmem [thread:$0]  %s133, 128, %s135, %s123
        $region24: #{tpu_custom_call.1} parent=19 // pred_fallthru
          _
      $region20: #{tpu_custom_call.1} parent=5 // pred_fallthru
        _
      %p138 = scmp.le.s32.totalorder 1, %s15
      %p139 = scmp.lt.s32.totalorder %s15, 3
      %p140 = pnand %p138, %p139
      %p141 = pneg %p140
      // Predicated region
      $region25: #{tpu_custom_call.1} parent=5 // pred_check
        _
      $region26: #{tpu_custom_call.1} parent=5 // pred_check_branch
        %143 = sbr.rel (%p140) target = $region28
      $region27: #{tpu_custom_call.1} parent=5 // pred_region
        %s144 = ssub.s32 %s15, 1
        // Predicated region
        $region29: #{tpu_custom_call.1} parent=27 // pred_check
          %p145 = pneg %p36
        $region30: #{tpu_custom_call.1} parent=27 // pred_check_branch
          %147 = sbr.rel (%p145) target = $region32
        $region31: #{tpu_custom_call.1} parent=27 // pred_region
          %149 = dma.done [#allocation3], 128
        $region32: #{tpu_custom_call.1} parent=27 // pred_fallthru
          _
        %s150 = sand.u32 %s49, 1
        %s151 = scalar_lea.sflag [#allocation6], %s150
        %s152 = sand.u32 %s49, 1
        %s153 = smul.addr %s152, 8
        %s154 = scalar_lea.vmem [#allocation5], %s153
        // Predicated region
        $region33: #{tpu_custom_call.1} parent=27 // pred_check
          %p155 = pneg %p62
        $region34: #{tpu_custom_call.1} parent=27 // pred_check_branch
          %157 = sbr.rel (%p155) target = $region36
        $region35: #{tpu_custom_call.1} parent=27 // pred_region
          %159 = dma.done %s151, 128
        $region36: #{tpu_custom_call.1} parent=27 // pred_fallthru
          _
        %p160 = pneg %p36
        %p161 = pneg %p33
        %s162 = sand.u32 %s49, 1
        %s163 = scalar_lea.sflag [#allocation6], %s162
        %s164 = sand.u32 %s49, 1
        %s165 = smul.addr %s164, 8
        %s166 = scalar_lea.vmem [#allocation5], %s165
        %p167 = pneg %p62
        %p168 = pneg %p59
        %p169 = pneg %p88
        %p170 = pneg %p85
        %s171 = sand.u32 %s75, 1
        %s172 = scalar_lea.sflag [#allocation4], %s171
        %s173 = sand.u32 %s75, 1
        %s174 = smul.addr %s173, 8
        %s175 = scalar_lea.vmem [#allocation7], %s174
        %v176 = vld [vmem:[%s154] sm:$0xff]
        %v177 = vld [vmem:[#allocation2] sm:$0xff]
        %v178 = vadd.f32 %v176, %v177
        %179 = vst [vmem:[%s175] sm:$0xff] %v178
        %s180 = sand.u32 %s75, 1
        %s181 = scalar_lea.sflag [#allocation4], %s180
        %s182 = sand.u32 %s75, 1
        %s183 = smul.addr %s182, 8
        %s184 = scalar_lea.vmem [#allocation7], %s183
        // Predicated region
        $region37: #{tpu_custom_call.1} parent=27 // pred_check
          %p185 = pneg %p85
        $region38: #{tpu_custom_call.1} parent=27 // pred_check_branch
          %187 = sbr.rel (%p185) target = $region40
        $region39: #{tpu_custom_call.1} parent=27 // pred_region
          %189 = vsyncadd %s181, 0
          %s190 = smul.addr %s20, 8
          %s191 = scalar_lea.hbm %s2, %s190
          %s193 = sshll.u32 %s184, 4
          %s194 = int_to_ptr.vmem [resolvable:$true] %s193
          %s195 = sshll.u32 %s191, 4
          %s196 = int_to_ptr.hbm [resolvable:$true] %s195
          %198 = dma.vmem_to_hbm [thread:$0]  %s194, 128, %s196, %s181
        $region40: #{tpu_custom_call.1} parent=27 // pred_fallthru
          _
      $region28: #{tpu_custom_call.1} parent=5 // pred_fallthru
        _
      %p199 = scmp.le.s32.totalorder 2, %s15
      // Predicated region
      $region41: #{tpu_custom_call.1} parent=5 // pred_check
        %p200 = pneg %p199
      $region42: #{tpu_custom_call.1} parent=5 // pred_check_branch
        %202 = sbr.rel (%p200) target = $region44
      $region43: #{tpu_custom_call.1} parent=5 // pred_region
        %s203 = ssub.s32 %s15, 2
        // Predicated region
        $region45: #{tpu_custom_call.1} parent=43 // pred_check
          %p204 = pneg %p91
        $region46: #{tpu_custom_call.1} parent=43 // pred_check_branch
          %206 = sbr.rel (%p204) target = $region48
        $region47: #{tpu_custom_call.1} parent=43 // pred_region
          %s207 = sand.u32 %s76, 1
          %s208 = scalar_lea.sflag [#allocation4], %s207
          %s209 = sand.u32 %s76, 1
          %s210 = smul.addr %s209, 8
          %s211 = scalar_lea.vmem [#allocation7], %s210
          %213 = dma.done %s208, 128
        $region48: #{tpu_custom_call.1} parent=43 // pred_fallthru
          _
      $region44: #{tpu_custom_call.1} parent=5 // pred_fallthru
        _
    $region6: #{tpu_custom_call.1} parent=1 // loop_footer
      %s19 = sadd.s32 1, %s15
    $region7: #{tpu_custom_call.1} parent=1 // loop_footer_branch
      %14 = sbr.rel target = $region3
    $region8: #{tpu_custom_call.1} parent=1 // loop_exit
      _
    %214 = vsyncpa [#allocation3], 1
    %s215 = scalar_lea.sflag [#allocation3], 1
    %216 = vsyncpa %s215, 1
    %217 = vsyncpa [#allocation6], 1
    %s218 = scalar_lea.sflag [#allocation6], 1
    %219 = vsyncpa %s218, 1
    %220 = vsyncpa [#allocation4], 1
    %s221 = scalar_lea.sflag [#allocation4], 1
    %222 = vsyncpa %s221, 1

// kernel: forward.5
$region0: #{forward.5}
  #allocation0 [shape = 'u32[]', space=smem, size = 0x4, offset = 0x4, fixed_abs, tag = 'smem constant byte address 0x4 - core index']
  #allocation1 [shape = 'u32[72,128]{1,0:T(1,128)}', space=vmem, size = 0x9000, scoped, tag = 'internal scratch']
  %s0 = inlined_call_operand.vmem [shape: f32[8,8,16], index: 0, kind: input, shape index: {}]
  %s1 = inlined_call_operand.vmem [shape: bf16[16,1024], index: 1, kind: input, shape index: {}]
  %s2 = inlined_call_operand.vmem [shape: f32[1,1024], index: 2, kind: input, shape index: {}]
  %s3 = inlined_call_operand.vmem [shape: f32[8,8,1024], index: 3, kind: output, shape index: {}]
  %s4 = sld [smem:[#allocation0]]
  $region45: #{forward.5} parent=0
    _
  %s6 = ssub.s32 1, %s4
  %s7 = scalar_select 0, %s6, %s4
  loop: start=0, step=1, limit=4
  $region2: #{forward.5} parent=0 // loop_pre_header
    _
  $region3: #{forward.5} parent=0 // loop_header
    %s9 = sphi 0, %s13
    %p10 = scmp.ge.s32.totalorder %s9, 4
    %s19 = sphi 0, %s21
    %s22 = sphi 0, %s19
    %s23 = sphi 0, %s22
    %s39 = sphi 0, %s23
    %s43 = sphi 0, %s43
    %s45 = sphi 0, %s43
    %s46 = sphi 0, %s45
    %s60 = sphi 0, %s46
    %s64 = sphi 0, %s64
    %s66 = sphi 0, %s64
    %s67 = sphi 0, %s66
    %s81 = sphi 0, %s67
    %s87 = sphi 0, %s89
    %s90 = sphi 0, %s87
    %s91 = sphi 0, %s90
    %s107 = sphi 0, %s91
  $region4: #{forward.5} parent=0 // loop_header_branch
    %12 = sbr.rel (%p10) target = $region8
  $region5: #{forward.5} parent=0 // loop_body
    %s14 = ssub.s32 %s9, 1
    %s15 = ssub.s32 %s9, 2
    %s16 = sadd.s32 %s9, 1
    %s17 = ssub.s32 %s9, %s16
    %p18 = scmp.eq.s32.totalorder %s17, 0
    %s20 = sadd.s32 %s19, 1
    %s21 = scalar_select %p18, %s19, %s20
    %p24 = pneg %p18
    %p25 = scmp.eq.s32.totalorder %s9, 1
    %p26 = por %p24, %p25
    %p27 = scmp.ne.s32.totalorder %s19, %s22
    %p28 = scmp.eq.s32.totalorder %s9, 0
    %p29 = por %p27, %p28
    %p30 = scmp.ne.s32.totalorder %s19, %s22
    %p31 = scmp.eq.s32.totalorder %s14, 1
    %p32 = por %p30, %p31
    %p33 = scmp.ne.s32.totalorder %s22, %s23
    %p34 = scmp.eq.s32.totalorder %s14, 0
    %p35 = por %p33, %p34
    %p36 = scmp.ne.s32.totalorder %s22, %s23
    %p37 = scmp.eq.s32.totalorder %s15, 1
    %p38 = por %p36, %p37
    %p40 = scmp.ne.s32.totalorder %s23, %s39
    %p41 = scmp.eq.s32.totalorder %s15, 0
    %p42 = por %p40, %p41
    %s44 = sadd.s32 %s43, 1
    %p47 = scmp.eq.s32.totalorder %s9, 1
    %p48 = scmp.ne.s32.totalorder %s43, %s45
    %p49 = scmp.eq.s32.totalorder %s9, 0
    %p50 = por %p48, %p49
    %p51 = scmp.ne.s32.totalorder %s43, %s45
    %p52 = scmp.eq.s32.totalorder %s14, 1
    %p53 = por %p51, %p52
    %p54 = scmp.ne.s32.totalorder %s45, %s46
    %p55 = scmp.eq.s32.totalorder %s14, 0
    %p56 = por %p54, %p55
    %p57 = scmp.ne.s32.totalorder %s45, %s46
    %p58 = scmp.eq.s32.totalorder %s15, 1
    %p59 = por %p57, %p58
    %p61 = scmp.ne.s32.totalorder %s46, %s60
    %p62 = scmp.eq.s32.totalorder %s15, 0
    %p63 = por %p61, %p62
    %s65 = sadd.s32 %s64, 1
    %p68 = scmp.eq.s32.totalorder %s9, 1
    %p69 = scmp.ne.s32.totalorder %s64, %s66
    %p70 = scmp.eq.s32.totalorder %s9, 0
    %p71 = por %p69, %p70
    %p72 = scmp.ne.s32.totalorder %s64, %s66
    %p73 = scmp.eq.s32.totalorder %s14, 1
    %p74 = por %p72, %p73
    %p75 = scmp.ne.s32.totalorder %s66, %s67
    %p76 = scmp.eq.s32.totalorder %s14, 0
    %p77 = por %p75, %p76
    %p78 = scmp.ne.s32.totalorder %s66, %s67
    %p79 = scmp.eq.s32.totalorder %s15, 1
    %p80 = por %p78, %p79
    %p82 = scmp.ne.s32.totalorder %s67, %s81
    %p83 = scmp.eq.s32.totalorder %s15, 0
    %p84 = por %p82, %p83
    %s85 = ssub.s32 %s9, %s16
    %p86 = scmp.eq.s32.totalorder %s85, 0
    %s88 = sadd.s32 %s87, 1
    %s89 = scalar_select %p86, %s87, %s88
    %p92 = pneg %p86
    %p93 = scmp.eq.s32.totalorder %s9, 1
    %p94 = por %p92, %p93
    %p95 = scmp.ne.s32.totalorder %s87, %s90
    %p96 = scmp.eq.s32.totalorder %s9, 0
    %p97 = por %p95, %p96
    %p98 = scmp.ne.s32.totalorder %s87, %s90
    %p99 = scmp.eq.s32.totalorder %s14, 1
    %p100 = por %p98, %p99
    %p101 = scmp.ne.s32.totalorder %s90, %s91
    %p102 = scmp.eq.s32.totalorder %s14, 0
    %p103 = por %p101, %p102
    %p104 = scmp.ne.s32.totalorder %s90, %s91
    %p105 = scmp.eq.s32.totalorder %s15, 1
    %p106 = por %p104, %p105
    %p108 = scmp.ne.s32.totalorder %s91, %s107
    %p109 = scmp.eq.s32.totalorder %s15, 0
    %p110 = por %p108, %p109
    %p111 = scmp.le.s32.totalorder 1, %s9
    %p112 = scmp.lt.s32.totalorder %s9, 3
    %p113 = pnand %p111, %p112
    %p114 = pneg %p113
    // Predicated region
    $region9: #{forward.5} parent=5 // pred_check
      _
    $region10: #{forward.5} parent=5 // pred_check_branch
      %116 = sbr.rel (%p113) target = $region12
    $region11: #{forward.5} parent=5 // pred_region
      %s117 = ssub.s32 %s9, 1
      // Predicated region
      $region13: #{forward.5} parent=11 // pred_check
        %p118 = pneg %p56
      $region14: #{forward.5} parent=11 // pred_check_branch
        %120 = sbr.rel (%p118) target = $region16
      $region15: #{forward.5} parent=11 // pred_region
        _
      $region16: #{forward.5} parent=11 // pred_fallthru
        _
      // Predicated region
      $region17: #{forward.5} parent=11 // pred_check
        %p121 = pneg %p77
      $region18: #{forward.5} parent=11 // pred_check_branch
        %123 = sbr.rel (%p121) target = $region20
      $region19: #{forward.5} parent=11 // pred_region
        _
      $region20: #{forward.5} parent=11 // pred_fallthru
        _
    $region12: #{forward.5} parent=5 // pred_fallthru
      _
    %p124 = scmp.lt.s32.totalorder %s9, 2
    // Predicated region
    $region21: #{forward.5} parent=5 // pred_check
      %p125 = pneg %p124
    $region22: #{forward.5} parent=5 // pred_check_branch
      %127 = sbr.rel (%p125) target = $region24
    $region23: #{forward.5} parent=5 // pred_region
      // Predicated region
      $region25: #{forward.5} parent=23 // pred_check
        %p128 = pneg %p29
      $region26: #{forward.5} parent=23 // pred_check_branch
        %130 = sbr.rel (%p128) target = $region28
      $region27: #{forward.5} parent=23 // pred_region
        %s131 = smul.u32 4, %s9
        %p132 = scmp.lt.s32.totalorder %s131, 7
        %s133 = scalar_select %p132, %s131, 7
        %s134 = smul.addr %s133, 8
        %s135 = scalar_lea.vmem %s0, %s134
        %s136 = smul.u32 4, %s9
      $region28: #{forward.5} parent=23 // pred_fallthru
        _
    $region24: #{forward.5} parent=5 // pred_fallthru
      _
    %p137 = scmp.le.s32.totalorder 1, %s9
    %p138 = scmp.lt.s32.totalorder %s9, 3
    %p139 = pnand %p137, %p138
    %p140 = pneg %p139
    // Predicated region
    $region29: #{forward.5} parent=5 // pred_check
      _
    $region30: #{forward.5} parent=5 // pred_check_branch
      %142 = sbr.rel (%p139) target = $region32
    $region31: #{forward.5} parent=5 // pred_region
      %s143 = ssub.s32 %s9, 1
      %s144 = smul.u32 4, %s14
      %p145 = scmp.lt.s32.totalorder %s144, 7
      %s146 = scalar_select %p145, %s144, 7
      %s147 = smul.addr %s146, 8
      %s148 = scalar_lea.vmem %s0, %s147
      %p149 = pneg %p35
      %p150 = pneg %p32
      %p151 = pneg %p56
      %p152 = pneg %p53
      %p153 = pneg %p77
      %p154 = pneg %p74
      %p155 = pneg %p103
      %p156 = pneg %p100
      %s157 = smul.u32 4, %s14
      %p158 = scmp.lt.s32.totalorder %s157, 7
      %s159 = scalar_select %p158, %s157, 7
      %s160 = smul.addr %s159, 8
      %s161 = smul.addr %s160, 8
      %s162 = scalar_lea.vmem %s3, %s161
      %s163 = smul.u32 4, %s14
      %p164 = scmp.lt.s32.totalorder %s163, 7
      %s165 = scalar_select %p164, %s163, 7
      %s166 = smul.addr %s165, 8
      %s167 = scalar_lea.vmem %s0, %s166
      %s168 = smul.u32 4, %s14
      %s169 = smul.u32 4, %s14
      %p170 = scmp.lt.s32.totalorder %s169, 7
      %s171 = scalar_select %p170, %s169, 7
      %s172 = smul.addr %s171, 8
      %s173 = smul.addr %s172, 8
      %s174 = scalar_lea.vmem %s3, %s173
      %s175 = smul.u32 4, %s14
      %v177 = vld [vmem:[%s167] sm:$0xff]
      %v178 = vld [vmem:[%s167 + $0x8] sm:$0xff]
      %v179 = vld [vmem:[%s167 + $0x10] sm:$0xff]
      %v180 = vld [vmem:[%s167 + $0x18] sm:$0xff]
      %v181 = vpack.c.bf16 %v178, %v177
      %v182 = vpack.c.bf16 %v180, %v179
      %v183 = vld [vmem:[%s1] sm:$0xff]
      %v184 = vld [vmem:[%s1 + $0x8] sm:$0xff]
      %v185 = vld [vmem:[%s1 + $0x10] sm:$0xff]
      %v186 = vld [vmem:[%s1 + $0x18] sm:$0xff]
      %v187 = vld [vmem:[%s1 + $0x20] sm:$0xff]
      %v188 = vld [vmem:[%s1 + $0x28] sm:$0xff]
      %v189 = vld [vmem:[%s1 + $0x30] sm:$0xff]
      %v190 = vld [vmem:[%s1 + $0x38] sm:$0xff]
      %v191 = vld [vmem:[%s2] sm:$0xff]
      %v193 = vperm.slane %v191, 0
      %v194 = vperm.slane %v191, 1
      %v195 = vperm.slane %v191, 2
      %v196 = vperm.slane %v191, 3
      %v197 = vperm.slane %v191, 4
      %v198 = vperm.slane %v191, 5
      %v199 = vperm.slane %v191, 6
      %v200 = vperm.slane %v191, 7
      %v217 = vunpack.c.l.b16 %v183
      %v218 = vunpack.c.h.b16 %v183
      %v219 = vunpack.c.l.b16 %v184
      %v220 = vunpack.c.h.b16 %v184
      %v221 = vunpack.c.l.b16 %v185
      %v222 = vunpack.c.h.b16 %v185
      %v223 = vunpack.c.l.b16 %v186
      %v224 = vunpack.c.h.b16 %v186
      %v225 = vunpack.c.l.b16 %v187
      %v226 = vunpack.c.h.b16 %v187
      %v227 = vunpack.c.l.b16 %v188
      %v228 = vunpack.c.h.b16 %v188
      %v229 = vunpack.c.l.b16 %v189
      %v230 = vunpack.c.h.b16 %v189
      %v231 = vunpack.c.l.b16 %v190
      %v232 = vunpack.c.h.b16 %v190
      %v233 = vpack.c.b16 %v225, %v217
      %v234 = vpack.c.b16 %v226, %v218
      %v235 = vpack.c.b16 %v227, %v219
      %v236 = vpack.c.b16 %v228, %v220
      %v237 = vpack.c.b16 %v229, %v221
      %v238 = vpack.c.b16 %v230, %v222
      %v239 = vpack.c.b16 %v231, %v223
      %v240 = vpack.c.b16 %v232, %v224
      %vm249 = vcmask 130048
      %v251 = vsel %vm249, %v181, 0
      %v254 = vsel %vm249, %v182, 0
      %256 = vmatpush.bf16.msra.mxu0 0
      %257 = vmatpush.bf16.msra.mxu0 0
      %258 = vmatpush.bf16.msra.mxu0 0
      %259 = vmatpush.bf16.msra.mxu0 0
      %260 = vmatpush.bf16.msra.mxu0 0
      %261 = vmatpush.bf16.msra.mxu0 0
      %262 = vmatpush.bf16.msra.mxu0 0
      %263 = vmatpush.bf16.msra.mxu0 %v233
      %264 = vmatmul.bf16.gmra.mxu0 %v251
      %v265 = vpop.f32.mrf.mxu0
      %v266 = vadd.f32 %v193, %v265
      %v267 = vpop.f32.mrf.mxu0
      %v268 = vadd.f32 %v193, %v267
      %269 = vmatmul.bf16.gmra.mxu0 %v254
      %v270 = vpop.f32.mrf.mxu0
      %v271 = vadd.f32 %v193, %v270
      %v272 = vpop.f32.mrf.mxu0
      %v273 = vadd.f32 %v193, %v272
      %274 = vdwg.mxu0
      %275 = vmatpush.bf16.msra.mxu0 0
      %276 = vmatpush.bf16.msra.mxu0 0
      %277 = vmatpush.bf16.msra.mxu0 0
      %278 = vmatpush.bf16.msra.mxu0 0
      %279 = vmatpush.bf16.msra.mxu0 0
      %280 = vmatpush.bf16.msra.mxu0 0
      %281 = vmatpush.bf16.msra.mxu0 0
      %282 = vmatpush.bf16.msra.mxu0 %v234
      %283 = vmatmul.bf16.gmra.mxu0 %v251
      %v284 = vpop.f32.mrf.mxu0
      %v285 = vadd.f32 %v194, %v284
      %v286 = vpop.f32.mrf.mxu0
      %v287 = vadd.f32 %v194, %v286
      %288 = vmatmul.bf16.gmra.mxu0 %v254
      %v289 = vpop.f32.mrf.mxu0
      %v290 = vadd.f32 %v194, %v289
      %v291 = vpop.f32.mrf.mxu0
      %v292 = vadd.f32 %v194, %v291
      %293 = vdwg.mxu0
      %294 = vmatpush.bf16.msra.mxu0 0
      %295 = vmatpush.bf16.msra.mxu0 0
      %296 = vmatpush.bf16.msra.mxu0 0
      %297 = vmatpush.bf16.msra.mxu0 0
      %298 = vmatpush.bf16.msra.mxu0 0
      %299 = vmatpush.bf16.msra.mxu0 0
      %300 = vmatpush.bf16.msra.mxu0 0
      %301 = vmatpush.bf16.msra.mxu0 %v235
      %302 = vmatmul.bf16.gmra.mxu0 %v251
      %v303 = vpop.f32.mrf.mxu0
      %v304 = vadd.f32 %v195, %v303
      %v305 = vpop.f32.mrf.mxu0
      %v306 = vadd.f32 %v195, %v305
      %307 = vmatmul.bf16.gmra.mxu0 %v254
      %v308 = vpop.f32.mrf.mxu0
      %v309 = vadd.f32 %v195, %v308
      %v310 = vpop.f32.mrf.mxu0
      %v311 = vadd.f32 %v195, %v310
      %312 = vdwg.mxu0
      %313 = vmatpush.bf16.msra.mxu0 0
      %314 = vmatpush.bf16.msra.mxu0 0
      %315 = vmatpush.bf16.msra.mxu0 0
      %316 = vmatpush.bf16.msra.mxu0 0
      %317 = vmatpush.bf16.msra.mxu0 0
      %318 = vmatpush.bf16.msra.mxu0 0
      %319 = vmatpush.bf16.msra.mxu0 0
      %320 = vmatpush.bf16.msra.mxu0 %v236
      %321 = vmatmul.bf16.gmra.mxu0 %v251
      %v322 = vpop.f32.mrf.mxu0
      %v323 = vadd.f32 %v196, %v322
      %v324 = vpop.f32.mrf.mxu0
      %v325 = vadd.f32 %v196, %v324
      %326 = vmatmul.bf16.gmra.mxu0 %v254
      %v327 = vpop.f32.mrf.mxu0
      %v328 = vadd.f32 %v196, %v327
      %v329 = vpop.f32.mrf.mxu0
      %v330 = vadd.f32 %v196, %v329
      %331 = vdwg.mxu0
      %332 = vmatpush.bf16.msra.mxu0 0
      %333 = vmatpush.bf16.msra.mxu0 0
      %334 = vmatpush.bf16.msra.mxu0 0
      %335 = vmatpush.bf16.msra.mxu0 0
      %336 = vmatpush.bf16.msra.mxu0 0
      %337 = vmatpush.bf16.msra.mxu0 0
      %338 = vmatpush.bf16.msra.mxu0 0
      %339 = vmatpush.bf16.msra.mxu0 %v237
      %340 = vmatmul.bf16.gmra.mxu0 %v251
      %v341 = vpop.f32.mrf.mxu0
      %v342 = vadd.f32 %v197, %v341
      %v343 = vpop.f32.mrf.mxu0
      %v344 = vadd.f32 %v197, %v343
      %345 = vmatmul.bf16.gmra.mxu0 %v254
      %v346 = vpop.f32.mrf.mxu0
      %v347 = vadd.f32 %v197, %v346
      %v348 = vpop.f32.mrf.mxu0
      %v349 = vadd.f32 %v197, %v348
      %350 = vdwg.mxu0
      %351 = vmatpush.bf16.msra.mxu0 0
      %352 = vmatpush.bf16.msra.mxu0 0
      %353 = vmatpush.bf16.msra.mxu0 0
      %354 = vmatpush.bf16.msra.mxu0 0
      %355 = vmatpush.bf16.msra.mxu0 0
      %356 = vmatpush.bf16.msra.mxu0 0
      %357 = vmatpush.bf16.msra.mxu0 0
      %358 = vmatpush.bf16.msra.mxu0 %v238
      %359 = vmatmul.bf16.gmra.mxu0 %v251
      %v360 = vpop.f32.mrf.mxu0
      %v361 = vadd.f32 %v198, %v360
      %v362 = vpop.f32.mrf.mxu0
      %v363 = vadd.f32 %v198, %v362
      %364 = vmatmul.bf16.gmra.mxu0 %v254
      %v365 = vpop.f32.mrf.mxu0
      %v366 = vadd.f32 %v198, %v365
      %v367 = vpop.f32.mrf.mxu0
      %v368 = vadd.f32 %v198, %v367
      %369 = vdwg.mxu0
      %370 = vmatpush.bf16.msra.mxu0 0
      %371 = vmatpush.bf16.msra.mxu0 0
      %372 = vmatpush.bf16.msra.mxu0 0
      %373 = vmatpush.bf16.msra.mxu0 0
      %374 = vmatpush.bf16.msra.mxu0 0
      %375 = vmatpush.bf16.msra.mxu0 0
      %376 = vmatpush.bf16.msra.mxu0 0
      %377 = vmatpush.bf16.msra.mxu0 %v239
      %378 = vmatmul.bf16.gmra.mxu0 %v251
      %v379 = vpop.f32.mrf.mxu0
      %v380 = vadd.f32 %v199, %v379
      %v381 = vpop.f32.mrf.mxu0
      %v382 = vadd.f32 %v199, %v381
      %383 = vmatmul.bf16.gmra.mxu0 %v254
      %v384 = vpop.f32.mrf.mxu0
      %v385 = vadd.f32 %v199, %v384
      %v386 = vpop.f32.mrf.mxu0
      %v387 = vadd.f32 %v199, %v386
      %388 = vdwg.mxu0
      %389 = vmatpush.bf16.msra.mxu0 0
      %390 = vmatpush.bf16.msra.mxu0 0
      %391 = vmatpush.bf16.msra.mxu0 0
      %392 = vmatpush.bf16.msra.mxu0 0
      %393 = vmatpush.bf16.msra.mxu0 0
      %394 = vmatpush.bf16.msra.mxu0 0
      %395 = vmatpush.bf16.msra.mxu0 0
      %396 = vmatpush.bf16.msra.mxu0 %v240
      %397 = vmatmul.bf16.gmra.mxu0 %v251
      %v398 = vpop.f32.mrf.mxu0
      %v399 = vadd.f32 %v200, %v398
      %v400 = vpop.f32.mrf.mxu0
      %v401 = vadd.f32 %v200, %v400
      %402 = vmatmul.bf16.gmra.mxu0 %v254
      %v403 = vpop.f32.mrf.mxu0
      %v404 = vadd.f32 %v200, %v403
      %v405 = vpop.f32.mrf.mxu0
      %v406 = vadd.f32 %v200, %v405
      %407 = vdwg.mxu0
      %408 = vst [vmem:[%s174] sm:$0xff] %v266
      %409 = vst [vmem:[%s174 + $0x8] sm:$0xff] %v285
      %410 = vst [vmem:[%s174 + $0x10] sm:$0xff] %v304
      %411 = vst [vmem:[%s174 + $0x18] sm:$0xff] %v323
      %412 = vst [vmem:[%s174 + $0x20] sm:$0xff] %v342
      %413 = vst [vmem:[%s174 + $0x28] sm:$0xff] %v361
      %414 = vst [vmem:[%s174 + $0x30] sm:$0xff] %v380
      %415 = vst [vmem:[%s174 + $0x38] sm:$0xff] %v399
      %416 = vst [vmem:[%s174 + $0x40] sm:$0xff] %v268
      %417 = vst [vmem:[%s174 + $0x48] sm:$0xff] %v287
      %418 = vst [vmem:[%s174 + $0x50] sm:$0xff] %v306
      %419 = vst [vmem:[%s174 + $0x58] sm:$0xff] %v325
      %420 = vst [vmem:[%s174 + $0x60] sm:$0xff] %v344
      %421 = vst [vmem:[%s174 + $0x68] sm:$0xff] %v363
      %422 = vst [vmem:[%s174 + $0x70] sm:$0xff] %v382
      %423 = vst [vmem:[%s174 + $0x78] sm:$0xff] %v401
      %424 = vst [vmem:[%s174 + $0x80] sm:$0xff] %v271
      %425 = vst [vmem:[%s174 + $0x88] sm:$0xff] %v290
      %426 = vst [vmem:[%s174 + $0x90] sm:$0xff] %v309
      %427 = vst [vmem:[%s174 + $0x98] sm:$0xff] %v328
      %428 = vst [vmem:[%s174 + $0xa0] sm:$0xff] %v347
      %429 = vst [vmem:[%s174 + $0xa8] sm:$0xff] %v366
      %430 = vst [vmem:[%s174 + $0xb0] sm:$0xff] %v385
      %431 = vst [vmem:[%s174 + $0xb8] sm:$0xff] %v404
      %432 = vst [vmem:[%s174 + $0xc0] sm:$0xff] %v273
      %433 = vst [vmem:[%s174 + $0xc8] sm:$0xff] %v292
      %434 = vst [vmem:[%s174 + $0xd0] sm:$0xff] %v311
      %435 = vst [vmem:[%s174 + $0xd8] sm:$0xff] %v330
      %436 = vst [vmem:[%s174 + $0xe0] sm:$0xff] %v349
      %437 = vst [vmem:[%s174 + $0xe8] sm:$0xff] %v368
      %438 = vst [vmem:[%s174 + $0xf0] sm:$0xff] %v387
      %439 = vst [vmem:[%s174 + $0xf8] sm:$0xff] %v406
      %s440 = smul.u32 4, %s14
      %p441 = scmp.lt.s32.totalorder %s440, 7
      %s442 = scalar_select %p441, %s440, 7
      %s443 = smul.addr %s442, 8
      %s444 = smul.addr %s443, 8
      %s445 = scalar_lea.vmem %s3, %s444
      // Predicated region
      $region33: #{forward.5} parent=31 // pred_check
        %p446 = pneg %p100
      $region34: #{forward.5} parent=31 // pred_check_branch
        %448 = sbr.rel (%p446) target = $region36
      $region35: #{forward.5} parent=31 // pred_region
        %s449 = smul.u32 4, %s14
      $region36: #{forward.5} parent=31 // pred_fallthru
        _
    $region32: #{forward.5} parent=5 // pred_fallthru
      _
    %p450 = scmp.le.s32.totalorder 2, %s9
    // Predicated region
    $region37: #{forward.5} parent=5 // pred_check
      %p451 = pneg %p450
    $region38: #{forward.5} parent=5 // pred_check_branch
      %453 = sbr.rel (%p451) target = $region40
    $region39: #{forward.5} parent=5 // pred_region
      %s454 = ssub.s32 %s9, 2
      // Predicated region
      $region41: #{forward.5} parent=39 // pred_check
        %p455 = pneg %p106
      $region42: #{forward.5} parent=39 // pred_check_branch
        %457 = sbr.rel (%p455) target = $region44
      $region43: #{forward.5} parent=39 // pred_region
        %s458 = smul.u32 4, %s15
        %p459 = scmp.lt.s32.totalorder %s458, 7
        %s460 = scalar_select %p459, %s458, 7
        %s461 = smul.addr %s460, 8
        %s462 = smul.addr %s461, 8
        %s463 = scalar_lea.vmem %s3, %s462
      $region44: #{forward.5} parent=39 // pred_fallthru
        _
    $region40: #{forward.5} parent=5 // pred_fallthru
      _
  $region6: #{forward.5} parent=0 // loop_footer
    %s13 = sadd.s32 1, %s9
  $region7: #{forward.5} parent=0 // loop_footer_branch
    %8 = sbr.rel target = $region3
  $region8: #{forward.5} parent=0 // loop_exit
    _

// kernel: forward.9
$region0: #{forward.9}
  #allocation0 [shape = 'u32[]', space=smem, size = 0x4, offset = 0x4, fixed_abs, tag = 'smem constant byte address 0x4 - core index']
  #allocation1 [shape = 'u32[72,128]{1,0:T(1,128)}', space=vmem, size = 0x9000, scoped, tag = 'internal scratch']
  %s0 = inlined_call_operand.vmem [shape: f32[8,128], index: 0, kind: input, shape index: {}]
  %s1 = inlined_call_operand.vmem [shape: f32[8,128], index: 1, kind: input, shape index: {}]
  %s2 = inlined_call_operand.vmem [shape: bf16[128,128], index: 2, kind: input, shape index: {}]
  %s3 = inlined_call_operand.vmem [shape: bf16[128,128], index: 3, kind: input, shape index: {}]
  %s4 = inlined_call_operand.vmem [shape: f32[1,128], index: 4, kind: input, shape index: {}]
  %s5 = inlined_call_operand.vmem [shape: f32[8,128], index: 5, kind: output, shape index: {}]
  %s6 = sld [smem:[#allocation0]]
  $region30: #{forward.9} parent=0
    _
  %s8 = ssub.s32 1, %s6
  %s9 = scalar_select 0, %s8, %s6
  // Predicated region
  $region2: #{forward.9} parent=0 // pred_check
    _
  $region3: #{forward.9} parent=0 // pred_check_branch
    %11 = sbr.rel (0) target = $region5
  $region4: #{forward.9} parent=0 // pred_region
    _
  $region5: #{forward.9} parent=0 // pred_fallthru
    _
  // Predicated region
  $region6: #{forward.9} parent=0 // pred_check
    _
  $region7: #{forward.9} parent=0 // pred_check_branch
    %13 = sbr.rel (0) target = $region9
  $region8: #{forward.9} parent=0 // pred_region
    _
  $region9: #{forward.9} parent=0 // pred_fallthru
    _
  // Predicated region
  $region10: #{forward.9} parent=0 // pred_check
    _
  $region11: #{forward.9} parent=0 // pred_check_branch
    %15 = sbr.rel (0) target = $region13
  $region12: #{forward.9} parent=0 // pred_region
    _
  $region13: #{forward.9} parent=0 // pred_fallthru
    _
  // Predicated region
  $region14: #{forward.9} parent=0 // pred_check
    _
  $region15: #{forward.9} parent=0 // pred_check_branch
    %17 = sbr.rel (0) target = $region17
  $region16: #{forward.9} parent=0 // pred_region
    _
  $region17: #{forward.9} parent=0 // pred_fallthru
    _
  // Predicated region
  $region18: #{forward.9} parent=0 // pred_check
    _
  $region19: #{forward.9} parent=0 // pred_check_branch
    %19 = sbr.rel (0) target = $region21
  $region20: #{forward.9} parent=0 // pred_region
    _
  $region21: #{forward.9} parent=0 // pred_fallthru
    _
  %v20 = vld [vmem:[%s0] sm:$0xff]
  %v21 = vpack.c.bf16 %v20, %v20
  %v22 = vld [vmem:[%s2] sm:$0xf]
  %v23 = vld [vmem:[%s2 + $0x4] sm:$0xf]
  %v24 = vld [vmem:[%s2 + $0x8] sm:$0xf]
  %v25 = vld [vmem:[%s2 + $0xc] sm:$0xf]
  %v26 = vld [vmem:[%s2 + $0x10] sm:$0xf]
  %v27 = vld [vmem:[%s2 + $0x14] sm:$0xf]
  %v28 = vld [vmem:[%s2 + $0x18] sm:$0xf]
  %v29 = vld [vmem:[%s2 + $0x1c] sm:$0xf]
  %v30 = vld [vmem:[%s2 + $0x20] sm:$0xf]
  %v31 = vld [vmem:[%s2 + $0x24] sm:$0xf]
  %v32 = vld [vmem:[%s2 + $0x28] sm:$0xf]
  %v33 = vld [vmem:[%s2 + $0x2c] sm:$0xf]
  %v34 = vld [vmem:[%s2 + $0x30] sm:$0xf]
  %v35 = vld [vmem:[%s2 + $0x34] sm:$0xf]
  %v36 = vld [vmem:[%s2 + $0x38] sm:$0xf]
  %v37 = vld [vmem:[%s2 + $0x3c] sm:$0xf]
  %v38 = vld [vmem:[%s1] sm:$0xff]
  %v39 = vpack.c.bf16 %v38, %v38
  %v40 = vld [vmem:[%s3] sm:$0xf]
  %v41 = vld [vmem:[%s3 + $0x4] sm:$0xf]
  %v42 = vld [vmem:[%s3 + $0x8] sm:$0xf]
  %v43 = vld [vmem:[%s3 + $0xc] sm:$0xf]
  %v44 = vld [vmem:[%s3 + $0x10] sm:$0xf]
  %v45 = vld [vmem:[%s3 + $0x14] sm:$0xf]
  %v46 = vld [vmem:[%s3 + $0x18] sm:$0xf]
  %v47 = vld [vmem:[%s3 + $0x1c] sm:$0xf]
  %v48 = vld [vmem:[%s3 + $0x20] sm:$0xf]
  %v49 = vld [vmem:[%s3 + $0x24] sm:$0xf]
  %v50 = vld [vmem:[%s3 + $0x28] sm:$0xf]
  %v51 = vld [vmem:[%s3 + $0x2c] sm:$0xf]
  %v52 = vld [vmem:[%s3 + $0x30] sm:$0xf]
  %v53 = vld [vmem:[%s3 + $0x34] sm:$0xf]
  %v54 = vld [vmem:[%s3 + $0x38] sm:$0xf]
  %v55 = vld [vmem:[%s3 + $0x3c] sm:$0xf]
  %v72 = vunpack.c.l.b16 %v40
  %v73 = vunpack.c.l.b16 %v41
  %v74 = vunpack.c.l.b16 %v42
  %v75 = vunpack.c.l.b16 %v43
  %v76 = vunpack.c.l.b16 %v44
  %v77 = vunpack.c.l.b16 %v45
  %v78 = vunpack.c.l.b16 %v46
  %v79 = vunpack.c.l.b16 %v47
  %v80 = vunpack.c.l.b16 %v48
  %v81 = vunpack.c.l.b16 %v49
  %v82 = vunpack.c.l.b16 %v50
  %v83 = vunpack.c.l.b16 %v51
  %v84 = vunpack.c.l.b16 %v52
  %v85 = vunpack.c.l.b16 %v53
  %v86 = vunpack.c.l.b16 %v54
  %v87 = vunpack.c.l.b16 %v55
  %v88 = vpack.c.b16 %v73, %v72
  %v89 = vpack.c.b16 %v75, %v74
  %v90 = vpack.c.b16 %v77, %v76
  %v91 = vpack.c.b16 %v79, %v78
  %v92 = vpack.c.b16 %v81, %v80
  %v93 = vpack.c.b16 %v83, %v82
  %v94 = vpack.c.b16 %v85, %v84
  %v95 = vpack.c.b16 %v87, %v86
  %104 = vmatpush.bf16.msra.mxu0 %v95
  %105 = vmatpush.bf16.msra.mxu0 %v94
  %106 = vmatpush.bf16.msra.mxu0 %v93
  %107 = vmatpush.bf16.msra.mxu0 %v92
  %108 = vmatpush.bf16.msra.mxu0 %v91
  %109 = vmatpush.bf16.msra.mxu0 %v90
  %110 = vmatpush.bf16.msra.mxu0 %v89
  %111 = vmatpush.bf16.msra.mxu0 %v88
  %112 = vmatmul.bf16.gmra.mxu0 %v39
  %v113 = vpop.f32.mrf.mxu0
  %v114 = vadd.f32 0.0, %v113
  %v115 = vpop.f32.mrf.mxu0
  %116 = vdwg.mxu0
  %v133 = vunpack.c.l.b16 %v22
  %v134 = vunpack.c.l.b16 %v23
  %v135 = vunpack.c.l.b16 %v24
  %v136 = vunpack.c.l.b16 %v25
  %v137 = vunpack.c.l.b16 %v26
  %v138 = vunpack.c.l.b16 %v27
  %v139 = vunpack.c.l.b16 %v28
  %v140 = vunpack.c.l.b16 %v29
  %v141 = vunpack.c.l.b16 %v30
  %v142 = vunpack.c.l.b16 %v31
  %v143 = vunpack.c.l.b16 %v32
  %v144 = vunpack.c.l.b16 %v33
  %v145 = vunpack.c.l.b16 %v34
  %v146 = vunpack.c.l.b16 %v35
  %v147 = vunpack.c.l.b16 %v36
  %v148 = vunpack.c.l.b16 %v37
  %v149 = vpack.c.b16 %v134, %v133
  %v150 = vpack.c.b16 %v136, %v135
  %v151 = vpack.c.b16 %v138, %v137
  %v152 = vpack.c.b16 %v140, %v139
  %v153 = vpack.c.b16 %v142, %v141
  %v154 = vpack.c.b16 %v144, %v143
  %v155 = vpack.c.b16 %v146, %v145
  %v156 = vpack.c.b16 %v148, %v147
  %165 = vmatpush.bf16.msra.mxu0 %v156
  %166 = vmatpush.bf16.msra.mxu0 %v155
  %167 = vmatpush.bf16.msra.mxu0 %v154
  %168 = vmatpush.bf16.msra.mxu0 %v153
  %169 = vmatpush.bf16.msra.mxu0 %v152
  %170 = vmatpush.bf16.msra.mxu0 %v151
  %171 = vmatpush.bf16.msra.mxu0 %v150
  %172 = vmatpush.bf16.msra.mxu0 %v149
  %173 = vmatmul.bf16.gmra.mxu0 %v21
  %v174 = vpop.f32.mrf.mxu0
  %v175 = vadd.f32 %v114, %v174
  %v176 = vpop.f32.mrf.mxu0
  %177 = vdwg.mxu0
  %v178 = vld [vmem:[%s4] sm:$0x1]
  %v180 = vperm.slane %v178, 0
  %v182 = vadd.f32 %v175, %v180
  %183 = vst [vmem:[%s5] sm:$0xff] %v182
  // Predicated region
  $region22: #{forward.9} parent=0 // pred_check
    _
  $region23: #{forward.9} parent=0 // pred_check_branch
    %185 = sbr.rel (0) target = $region25
  $region24: #{forward.9} parent=0 // pred_region
    _
  $region25: #{forward.9} parent=0 // pred_fallthru
    _
  // Predicated region
  $region26: #{forward.9} parent=0 // pred_check
    _
  $region27: #{forward.9} parent=0 // pred_check_branch
    %187 = sbr.rel (0) target = $region29
  $region28: #{forward.9} parent=0 // pred_region
    _
  $region29: #{forward.9} parent=0 // pred_fallthru
    _

// kernel: forward.7
$region0: #{forward.7}
  #allocation0 [shape = 'u32[]', space=smem, size = 0x4, offset = 0x4, fixed_abs, tag = 'smem constant byte address 0x4 - core index']
  #allocation1 [shape = 'u32[72,128]{1,0:T(1,128)}', space=vmem, size = 0x9000, scoped, tag = 'internal scratch']
  %s0 = inlined_call_operand.vmem [shape: f32[8,8,128], index: 0, kind: input, shape index: {}]
  %s1 = inlined_call_operand.vmem [shape: f32[8,8,128], index: 1, kind: input, shape index: {}]
  %s2 = inlined_call_operand.hbm [shape: bf16[128,1024], index: 2, kind: input, shape index: {}]
  %s3 = inlined_call_operand.hbm [shape: bf16[128,1024], index: 3, kind: input, shape index: {}]
  %s4 = inlined_call_operand.vmem [shape: f32[1,1024], index: 4, kind: input, shape index: {}]
  %s5 = inlined_call_operand.vmem [shape: f32[8,8,1024], index: 5, kind: output, shape index: {}]
  %s6 = sld [smem:[#allocation0]]
  $region61: #{forward.7} parent=0
    _
  %s8 = ssub.s32 1, %s6
  %s9 = scalar_select 0, %s8, %s6
  $region1: #{forward.7} parent=0
    #allocation2 [shape = 'u8[262144]{0}', space=vmem, size = 0x40000, scoped, tag = 'input window, operand 2, single buffered']
    #allocation3 [shape = 's32[2]{0}', space=sflag, size = 0x8, scoped, tag = 'scoped memory for forward.7']
    #allocation4 [shape = 'u8[262144]{0}', space=vmem, size = 0x40000, scoped, tag = 'input window, operand 3, single buffered']
    #allocation5 [shape = 's32[1]{0}', space=sflag, size = 0x4, scoped, tag = 'scoped memory for forward.7']
    %10 = vsyncpa [#allocation3], 0
    %11 = vsyncpa [#allocation5], 0
    loop: start=0, step=1, limit=4
    $region2: #{forward.7} parent=1 // loop_pre_header
      _
    $region3: #{forward.7} parent=1 // loop_header
      %s13 = sphi 0, %s17
      %p14 = scmp.ge.s32.totalorder %s13, 4
      %s23 = sphi 0, %s25
      %s26 = sphi 0, %s23
      %s27 = sphi 0, %s26
      %s43 = sphi 0, %s27
      %s49 = sphi 0, %s51
      %s52 = sphi 0, %s49
      %s53 = sphi 0, %s52
      %s69 = sphi 0, %s53
      %s73 = sphi 0, %s73
      %s75 = sphi 0, %s73
      %s76 = sphi 0, %s75
      %s90 = sphi 0, %s76
      %s94 = sphi 0, %s94
      %s96 = sphi 0, %s94
      %s97 = sphi 0, %s96
      %s111 = sphi 0, %s97
      %s115 = sphi 0, %s115
      %s117 = sphi 0, %s115
      %s118 = sphi 0, %s117
      %s132 = sphi 0, %s118
      %s138 = sphi 0, %s140
      %s141 = sphi 0, %s138
      %s142 = sphi 0, %s141
      %s158 = sphi 0, %s142
    $region4: #{forward.7} parent=1 // loop_header_branch
      %16 = sbr.rel (%p14) target = $region8
    $region5: #{forward.7} parent=1 // loop_body
      %s18 = ssub.s32 %s13, 1
      %s19 = ssub.s32 %s13, 2
      %s20 = sadd.s32 %s13, 1
      %s21 = ssub.s32 %s13, %s20
      %p22 = scmp.eq.s32.totalorder %s21, 0
      %s24 = sadd.s32 %s23, 1
      %s25 = scalar_select %p22, %s23, %s24
      %p28 = pneg %p22
      %p29 = scmp.eq.s32.totalorder %s13, 1
      %p30 = por %p28, %p29
      %p31 = scmp.ne.s32.totalorder %s23, %s26
      %p32 = scmp.eq.s32.totalorder %s13, 0
      %p33 = por %p31, %p32
      %p34 = scmp.ne.s32.totalorder %s23, %s26
      %p35 = scmp.eq.s32.totalorder %s18, 1
      %p36 = por %p34, %p35
      %p37 = scmp.ne.s32.totalorder %s26, %s27
      %p38 = scmp.eq.s32.totalorder %s18, 0
      %p39 = por %p37, %p38
      %p40 = scmp.ne.s32.totalorder %s26, %s27
      %p41 = scmp.eq.s32.totalorder %s19, 1
      %p42 = por %p40, %p41
      %p44 = scmp.ne.s32.totalorder %s27, %s43
      %p45 = scmp.eq.s32.totalorder %s19, 0
      %p46 = por %p44, %p45
      %s47 = ssub.s32 %s13, %s20
      %p48 = scmp.eq.s32.totalorder %s47, 0
      %s50 = sadd.s32 %s49, 1
      %s51 = scalar_select %p48, %s49, %s50
      %p54 = pneg %p48
      %p55 = scmp.eq.s32.totalorder %s13, 1
      %p56 = por %p54, %p55
      %p57 = scmp.ne.s32.totalorder %s49, %s52
      %p58 = scmp.eq.s32.totalorder %s13, 0
      %p59 = por %p57, %p58
      %p60 = scmp.ne.s32.totalorder %s49, %s52
      %p61 = scmp.eq.s32.totalorder %s18, 1
      %p62 = por %p60, %p61
      %p63 = scmp.ne.s32.totalorder %s52, %s53
      %p64 = scmp.eq.s32.totalorder %s18, 0
      %p65 = por %p63, %p64
      %p66 = scmp.ne.s32.totalorder %s52, %s53
      %p67 = scmp.eq.s32.totalorder %s19, 1
      %p68 = por %p66, %p67
      %p70 = scmp.ne.s32.totalorder %s53, %s69
      %p71 = scmp.eq.s32.totalorder %s19, 0
      %p72 = por %p70, %p71
      %s74 = sadd.s32 %s73, 1
      %p77 = scmp.eq.s32.totalorder %s13, 1
      %p78 = scmp.ne.s32.totalorder %s73, %s75
      %p79 = scmp.eq.s32.totalorder %s13, 0
      %p80 = por %p78, %p79
      %p81 = scmp.ne.s32.totalorder %s73, %s75
      %p82 = scmp.eq.s32.totalorder %s18, 1
      %p83 = por %p81, %p82
      %p84 = scmp.ne.s32.totalorder %s75, %s76
      %p85 = scmp.eq.s32.totalorder %s18, 0
      %p86 = por %p84, %p85
      %p87 = scmp.ne.s32.totalorder %s75, %s76
      %p88 = scmp.eq.s32.totalorder %s19, 1
      %p89 = por %p87, %p88
      %p91 = scmp.ne.s32.totalorder %s76, %s90
      %p92 = scmp.eq.s32.totalorder %s19, 0
      %p93 = por %p91, %p92
      %s95 = sadd.s32 %s94, 1
      %p98 = scmp.eq.s32.totalorder %s13, 1
      %p99 = scmp.ne.s32.totalorder %s94, %s96
      %p100 = scmp.eq.s32.totalorder %s13, 0
      %p101 = por %p99, %p100
      %p102 = scmp.ne.s32.totalorder %s94, %s96
      %p103 = scmp.eq.s32.totalorder %s18, 1
      %p104 = por %p102, %p103
      %p105 = scmp.ne.s32.totalorder %s96, %s97
      %p106 = scmp.eq.s32.totalorder %s18, 0
      %p107 = por %p105, %p106
      %p108 = scmp.ne.s32.totalorder %s96, %s97
      %p109 = scmp.eq.s32.totalorder %s19, 1
      %p110 = por %p108, %p109
      %p112 = scmp.ne.s32.totalorder %s97, %s111
      %p113 = scmp.eq.s32.totalorder %s19, 0
      %p114 = por %p112, %p113
      %s116 = sadd.s32 %s115, 1
      %p119 = scmp.eq.s32.totalorder %s13, 1
      %p120 = scmp.ne.s32.totalorder %s115, %s117
      %p121 = scmp.eq.s32.totalorder %s13, 0
      %p122 = por %p120, %p121
      %p123 = scmp.ne.s32.totalorder %s115, %s117
      %p124 = scmp.eq.s32.totalorder %s18, 1
      %p125 = por %p123, %p124
      %p126 = scmp.ne.s32.totalorder %s117, %s118
      %p127 = scmp.eq.s32.totalorder %s18, 0
      %p128 = por %p126, %p127
      %p129 = scmp.ne.s32.totalorder %s117, %s118
      %p130 = scmp.eq.s32.totalorder %s19, 1
      %p131 = por %p129, %p130
      %p133 = scmp.ne.s32.totalorder %s118, %s132
      %p134 = scmp.eq.s32.totalorder %s19, 0
      %p135 = por %p133, %p134
      %s136 = ssub.s32 %s13, %s20
      %p137 = scmp.eq.s32.totalorder %s136, 0
      %s139 = sadd.s32 %s138, 1
      %s140 = scalar_select %p137, %s138, %s139
      %p143 = pneg %p137
      %p144 = scmp.eq.s32.totalorder %s13, 1
      %p145 = por %p143, %p144
      %p146 = scmp.ne.s32.totalorder %s138, %s141
      %p147 = scmp.eq.s32.totalorder %s13, 0
      %p148 = por %p146, %p147
      %p149 = scmp.ne.s32.totalorder %s138, %s141
      %p150 = scmp.eq.s32.totalorder %s18, 1
      %p151 = por %p149, %p150
      %p152 = scmp.ne.s32.totalorder %s141, %s142
      %p153 = scmp.eq.s32.totalorder %s18, 0
      %p154 = por %p152, %p153
      %p155 = scmp.ne.s32.totalorder %s141, %s142
      %p156 = scmp.eq.s32.totalorder %s19, 1
      %p157 = por %p155, %p156
      %p159 = scmp.ne.s32.totalorder %s142, %s158
      %p160 = scmp.eq.s32.totalorder %s19, 0
      %p161 = por %p159, %p160
      %p162 = scmp.le.s32.totalorder 1, %s13
      %p163 = scmp.lt.s32.totalorder %s13, 3
      %p164 = pnand %p162, %p163
      %p165 = pneg %p164
      // Predicated region
      $region9: #{forward.7} parent=5 // pred_check
        _
      $region10: #{forward.7} parent=5 // pred_check_branch
        %167 = sbr.rel (%p164) target = $region12
      $region11: #{forward.7} parent=5 // pred_region
        %s168 = ssub.s32 %s13, 1
        // Predicated region
        $region13: #{forward.7} parent=11 // pred_check
          %p169 = pneg %p86
        $region14: #{forward.7} parent=11 // pred_check_branch
          %171 = sbr.rel (%p169) target = $region16
        $region15: #{forward.7} parent=11 // pred_region
          %173 = vsyncadd [#allocation3], 0
          %s174 = sshll.u32 %s2, 4
          %s175 = int_to_ptr.hbm [resolvable:$true] %s174
          %s176 = sshll.u32 [#allocation2], 4
          %s177 = int_to_ptr.vmem [resolvable:$true] %s176
          %182 = dma.hbm_to_vmem [thread:$0]  %s175, 8192, %s177, [#allocation3], 512, 512, 32
        $region16: #{forward.7} parent=11 // pred_fallthru
          _
        // Predicated region
        $region17: #{forward.7} parent=11 // pred_check
          %p183 = pneg %p107
        $region18: #{forward.7} parent=11 // pred_check_branch
          %185 = sbr.rel (%p183) target = $region20
        $region19: #{forward.7} parent=11 // pred_region
          %187 = vsyncadd [#allocation5], 0
          %s188 = sshll.u32 %s3, 4
          %s189 = int_to_ptr.hbm [resolvable:$true] %s188
          %s190 = sshll.u32 [#allocation4], 4
          %s191 = int_to_ptr.vmem [resolvable:$true] %s190
          %196 = dma.hbm_to_vmem [thread:$0]  %s189, 8192, %s191, [#allocation5], 512, 512, 32
        $region20: #{forward.7} parent=11 // pred_fallthru
          _
        // Predicated region
        $region21: #{forward.7} parent=11 // pred_check
          %p197 = pneg %p128
        $region22: #{forward.7} parent=11 // pred_check_branch
          %199 = sbr.rel (%p197) target = $region24
        $region23: #{forward.7} parent=11 // pred_region
          _
        $region24: #{forward.7} parent=11 // pred_fallthru
          _
      $region12: #{forward.7} parent=5 // pred_fallthru
        _
      %p200 = scmp.lt.s32.totalorder %s13, 2
      // Predicated region
      $region25: #{forward.7} parent=5 // pred_check
        %p201 = pneg %p200
      $region26: #{forward.7} parent=5 // pred_check_branch
        %203 = sbr.rel (%p201) target = $region28
      $region27: #{forward.7} parent=5 // pred_region
        // Predicated region
        $region29: #{forward.7} parent=27 // pred_check
          %p204 = pneg %p33
        $region30: #{forward.7} parent=27 // pred_check_branch
          %206 = sbr.rel (%p204) target = $region32
        $region31: #{forward.7} parent=27 // pred_region
          %s207 = smul.u32 4, %s13
          %p208 = scmp.lt.s32.totalorder %s207, 7
          %s209 = scalar_select %p208, %s207, 7
          %s210 = smul.addr %s209, 8
          %s211 = scalar_lea.vmem %s0, %s210
          %s212 = smul.u32 4, %s13
        $region32: #{forward.7} parent=27 // pred_fallthru
          _
        // Predicated region
        $region33: #{forward.7} parent=27 // pred_check
          %p213 = pneg %p59
        $region34: #{forward.7} parent=27 // pred_check_branch
          %215 = sbr.rel (%p213) target = $region36
        $region35: #{forward.7} parent=27 // pred_region
          %s216 = smul.u32 4, %s13
          %p217 = scmp.lt.s32.totalorder %s216, 7
          %s218 = scalar_select %p217, %s216, 7
          %s219 = smul.addr %s218, 8
          %s220 = scalar_lea.vmem %s1, %s219
          %s221 = smul.u32 4, %s13
        $region36: #{forward.7} parent=27 // pred_fallthru
          _
      $region28: #{forward.7} parent=5 // pred_fallthru
        _
      %p222 = scmp.le.s32.totalorder 1, %s13
      %p223 = scmp.lt.s32.totalorder %s13, 3
      %p224 = pnand %p222, %p223
      %p225 = pneg %p224
      // Predicated region
      $region37: #{forward.7} parent=5 // pred_check
        _
      $region38: #{forward.7} parent=5 // pred_check_branch
        %227 = sbr.rel (%p224) target = $region40
      $region39: #{forward.7} parent=5 // pred_region
        %s228 = ssub.s32 %s13, 1
        // Predicated region
        $region41: #{forward.7} parent=39 // pred_check
          %p229 = pneg %p86
        $region42: #{forward.7} parent=39 // pred_check_branch
          %231 = sbr.rel (%p229) target = $region44
        $region43: #{forward.7} parent=39 // pred_region
          %233 = dma.done [#allocation3], 8192
        $region44: #{forward.7} parent=39 // pred_fallthru
          _
        // Predicated region
        $region45: #{forward.7} parent=39 // pred_check
          %p234 = pneg %p107
        $region46: #{forward.7} parent=39 // pred_check_branch
          %236 = sbr.rel (%p234) target = $region48
        $region47: #{forward.7} parent=39 // pred_region
          %238 = dma.done [#allocation5], 8192
        $region48: #{forward.7} parent=39 // pred_fallthru
          _
        %s239 = smul.u32 4, %s18
        %p240 = scmp.lt.s32.totalorder %s239, 7
        %s241 = scalar_select %p240, %s239, 7
        %s242 = smul.addr %s241, 8
        %s243 = scalar_lea.vmem %s0, %s242
        %p244 = pneg %p39
        %p245 = pneg %p36
        %s246 = smul.u32 4, %s18
        %p247 = scmp.lt.s32.totalorder %s246, 7
        %s248 = scalar_select %p247, %s246, 7
        %s249 = smul.addr %s248, 8
        %s250 = scalar_lea.vmem %s1, %s249
        %p251 = pneg %p65
        %p252 = pneg %p62
        %p253 = pneg %p86
        %p254 = pneg %p83
        %p255 = pneg %p107
        %p256 = pneg %p104
        %p257 = pneg %p128
        %p258 = pneg %p125
        %p259 = pneg %p154
        %p260 = pneg %p151
        %s261 = smul.u32 4, %s18
        %p262 = scmp.lt.s32.totalorder %s261, 7
        %s263 = scalar_select %p262, %s261, 7
        %s264 = smul.addr %s263, 8
        %s265 = smul.addr %s264, 8
        %s266 = scalar_lea.vmem %s5, %s265
        %s267 = smul.u32 4, %s18
        %p268 = scmp.lt.s32.totalorder %s267, 7
        %s269 = scalar_select %p268, %s267, 7
        %s270 = smul.addr %s269, 8
        %s271 = scalar_lea.vmem %s0, %s270
        %s272 = smul.u32 4, %s18
        %s273 = smul.u32 4, %s18
        %p274 = scmp.lt.s32.totalorder %s273, 7
        %s275 = scalar_select %p274, %s273, 7
        %s276 = smul.addr %s275, 8
        %s277 = scalar_lea.vmem %s1, %s276
        %s278 = smul.u32 4, %s18
        %s279 = smul.u32 4, %s18
        %p280 = scmp.lt.s32.totalorder %s279, 7
        %s281 = scalar_select %p280, %s279, 7
        %s282 = smul.addr %s281, 8
        %s283 = smul.addr %s282, 8
        %s284 = scalar_lea.vmem %s5, %s283
        %s285 = smul.u32 4, %s18
        %v286 = vld [vmem:[%s271] sm:$0xff]
        %v287 = vld [vmem:[%s271 + $0x8] sm:$0xff]
        %v288 = vld [vmem:[%s271 + $0x10] sm:$0xff]
        %v289 = vld [vmem:[%s271 + $0x18] sm:$0xff]
        %v290 = vpack.c.bf16 %v287, %v286
        %v291 = vpack.c.bf16 %v289, %v288
        %v292 = vld [vmem:[%s277] sm:$0xff]
        %v293 = vld [vmem:[%s277 + $0x8] sm:$0xff]
        %v294 = vld [vmem:[%s277 + $0x10] sm:$0xff]
        %v295 = vld [vmem:[%s277 + $0x18] sm:$0xff]
        %v296 = vpack.c.bf16 %v293, %v292
        %v297 = vpack.c.bf16 %v295, %v294
        %v298 = vld [vmem:[#allocation2] sm:$0xff]
        %v299 = vld [vmem:[#allocation2 + $0x8] sm:$0xff]
        %v300 = vld [vmem:[#allocation2 + $0x10] sm:$0xff]
        %v301 = vld [vmem:[#allocation2 + $0x18] sm:$0xff]
        %v302 = vld [vmem:[#allocation2 + $0x20] sm:$0xff]
        %v303 = vld [vmem:[#allocation2 + $0x28] sm:$0xff]
        %v304 = vld [vmem:[#allocation2 + $0x30] sm:$0xff]
        %v305 = vld [vmem:[#allocation2 + $0x38] sm:$0xff]
        %v306 = vld [vmem:[#allocation2 + $0x40] sm:$0xff]
        %v307 = vld [vmem:[#allocation2 + $0x48] sm:$0xff]
        %v308 = vld [vmem:[#allocation2 + $0x50] sm:$0xff]
        %v309 = vld [vmem:[#allocation2 + $0x58] sm:$0xff]
        %v310 = vld [vmem:[#allocation2 + $0x60] sm:$0xff]
        %v311 = vld [vmem:[#allocation2 + $0x68] sm:$0xff]
        %v312 = vld [vmem:[#allocation2 + $0x70] sm:$0xff]
        %v313 = vld [vmem:[#allocation2 + $0x78] sm:$0xff]
        %v314 = vld [vmem:[#allocation2 + $0x80] sm:$0xff]
        %v315 = vld [vmem:[#allocation2 + $0x88] sm:$0xff]
        %v316 = vld [vmem:[#allocation2 + $0x90] sm:$0xff]
        %v317 = vld [vmem:[#allocation2 + $0x98] sm:$0xff]
        %v318 = vld [vmem:[#allocation2 + $0xa0] sm:$0xff]
        %v319 = vld [vmem:[#allocation2 + $0xa8] sm:$0xff]
        %v320 = vld [vmem:[#allocation2 + $0xb0] sm:$0xff]
        %v321 = vld [vmem:[#allocation2 + $0xb8] sm:$0xff]
        %v322 = vld [vmem:[#allocation2 + $0xc0] sm:$0xff]
        %v323 = vld [vmem:[#allocation2 + $0xc8] sm:$0xff]
        %v324 = vld [vmem:[#allocation2 + $0xd0] sm:$0xff]
        %v325 = vld [vmem:[#allocation2 + $0xd8] sm:$0xff]
        %v326 = vld [vmem:[#allocation2 + $0xe0] sm:$0xff]
        %v327 = vld [vmem:[#allocation2 + $0xe8] sm:$0xff]
        %v328 = vld [vmem:[#allocation2 + $0xf0] sm:$0xff]
        %v329 = vld [vmem:[#allocation2 + $0xf8] sm:$0xff]
        %v330 = vld [vmem:[#allocation2 + $0x100] sm:$0xff]
        %v331 = vld [vmem:[#allocation2 + $0x108] sm:$0xff]
        %v332 = vld [vmem:[#allocation2 + $0x110] sm:$0xff]
        %v333 = vld [vmem:[#allocation2 + $0x118] sm:$0xff]
        %v334 = vld [vmem:[#allocation2 + $0x120] sm:$0xff]
        %v335 = vld [vmem:[#allocation2 + $0x128] sm:$0xff]
        %v336 = vld [vmem:[#allocation2 + $0x130] sm:$0xff]
        %v337 = vld [vmem:[#allocation2 + $0x138] sm:$0xff]
        %v338 = vld [vmem:[#allocation2 + $0x140] sm:$0xff]
        %v339 = vld [vmem:[#allocation2 + $0x148] sm:$0xff]
        %v340 = vld [vmem:[#allocation2 + $0x150] sm:$0xff]
        %v341 = vld [vmem:[#allocation2 + $0x158] sm:$0xff]
        %v342 = vld [vmem:[#allocation2 + $0x160] sm:$0xff]
        %v343 = vld [vmem:[#allocation2 + $0x168] sm:$0xff]
        %v344 = vld [vmem:[#allocation2 + $0x170] sm:$0xff]
        %v345 = vld [vmem:[#allocation2 + $0x178] sm:$0xff]
        %v346 = vld [vmem:[#allocation2 + $0x180] sm:$0xff]
        %v347 = vld [vmem:[#allocation2 + $0x188] sm:$0xff]
        %v348 = vld [vmem:[#allocation2 + $0x190] sm:$0xff]
        %v349 = vld [vmem:[#allocation2 + $0x198] sm:$0xff]
        %v350 = vld [vmem:[#allocation2 + $0x1a0] sm:$0xff]
        %v351 = vld [vmem:[#allocation2 + $0x1a8] sm:$0xff]
        %v352 = vld [vmem:[#allocation2 + $0x1b0] sm:$0xff]
        %v353 = vld [vmem:[#allocation2 + $0x1b8] sm:$0xff]
        %v354 = vld [vmem:[#allocation2 + $0x1c0] sm:$0xff]
        %v355 = vld [vmem:[#allocation2 + $0x1c8] sm:$0xff]
        %v356 = vld [vmem:[#allocation2 + $0x1d0] sm:$0xff]
        %v357 = vld [vmem:[#allocation2 + $0x1d8] sm:$0xff]
        %v358 = vld [vmem:[#allocation2 + $0x1e0] sm:$0xff]
        %v359 = vld [vmem:[#allocation2 + $0x1e8] sm:$0xff]
        %v360 = vld [vmem:[#allocation2 + $0x1f0] sm:$0xff]
        %v361 = vld [vmem:[#allocation2 + $0x1f8] sm:$0xff]
        %v362 = vld [vmem:[#allocation4] sm:$0xff]
        %v363 = vld [vmem:[#allocation4 + $0x8] sm:$0xff]
        %v364 = vld [vmem:[#allocation4 + $0x10] sm:$0xff]
        %v365 = vld [vmem:[#allocation4 + $0x18] sm:$0xff]
        %v366 = vld [vmem:[#allocation4 + $0x20] sm:$0xff]
        %v367 = vld [vmem:[#allocation4 + $0x28] sm:$0xff]
        %v368 = vld [vmem:[#allocation4 + $0x30] sm:$0xff]
        %v369 = vld [vmem:[#allocation4 + $0x38] sm:$0xff]
        %v370 = vld [vmem:[#allocation4 + $0x40] sm:$0xff]
        %v371 = vld [vmem:[#allocation4 + $0x48] sm:$0xff]
        %v372 = vld [vmem:[#allocation4 + $0x50] sm:$0xff]
        %v373 = vld [vmem:[#allocation4 + $0x58] sm:$0xff]
        %v374 = vld [vmem:[#allocation4 + $0x60] sm:$0xff]
        %v375 = vld [vmem:[#allocation4 + $0x68] sm:$0xff]
        %v376 = vld [vmem:[#allocation4 + $0x70] sm:$0xff]
        %v377 = vld [vmem:[#allocation4 + $0x78] sm:$0xff]
        %v378 = vld [vmem:[#allocation4 + $0x80] sm:$0xff]
        %v379 = vld [vmem:[#allocation4 + $0x88] sm:$0xff]
        %v380 = vld [vmem:[#allocation4 + $0x90] sm:$0xff]
        %v381 = vld [vmem:[#allocation4 + $0x98] sm:$0xff]
        %v382 = vld [vmem:[#allocation4 + $0xa0] sm:$0xff]
        %v383 = vld [vmem:[#allocation4 + $0xa8] sm:$0xff]
        %v384 = vld [vmem:[#allocation4 + $0xb0] sm:$0xff]
        %v385 = vld [vmem:[#allocation4 + $0xb8] sm:$0xff]
        %v386 = vld [vmem:[#allocation4 + $0xc0] sm:$0xff]
        %v387 = vld [vmem:[#allocation4 + $0xc8] sm:$0xff]
        %v388 = vld [vmem:[#allocation4 + $0xd0] sm:$0xff]
        %v389 = vld [vmem:[#allocation4 + $0xd8] sm:$0xff]
        %v390 = vld [vmem:[#allocation4 + $0xe0] sm:$0xff]
        %v391 = vld [vmem:[#allocation4 + $0xe8] sm:$0xff]
        %v392 = vld [vmem:[#allocation4 + $0xf0] sm:$0xff]
        %v393 = vld [vmem:[#allocation4 + $0xf8] sm:$0xff]
        %v394 = vld [vmem:[#allocation4 + $0x100] sm:$0xff]
        %v395 = vld [vmem:[#allocation4 + $0x108] sm:$0xff]
        %v396 = vld [vmem:[#allocation4 + $0x110] sm:$0xff]
        %v397 = vld [vmem:[#allocation4 + $0x118] sm:$0xff]
        %v398 = vld [vmem:[#allocation4 + $0x120] sm:$0xff]
        %v399 = vld [vmem:[#allocation4 + $0x128] sm:$0xff]
        %v400 = vld [vmem:[#allocation4 + $0x130] sm:$0xff]
        %v401 = vld [vmem:[#allocation4 + $0x138] sm:$0xff]
        %v402 = vld [vmem:[#allocation4 + $0x140] sm:$0xff]
        %v403 = vld [vmem:[#allocation4 + $0x148] sm:$0xff]
        %v404 = vld [vmem:[#allocation4 + $0x150] sm:$0xff]
        %v405 = vld [vmem:[#allocation4 + $0x158] sm:$0xff]
        %v406 = vld [vmem:[#allocation4 + $0x160] sm:$0xff]
        %v407 = vld [vmem:[#allocation4 + $0x168] sm:$0xff]
        %v408 = vld [vmem:[#allocation4 + $0x170] sm:$0xff]
        %v409 = vld [vmem:[#allocation4 + $0x178] sm:$0xff]
        %v410 = vld [vmem:[#allocation4 + $0x180] sm:$0xff]
        %v411 = vld [vmem:[#allocation4 + $0x188] sm:$0xff]
        %v412 = vld [vmem:[#allocation4 + $0x190] sm:$0xff]
        %v413 = vld [vmem:[#allocation4 + $0x198] sm:$0xff]
        %v414 = vld [vmem:[#allocation4 + $0x1a0] sm:$0xff]
        %v415 = vld [vmem:[#allocation4 + $0x1a8] sm:$0xff]
        %v416 = vld [vmem:[#allocation4 + $0x1b0] sm:$0xff]
        %v417 = vld [vmem:[#allocation4 + $0x1b8] sm:$0xff]
        %v418 = vld [vmem:[#allocation4 + $0x1c0] sm:$0xff]
        %v419 = vld [vmem:[#allocation4 + $0x1c8] sm:$0xff]
        %v420 = vld [vmem:[#allocation4 + $0x1d0] sm:$0xff]
        %v421 = vld [vmem:[#allocation4 + $0x1d8] sm:$0xff]
        %v422 = vld [vmem:[#allocation4 + $0x1e0] sm:$0xff]
        %v423 = vld [vmem:[#allocation4 + $0x1e8] sm:$0xff]
        %v424 = vld [vmem:[#allocation4 + $0x1f0] sm:$0xff]
        %v425 = vld [vmem:[#allocation4 + $0x1f8] sm:$0xff]
        %v490 = vunpack.c.l.b16 %v362
        %v491 = vunpack.c.h.b16 %v362
        %v492 = vunpack.c.l.b16 %v363
        %v493 = vunpack.c.h.b16 %v363
        %v494 = vunpack.c.l.b16 %v364
        %v495 = vunpack.c.h.b16 %v364
        %v496 = vunpack.c.l.b16 %v365
        %v497 = vunpack.c.h.b16 %v365
        %v498 = vunpack.c.l.b16 %v366
        %v499 = vunpack.c.h.b16 %v366
        %v500 = vunpack.c.l.b16 %v367
        %v501 = vunpack.c.h.b16 %v367
        %v502 = vunpack.c.l.b16 %v368
        %v503 = vunpack.c.h.b16 %v368
        %v504 = vunpack.c.l.b16 %v369
        %v505 = vunpack.c.h.b16 %v369
        %v506 = vunpack.c.l.b16 %v370
        %v507 = vunpack.c.h.b16 %v370
        %v508 = vunpack.c.l.b16 %v371
        %v509 = vunpack.c.h.b16 %v371
        %v510 = vunpack.c.l.b16 %v372
        %v511 = vunpack.c.h.b16 %v372
        %v512 = vunpack.c.l.b16 %v373
        %v513 = vunpack.c.h.b16 %v373
        %v514 = vunpack.c.l.b16 %v374
        %v515 = vunpack.c.h.b16 %v374
        %v516 = vunpack.c.l.b16 %v375
        %v517 = vunpack.c.h.b16 %v375
        %v518 = vunpack.c.l.b16 %v376
        %v519 = vunpack.c.h.b16 %v376
        %v520 = vunpack.c.l.b16 %v377
        %v521 = vunpack.c.h.b16 %v377
        %v522 = vunpack.c.l.b16 %v378
        %v523 = vunpack.c.h.b16 %v378
        %v524 = vunpack.c.l.b16 %v379
        %v525 = vunpack.c.h.b16 %v379
        %v526 = vunpack.c.l.b16 %v380
        %v527 = vunpack.c.h.b16 %v380
        %v528 = vunpack.c.l.b16 %v381
        %v529 = vunpack.c.h.b16 %v381
        %v530 = vunpack.c.l.b16 %v382
        %v531 = vunpack.c.h.b16 %v382
        %v532 = vunpack.c.l.b16 %v383
        %v533 = vunpack.c.h.b16 %v383
        %v534 = vunpack.c.l.b16 %v384
        %v535 = vunpack.c.h.b16 %v384
        %v536 = vunpack.c.l.b16 %v385
        %v537 = vunpack.c.h.b16 %v385
        %v538 = vunpack.c.l.b16 %v386
        %v539 = vunpack.c.h.b16 %v386
        %v540 = vunpack.c.l.b16 %v387
        %v541 = vunpack.c.h.b16 %v387
        %v542 = vunpack.c.l.b16 %v388
        %v543 = vunpack.c.h.b16 %v388
        %v544 = vunpack.c.l.b16 %v389
        %v545 = vunpack.c.h.b16 %v389
        %v546 = vunpack.c.l.b16 %v390
        %v547 = vunpack.c.h.b16 %v390
        %v548 = vunpack.c.l.b16 %v391
        %v549 = vunpack.c.h.b16 %v391
        %v550 = vunpack.c.l.b16 %v392
        %v551 = vunpack.c.h.b16 %v392
        %v552 = vunpack.c.l.b16 %v393
        %v553 = vunpack.c.h.b16 %v393
        %v554 = vunpack.c.l.b16 %v394
        %v555 = vunpack.c.h.b16 %v394
        %v556 = vunpack.c.l.b16 %v395
        %v557 = vunpack.c.h.b16 %v395
        %v558 = vunpack.c.l.b16 %v396
        %v559 = vunpack.c.h.b16 %v396
        %v560 = vunpack.c.l.b16 %v397
        %v561 = vunpack.c.h.b16 %v397
        %v562 = vunpack.c.l.b16 %v398
        %v563 = vunpack.c.h.b16 %v398
        %v564 = vunpack.c.l.b16 %v399
        %v565 = vunpack.c.h.b16 %v399
        %v566 = vunpack.c.l.b16 %v400
        %v567 = vunpack.c.h.b16 %v400
        %v568 = vunpack.c.l.b16 %v401
        %v569 = vunpack.c.h.b16 %v401
        %v570 = vunpack.c.l.b16 %v402
        %v571 = vunpack.c.h.b16 %v402
        %v572 = vunpack.c.l.b16 %v403
        %v573 = vunpack.c.h.b16 %v403
        %v574 = vunpack.c.l.b16 %v404
        %v575 = vunpack.c.h.b16 %v404
        %v576 = vunpack.c.l.b16 %v405
        %v577 = vunpack.c.h.b16 %v405
        %v578 = vunpack.c.l.b16 %v406
        %v579 = vunpack.c.h.b16 %v406
        %v580 = vunpack.c.l.b16 %v407
        %v581 = vunpack.c.h.b16 %v407
        %v582 = vunpack.c.l.b16 %v408
        %v583 = vunpack.c.h.b16 %v408
        %v584 = vunpack.c.l.b16 %v409
        %v585 = vunpack.c.h.b16 %v409
        %v586 = vunpack.c.l.b16 %v410
        %v587 = vunpack.c.h.b16 %v410
        %v588 = vunpack.c.l.b16 %v411
        %v589 = vunpack.c.h.b16 %v411
        %v590 = vunpack.c.l.b16 %v412
        %v591 = vunpack.c.h.b16 %v412
        %v592 = vunpack.c.l.b16 %v413
        %v593 = vunpack.c.h.b16 %v413
        %v594 = vunpack.c.l.b16 %v414
        %v595 = vunpack.c.h.b16 %v414
        %v596 = vunpack.c.l.b16 %v415
        %v597 = vunpack.c.h.b16 %v415
        %v598 = vunpack.c.l.b16 %v416
        %v599 = vunpack.c.h.b16 %v416
        %v600 = vunpack.c.l.b16 %v417
        %v601 = vunpack.c.h.b16 %v417
        %v602 = vunpack.c.l.b16 %v418
        %v603 = vunpack.c.h.b16 %v418
        %v604 = vunpack.c.l.b16 %v419
        %v605 = vunpack.c.h.b16 %v419
        %v606 = vunpack.c.l.b16 %v420
        %v607 = vunpack.c.h.b16 %v420
        %v608 = vunpack.c.l.b16 %v421
        %v609 = vunpack.c.h.b16 %v421
        %v610 = vunpack.c.l.b16 %v422
        %v611 = vunpack.c.h.b16 %v422
        %v612 = vunpack.c.l.b16 %v423
        %v613 = vunpack.c.h.b16 %v423
        %v614 = vunpack.c.l.b16 %v424
        %v615 = vunpack.c.h.b16 %v424
        %v616 = vunpack.c.l.b16 %v425
        %v617 = vunpack.c.h.b16 %v425
        %v618 = vpack.c.b16 %v498, %v490
        %v619 = vpack.c.b16 %v499, %v491
        %v620 = vpack.c.b16 %v500, %v492
        %v621 = vpack.c.b16 %v501, %v493
        %v622 = vpack.c.b16 %v502, %v494
        %v623 = vpack.c.b16 %v503, %v495
        %v624 = vpack.c.b16 %v504, %v496
        %v625 = vpack.c.b16 %v505, %v497
        %v626 = vpack.c.b16 %v514, %v506
        %v627 = vpack.c.b16 %v515, %v507
        %v628 = vpack.c.b16 %v516, %v508
        %v629 = vpack.c.b16 %v517, %v509
        %v630 = vpack.c.b16 %v518, %v510
        %v631 = vpack.c.b16 %v519, %v511
        %v632 = vpack.c.b16 %v520, %v512
        %v633 = vpack.c.b16 %v521, %v513
        %v634 = vpack.c.b16 %v530, %v522
        %v635 = vpack.c.b16 %v531, %v523
        %v636 = vpack.c.b16 %v532, %v524
        %v637 = vpack.c.b16 %v533, %v525
        %v638 = vpack.c.b16 %v534, %v526
        %v639 = vpack.c.b16 %v535, %v527
        %v640 = vpack.c.b16 %v536, %v528
        %v641 = vpack.c.b16 %v537, %v529
        %v642 = vpack.c.b16 %v546, %v538
        %v643 = vpack.c.b16 %v547, %v539
        %v644 = vpack.c.b16 %v548, %v540
        %v645 = vpack.c.b16 %v549, %v541
        %v646 = vpack.c.b16 %v550, %v542
        %v647 = vpack.c.b16 %v551, %v543
        %v648 = vpack.c.b16 %v552, %v544
        %v649 = vpack.c.b16 %v553, %v545
        %v650 = vpack.c.b16 %v562, %v554
        %v651 = vpack.c.b16 %v563, %v555
        %v652 = vpack.c.b16 %v564, %v556
        %v653 = vpack.c.b16 %v565, %v557
        %v654 = vpack.c.b16 %v566, %v558
        %v655 = vpack.c.b16 %v567, %v559
        %v656 = vpack.c.b16 %v568, %v560
        %v657 = vpack.c.b16 %v569, %v561
        %v658 = vpack.c.b16 %v578, %v570
        %v659 = vpack.c.b16 %v579, %v571
        %v660 = vpack.c.b16 %v580, %v572
        %v661 = vpack.c.b16 %v581, %v573
        %v662 = vpack.c.b16 %v582, %v574
        %v663 = vpack.c.b16 %v583, %v575
        %v664 = vpack.c.b16 %v584, %v576
        %v665 = vpack.c.b16 %v585, %v577
        %v666 = vpack.c.b16 %v594, %v586
        %v667 = vpack.c.b16 %v595, %v587
        %v668 = vpack.c.b16 %v596, %v588
        %v669 = vpack.c.b16 %v597, %v589
        %v670 = vpack.c.b16 %v598, %v590
        %v671 = vpack.c.b16 %v599, %v591
        %v672 = vpack.c.b16 %v600, %v592
        %v673 = vpack.c.b16 %v601, %v593
        %v674 = vpack.c.b16 %v610, %v602
        %v675 = vpack.c.b16 %v611, %v603
        %v676 = vpack.c.b16 %v612, %v604
        %v677 = vpack.c.b16 %v613, %v605
        %v678 = vpack.c.b16 %v614, %v606
        %v679 = vpack.c.b16 %v615, %v607
        %v680 = vpack.c.b16 %v616, %v608
        %v681 = vpack.c.b16 %v617, %v609
        %746 = vmatpush.bf16.msra.mxu0 %v674
        %747 = vmatpush.bf16.msra.mxu0 %v666
        %748 = vmatpush.bf16.msra.mxu0 %v658
        %749 = vmatpush.bf16.msra.mxu0 %v650
        %750 = vmatpush.bf16.msra.mxu0 %v642
        %751 = vmatpush.bf16.msra.mxu0 %v634
        %752 = vmatpush.bf16.msra.mxu0 %v626
        %753 = vmatpush.bf16.msra.mxu0 %v618
        %754 = vmatmul.bf16.gmra.mxu0 %v296
        %v755 = vpop.f32.mrf.mxu0
        %v756 = vadd.f32 0.0, %v755
        %v757 = vpop.f32.mrf.mxu0
        %v758 = vadd.f32 0.0, %v757
        %759 = vmatmul.bf16.gmra.mxu0 %v297
        %v760 = vpop.f32.mrf.mxu0
        %v761 = vadd.f32 0.0, %v760
        %v762 = vpop.f32.mrf.mxu0
        %v763 = vadd.f32 0.0, %v762
        %764 = vdwg.mxu0
        %765 = vmatpush.bf16.msra.mxu0 %v675
        %766 = vmatpush.bf16.msra.mxu0 %v667
        %767 = vmatpush.bf16.msra.mxu0 %v659
        %768 = vmatpush.bf16.msra.mxu0 %v651
        %769 = vmatpush.bf16.msra.mxu0 %v643
        %770 = vmatpush.bf16.msra.mxu0 %v635
        %771 = vmatpush.bf16.msra.mxu0 %v627
        %772 = vmatpush.bf16.msra.mxu0 %v619
        %773 = vmatmul.bf16.gmra.mxu0 %v296
        %v774 = vpop.f32.mrf.mxu0
        %v775 = vadd.f32 0.0, %v774
        %v776 = vpop.f32.mrf.mxu0
        %v777 = vadd.f32 0.0, %v776
        %778 = vmatmul.bf16.gmra.mxu0 %v297
        %v779 = vpop.f32.mrf.mxu0
        %v780 = vadd.f32 0.0, %v779
        %v781 = vpop.f32.mrf.mxu0
        %v782 = vadd.f32 0.0, %v781
        %783 = vdwg.mxu0
        %784 = vmatpush.bf16.msra.mxu0 %v676
        %785 = vmatpush.bf16.msra.mxu0 %v668
        %786 = vmatpush.bf16.msra.mxu0 %v660
        %787 = vmatpush.bf16.msra.mxu0 %v652
        %788 = vmatpush.bf16.msra.mxu0 %v644
        %789 = vmatpush.bf16.msra.mxu0 %v636
        %790 = vmatpush.bf16.msra.mxu0 %v628
        %791 = vmatpush.bf16.msra.mxu0 %v620
        %792 = vmatmul.bf16.gmra.mxu0 %v296
        %v793 = vpop.f32.mrf.mxu0
        %v794 = vadd.f32 0.0, %v793
        %v795 = vpop.f32.mrf.mxu0
        %v796 = vadd.f32 0.0, %v795
        %797 = vmatmul.bf16.gmra.mxu0 %v297
        %v798 = vpop.f32.mrf.mxu0
        %v799 = vadd.f32 0.0, %v798
        %v800 = vpop.f32.mrf.mxu0
        %v801 = vadd.f32 0.0, %v800
        %802 = vdwg.mxu0
        %803 = vmatpush.bf16.msra.mxu0 %v677
        %804 = vmatpush.bf16.msra.mxu0 %v669
        %805 = vmatpush.bf16.msra.mxu0 %v661
        %806 = vmatpush.bf16.msra.mxu0 %v653
        %807 = vmatpush.bf16.msra.mxu0 %v645
        %808 = vmatpush.bf16.msra.mxu0 %v637
        %809 = vmatpush.bf16.msra.mxu0 %v629
        %810 = vmatpush.bf16.msra.mxu0 %v621
        %811 = vmatmul.bf16.gmra.mxu0 %v296
        %v812 = vpop.f32.mrf.mxu0
        %v813 = vadd.f32 0.0, %v812
        %v814 = vpop.f32.mrf.mxu0
        %v815 = vadd.f32 0.0, %v814
        %816 = vmatmul.bf16.gmra.mxu0 %v297
        %v817 = vpop.f32.mrf.mxu0
        %v818 = vadd.f32 0.0, %v817
        %v819 = vpop.f32.mrf.mxu0
        %v820 = vadd.f32 0.0, %v819
        %821 = vdwg.mxu0
        %822 = vmatpush.bf16.msra.mxu0 %v678
        %823 = vmatpush.bf16.msra.mxu0 %v670
        %824 = vmatpush.bf16.msra.mxu0 %v662
        %825 = vmatpush.bf16.msra.mxu0 %v654
        %826 = vmatpush.bf16.msra.mxu0 %v646
        %827 = vmatpush.bf16.msra.mxu0 %v638
        %828 = vmatpush.bf16.msra.mxu0 %v630
        %829 = vmatpush.bf16.msra.mxu0 %v622
        %830 = vmatmul.bf16.gmra.mxu0 %v296
        %v831 = vpop.f32.mrf.mxu0
        %v832 = vadd.f32 0.0, %v831
        %v833 = vpop.f32.mrf.mxu0
        %v834 = vadd.f32 0.0, %v833
        %835 = vmatmul.bf16.gmra.mxu0 %v297
        %v836 = vpop.f32.mrf.mxu0
        %v837 = vadd.f32 0.0, %v836
        %v838 = vpop.f32.mrf.mxu0
        %v839 = vadd.f32 0.0, %v838
        %840 = vdwg.mxu0
        %841 = vmatpush.bf16.msra.mxu0 %v679
        %842 = vmatpush.bf16.msra.mxu0 %v671
        %843 = vmatpush.bf16.msra.mxu0 %v663
        %844 = vmatpush.bf16.msra.mxu0 %v655
        %845 = vmatpush.bf16.msra.mxu0 %v647
        %846 = vmatpush.bf16.msra.mxu0 %v639
        %847 = vmatpush.bf16.msra.mxu0 %v631
        %848 = vmatpush.bf16.msra.mxu0 %v623
        %849 = vmatmul.bf16.gmra.mxu0 %v296
        %v850 = vpop.f32.mrf.mxu0
        %v851 = vadd.f32 0.0, %v850
        %v852 = vpop.f32.mrf.mxu0
        %v853 = vadd.f32 0.0, %v852
        %854 = vmatmul.bf16.gmra.mxu0 %v297
        %v855 = vpop.f32.mrf.mxu0
        %v856 = vadd.f32 0.0, %v855
        %v857 = vpop.f32.mrf.mxu0
        %v858 = vadd.f32 0.0, %v857
        %859 = vdwg.mxu0
        %860 = vmatpush.bf16.msra.mxu0 %v680
        %861 = vmatpush.bf16.msra.mxu0 %v672
        %862 = vmatpush.bf16.msra.mxu0 %v664
        %863 = vmatpush.bf16.msra.mxu0 %v656
        %864 = vmatpush.bf16.msra.mxu0 %v648
        %865 = vmatpush.bf16.msra.mxu0 %v640
        %866 = vmatpush.bf16.msra.mxu0 %v632
        %867 = vmatpush.bf16.msra.mxu0 %v624
        %868 = vmatmul.bf16.gmra.mxu0 %v296
        %v869 = vpop.f32.mrf.mxu0
        %v870 = vadd.f32 0.0, %v869
        %v871 = vpop.f32.mrf.mxu0
        %v872 = vadd.f32 0.0, %v871
        %873 = vmatmul.bf16.gmra.mxu0 %v297
        %v874 = vpop.f32.mrf.mxu0
        %v875 = vadd.f32 0.0, %v874
        %v876 = vpop.f32.mrf.mxu0
        %v877 = vadd.f32 0.0, %v876
        %878 = vdwg.mxu0
        %879 = vmatpush.bf16.msra.mxu0 %v681
        %880 = vmatpush.bf16.msra.mxu0 %v673
        %881 = vmatpush.bf16.msra.mxu0 %v665
        %882 = vmatpush.bf16.msra.mxu0 %v657
        %883 = vmatpush.bf16.msra.mxu0 %v649
        %884 = vmatpush.bf16.msra.mxu0 %v641
        %885 = vmatpush.bf16.msra.mxu0 %v633
        %886 = vmatpush.bf16.msra.mxu0 %v625
        %887 = vmatmul.bf16.gmra.mxu0 %v296
        %v888 = vpop.f32.mrf.mxu0
        %v889 = vadd.f32 0.0, %v888
        %v890 = vpop.f32.mrf.mxu0
        %v891 = vadd.f32 0.0, %v890
        %892 = vmatmul.bf16.gmra.mxu0 %v297
        %v893 = vpop.f32.mrf.mxu0
        %v894 = vadd.f32 0.0, %v893
        %v895 = vpop.f32.mrf.mxu0
        %v896 = vadd.f32 0.0, %v895
        %897 = vdwg.mxu0
        %v962 = vunpack.c.l.b16 %v298
        %v963 = vunpack.c.h.b16 %v298
        %v964 = vunpack.c.l.b16 %v299
        %v965 = vunpack.c.h.b16 %v299
        %v966 = vunpack.c.l.b16 %v300
        %v967 = vunpack.c.h.b16 %v300
        %v968 = vunpack.c.l.b16 %v301
        %v969 = vunpack.c.h.b16 %v301
        %v970 = vunpack.c.l.b16 %v302
        %v971 = vunpack.c.h.b16 %v302
        %v972 = vunpack.c.l.b16 %v303
        %v973 = vunpack.c.h.b16 %v303
        %v974 = vunpack.c.l.b16 %v304
        %v975 = vunpack.c.h.b16 %v304
        %v976 = vunpack.c.l.b16 %v305
        %v977 = vunpack.c.h.b16 %v305
        %v978 = vunpack.c.l.b16 %v306
        %v979 = vunpack.c.h.b16 %v306
        %v980 = vunpack.c.l.b16 %v307
        %v981 = vunpack.c.h.b16 %v307
        %v982 = vunpack.c.l.b16 %v308
        %v983 = vunpack.c.h.b16 %v308
        %v984 = vunpack.c.l.b16 %v309
        %v985 = vunpack.c.h.b16 %v309
        %v986 = vunpack.c.l.b16 %v310
        %v987 = vunpack.c.h.b16 %v310
        %v988 = vunpack.c.l.b16 %v311
        %v989 = vunpack.c.h.b16 %v311
        %v990 = vunpack.c.l.b16 %v312
        %v991 = vunpack.c.h.b16 %v312
        %v992 = vunpack.c.l.b16 %v313
        %v993 = vunpack.c.h.b16 %v313
        %v994 = vunpack.c.l.b16 %v314
        %v995 = vunpack.c.h.b16 %v314
        %v996 = vunpack.c.l.b16 %v315
        %v997 = vunpack.c.h.b16 %v315
        %v998 = vunpack.c.l.b16 %v316
        %v999 = vunpack.c.h.b16 %v316
        %v1000 = vunpack.c.l.b16 %v317
        %v1001 = vunpack.c.h.b16 %v317
        %v1002 = vunpack.c.l.b16 %v318
        %v1003 = vunpack.c.h.b16 %v318
        %v1004 = vunpack.c.l.b16 %v319
        %v1005 = vunpack.c.h.b16 %v319
        %v1006 = vunpack.c.l.b16 %v320
        %v1007 = vunpack.c.h.b16 %v320
        %v1008 = vunpack.c.l.b16 %v321
        %v1009 = vunpack.c.h.b16 %v321
        %v1010 = vunpack.c.l.b16 %v322
        %v1011 = vunpack.c.h.b16 %v322
        %v1012 = vunpack.c.l.b16 %v323
        %v1013 = vunpack.c.h.b16 %v323
        %v1014 = vunpack.c.l.b16 %v324
        %v1015 = vunpack.c.h.b16 %v324
        %v1016 = vunpack.c.l.b16 %v325
        %v1017 = vunpack.c.h.b16 %v325
        %v1018 = vunpack.c.l.b16 %v326
        %v1019 = vunpack.c.h.b16 %v326
        %v1020 = vunpack.c.l.b16 %v327
        %v1021 = vunpack.c.h.b16 %v327
        %v1022 = vunpack.c.l.b16 %v328
        %v1023 = vunpack.c.h.b16 %v328
        %v1024 = vunpack.c.l.b16 %v329
        %v1025 = vunpack.c.h.b16 %v329
        %v1026 = vunpack.c.l.b16 %v330
        %v1027 = vunpack.c.h.b16 %v330
        %v1028 = vunpack.c.l.b16 %v331
        %v1029 = vunpack.c.h.b16 %v331
        %v1030 = vunpack.c.l.b16 %v332
        %v1031 = vunpack.c.h.b16 %v332
        %v1032 = vunpack.c.l.b16 %v333
        %v1033 = vunpack.c.h.b16 %v333
        %v1034 = vunpack.c.l.b16 %v334
        %v1035 = vunpack.c.h.b16 %v334
        %v1036 = vunpack.c.l.b16 %v335
        %v1037 = vunpack.c.h.b16 %v335
        %v1038 = vunpack.c.l.b16 %v336
        %v1039 = vunpack.c.h.b16 %v336
        %v1040 = vunpack.c.l.b16 %v337
        %v1041 = vunpack.c.h.b16 %v337
        %v1042 = vunpack.c.l.b16 %v338
        %v1043 = vunpack.c.h.b16 %v338
        %v1044 = vunpack.c.l.b16 %v339
        %v1045 = vunpack.c.h.b16 %v339
        %v1046 = vunpack.c.l.b16 %v340
        %v1047 = vunpack.c.h.b16 %v340
        %v1048 = vunpack.c.l.b16 %v341
        %v1049 = vunpack.c.h.b16 %v341
        %v1050 = vunpack.c.l.b16 %v342
        %v1051 = vunpack.c.h.b16 %v342
        %v1052 = vunpack.c.l.b16 %v343
        %v1053 = vunpack.c.h.b16 %v343
        %v1054 = vunpack.c.l.b16 %v344
        %v1055 = vunpack.c.h.b16 %v344
        %v1056 = vunpack.c.l.b16 %v345
        %v1057 = vunpack.c.h.b16 %v345
        %v1058 = vunpack.c.l.b16 %v346
        %v1059 = vunpack.c.h.b16 %v346
        %v1060 = vunpack.c.l.b16 %v347
        %v1061 = vunpack.c.h.b16 %v347
        %v1062 = vunpack.c.l.b16 %v348
        %v1063 = vunpack.c.h.b16 %v348
        %v1064 = vunpack.c.l.b16 %v349
        %v1065 = vunpack.c.h.b16 %v349
        %v1066 = vunpack.c.l.b16 %v350
        %v1067 = vunpack.c.h.b16 %v350
        %v1068 = vunpack.c.l.b16 %v351
        %v1069 = vunpack.c.h.b16 %v351
        %v1070 = vunpack.c.l.b16 %v352
        %v1071 = vunpack.c.h.b16 %v352
        %v1072 = vunpack.c.l.b16 %v353
        %v1073 = vunpack.c.h.b16 %v353
        %v1074 = vunpack.c.l.b16 %v354
        %v1075 = vunpack.c.h.b16 %v354
        %v1076 = vunpack.c.l.b16 %v355
        %v1077 = vunpack.c.h.b16 %v355
        %v1078 = vunpack.c.l.b16 %v356
        %v1079 = vunpack.c.h.b16 %v356
        %v1080 = vunpack.c.l.b16 %v357
        %v1081 = vunpack.c.h.b16 %v357
        %v1082 = vunpack.c.l.b16 %v358
        %v1083 = vunpack.c.h.b16 %v358
        %v1084 = vunpack.c.l.b16 %v359
        %v1085 = vunpack.c.h.b16 %v359
        %v1086 = vunpack.c.l.b16 %v360
        %v1087 = vunpack.c.h.b16 %v360
        %v1088 = vunpack.c.l.b16 %v361
        %v1089 = vunpack.c.h.b16 %v361
        %v1090 = vpack.c.b16 %v970, %v962
        %v1091 = vpack.c.b16 %v971, %v963
        %v1092 = vpack.c.b16 %v972, %v964
        %v1093 = vpack.c.b16 %v973, %v965
        %v1094 = vpack.c.b16 %v974, %v966
        %v1095 = vpack.c.b16 %v975, %v967
        %v1096 = vpack.c.b16 %v976, %v968
        %v1097 = vpack.c.b16 %v977, %v969
        %v1098 = vpack.c.b16 %v986, %v978
        %v1099 = vpack.c.b16 %v987, %v979
        %v1100 = vpack.c.b16 %v988, %v980
        %v1101 = vpack.c.b16 %v989, %v981
        %v1102 = vpack.c.b16 %v990, %v982
        %v1103 = vpack.c.b16 %v991, %v983
        %v1104 = vpack.c.b16 %v992, %v984
        %v1105 = vpack.c.b16 %v993, %v985
        %v1106 = vpack.c.b16 %v1002, %v994
        %v1107 = vpack.c.b16 %v1003, %v995
        %v1108 = vpack.c.b16 %v1004, %v996
        %v1109 = vpack.c.b16 %v1005, %v997
        %v1110 = vpack.c.b16 %v1006, %v998
        %v1111 = vpack.c.b16 %v1007, %v999
        %v1112 = vpack.c.b16 %v1008, %v1000
        %v1113 = vpack.c.b16 %v1009, %v1001
        %v1114 = vpack.c.b16 %v1018, %v1010
        %v1115 = vpack.c.b16 %v1019, %v1011
        %v1116 = vpack.c.b16 %v1020, %v1012
        %v1117 = vpack.c.b16 %v1021, %v1013
        %v1118 = vpack.c.b16 %v1022, %v1014
        %v1119 = vpack.c.b16 %v1023, %v1015
        %v1120 = vpack.c.b16 %v1024, %v1016
        %v1121 = vpack.c.b16 %v1025, %v1017
        %v1122 = vpack.c.b16 %v1034, %v1026
        %v1123 = vpack.c.b16 %v1035, %v1027
        %v1124 = vpack.c.b16 %v1036, %v1028
        %v1125 = vpack.c.b16 %v1037, %v1029
        %v1126 = vpack.c.b16 %v1038, %v1030
        %v1127 = vpack.c.b16 %v1039, %v1031
        %v1128 = vpack.c.b16 %v1040, %v1032
        %v1129 = vpack.c.b16 %v1041, %v1033
        %v1130 = vpack.c.b16 %v1050, %v1042
        %v1131 = vpack.c.b16 %v1051, %v1043
        %v1132 = vpack.c.b16 %v1052, %v1044
        %v1133 = vpack.c.b16 %v1053, %v1045
        %v1134 = vpack.c.b16 %v1054, %v1046
        %v1135 = vpack.c.b16 %v1055, %v1047
        %v1136 = vpack.c.b16 %v1056, %v1048
        %v1137 = vpack.c.b16 %v1057, %v1049
        %v1138 = vpack.c.b16 %v1066, %v1058
        %v1139 = vpack.c.b16 %v1067, %v1059
        %v1140 = vpack.c.b16 %v1068, %v1060
        %v1141 = vpack.c.b16 %v1069, %v1061
        %v1142 = vpack.c.b16 %v1070, %v1062
        %v1143 = vpack.c.b16 %v1071, %v1063
        %v1144 = vpack.c.b16 %v1072, %v1064
        %v1145 = vpack.c.b16 %v1073, %v1065
        %v1146 = vpack.c.b16 %v1082, %v1074
        %v1147 = vpack.c.b16 %v1083, %v1075
        %v1148 = vpack.c.b16 %v1084, %v1076
        %v1149 = vpack.c.b16 %v1085, %v1077
        %v1150 = vpack.c.b16 %v1086, %v1078
        %v1151 = vpack.c.b16 %v1087, %v1079
        %v1152 = vpack.c.b16 %v1088, %v1080
        %v1153 = vpack.c.b16 %v1089, %v1081
        %1218 = vmatpush.bf16.msra.mxu0 %v1146
        %1219 = vmatpush.bf16.msra.mxu0 %v1138
        %1220 = vmatpush.bf16.msra.mxu0 %v1130
        %1221 = vmatpush.bf16.msra.mxu0 %v1122
        %1222 = vmatpush.bf16.msra.mxu0 %v1114
        %1223 = vmatpush.bf16.msra.mxu0 %v1106
        %1224 = vmatpush.bf16.msra.mxu0 %v1098
        %1225 = vmatpush.bf16.msra.mxu0 %v1090
        %1226 = vmatmul.bf16.gmra.mxu0 %v290
        %v1227 = vpop.f32.mrf.mxu0
        %v1228 = vadd.f32 %v756, %v1227
        %v1229 = vpop.f32.mrf.mxu0
        %v1230 = vadd.f32 %v758, %v1229
        %1231 = vmatmul.bf16.gmra.mxu0 %v291
        %v1232 = vpop.f32.mrf.mxu0
        %v1233 = vadd.f32 %v761, %v1232
        %v1234 = vpop.f32.mrf.mxu0
        %v1235 = vadd.f32 %v763, %v1234
        %1236 = vdwg.mxu0
        %1237 = vmatpush.bf16.msra.mxu0 %v1147
        %1238 = vmatpush.bf16.msra.mxu0 %v1139
        %1239 = vmatpush.bf16.msra.mxu0 %v1131
        %1240 = vmatpush.bf16.msra.mxu0 %v1123
        %1241 = vmatpush.bf16.msra.mxu0 %v1115
        %1242 = vmatpush.bf16.msra.mxu0 %v1107
        %1243 = vmatpush.bf16.msra.mxu0 %v1099
        %1244 = vmatpush.bf16.msra.mxu0 %v1091
        %1245 = vmatmul.bf16.gmra.mxu0 %v290
        %v1246 = vpop.f32.mrf.mxu0
        %v1247 = vadd.f32 %v775, %v1246
        %v1248 = vpop.f32.mrf.mxu0
        %v1249 = vadd.f32 %v777, %v1248
        %1250 = vmatmul.bf16.gmra.mxu0 %v291
        %v1251 = vpop.f32.mrf.mxu0
        %v1252 = vadd.f32 %v780, %v1251
        %v1253 = vpop.f32.mrf.mxu0
        %v1254 = vadd.f32 %v782, %v1253
        %1255 = vdwg.mxu0
        %1256 = vmatpush.bf16.msra.mxu0 %v1148
        %1257 = vmatpush.bf16.msra.mxu0 %v1140
        %1258 = vmatpush.bf16.msra.mxu0 %v1132
        %1259 = vmatpush.bf16.msra.mxu0 %v1124
        %1260 = vmatpush.bf16.msra.mxu0 %v1116
        %1261 = vmatpush.bf16.msra.mxu0 %v1108
        %1262 = vmatpush.bf16.msra.mxu0 %v1100
        %1263 = vmatpush.bf16.msra.mxu0 %v1092
        %1264 = vmatmul.bf16.gmra.mxu0 %v290
        %v1265 = vpop.f32.mrf.mxu0
        %v1266 = vadd.f32 %v794, %v1265
        %v1267 = vpop.f32.mrf.mxu0
        %v1268 = vadd.f32 %v796, %v1267
        %1269 = vmatmul.bf16.gmra.mxu0 %v291
        %v1270 = vpop.f32.mrf.mxu0
        %v1271 = vadd.f32 %v799, %v1270
        %v1272 = vpop.f32.mrf.mxu0
        %v1273 = vadd.f32 %v801, %v1272
        %1274 = vdwg.mxu0
        %1275 = vmatpush.bf16.msra.mxu0 %v1149
        %1276 = vmatpush.bf16.msra.mxu0 %v1141
        %1277 = vmatpush.bf16.msra.mxu0 %v1133
        %1278 = vmatpush.bf16.msra.mxu0 %v1125
        %1279 = vmatpush.bf16.msra.mxu0 %v1117
        %1280 = vmatpush.bf16.msra.mxu0 %v1109
        %1281 = vmatpush.bf16.msra.mxu0 %v1101
        %1282 = vmatpush.bf16.msra.mxu0 %v1093
        %1283 = vmatmul.bf16.gmra.mxu0 %v290
        %v1284 = vpop.f32.mrf.mxu0
        %v1285 = vadd.f32 %v813, %v1284
        %v1286 = vpop.f32.mrf.mxu0
        %v1287 = vadd.f32 %v815, %v1286
        %1288 = vmatmul.bf16.gmra.mxu0 %v291
        %v1289 = vpop.f32.mrf.mxu0
        %v1290 = vadd.f32 %v818, %v1289
        %v1291 = vpop.f32.mrf.mxu0
        %v1292 = vadd.f32 %v820, %v1291
        %1293 = vdwg.mxu0
        %1294 = vmatpush.bf16.msra.mxu0 %v1150
        %1295 = vmatpush.bf16.msra.mxu0 %v1142
        %1296 = vmatpush.bf16.msra.mxu0 %v1134
        %1297 = vmatpush.bf16.msra.mxu0 %v1126
        %1298 = vmatpush.bf16.msra.mxu0 %v1118
        %1299 = vmatpush.bf16.msra.mxu0 %v1110
        %1300 = vmatpush.bf16.msra.mxu0 %v1102
        %1301 = vmatpush.bf16.msra.mxu0 %v1094
        %1302 = vmatmul.bf16.gmra.mxu0 %v290
        %v1303 = vpop.f32.mrf.mxu0
        %v1304 = vadd.f32 %v832, %v1303
        %v1305 = vpop.f32.mrf.mxu0
        %v1306 = vadd.f32 %v834, %v1305
        %1307 = vmatmul.bf16.gmra.mxu0 %v291
        %v1308 = vpop.f32.mrf.mxu0
        %v1309 = vadd.f32 %v837, %v1308
        %v1310 = vpop.f32.mrf.mxu0
        %v1311 = vadd.f32 %v839, %v1310
        %1312 = vdwg.mxu0
        %1313 = vmatpush.bf16.msra.mxu0 %v1151
        %1314 = vmatpush.bf16.msra.mxu0 %v1143
        %1315 = vmatpush.bf16.msra.mxu0 %v1135
        %1316 = vmatpush.bf16.msra.mxu0 %v1127
        %1317 = vmatpush.bf16.msra.mxu0 %v1119
        %1318 = vmatpush.bf16.msra.mxu0 %v1111
        %1319 = vmatpush.bf16.msra.mxu0 %v1103
        %1320 = vmatpush.bf16.msra.mxu0 %v1095
        %1321 = vmatmul.bf16.gmra.mxu0 %v290
        %v1322 = vpop.f32.mrf.mxu0
        %v1323 = vadd.f32 %v851, %v1322
        %v1324 = vpop.f32.mrf.mxu0
        %v1325 = vadd.f32 %v853, %v1324
        %1326 = vmatmul.bf16.gmra.mxu0 %v291
        %v1327 = vpop.f32.mrf.mxu0
        %v1328 = vadd.f32 %v856, %v1327
        %v1329 = vpop.f32.mrf.mxu0
        %v1330 = vadd.f32 %v858, %v1329
        %1331 = vdwg.mxu0
        %1332 = vmatpush.bf16.msra.mxu0 %v1152
        %1333 = vmatpush.bf16.msra.mxu0 %v1144
        %1334 = vmatpush.bf16.msra.mxu0 %v1136
        %1335 = vmatpush.bf16.msra.mxu0 %v1128
        %1336 = vmatpush.bf16.msra.mxu0 %v1120
        %1337 = vmatpush.bf16.msra.mxu0 %v1112
        %1338 = vmatpush.bf16.msra.mxu0 %v1104
        %1339 = vmatpush.bf16.msra.mxu0 %v1096
        %1340 = vmatmul.bf16.gmra.mxu0 %v290
        %v1341 = vpop.f32.mrf.mxu0
        %v1342 = vadd.f32 %v870, %v1341
        %v1343 = vpop.f32.mrf.mxu0
        %v1344 = vadd.f32 %v872, %v1343
        %1345 = vmatmul.bf16.gmra.mxu0 %v291
        %v1346 = vpop.f32.mrf.mxu0
        %v1347 = vadd.f32 %v875, %v1346
        %v1348 = vpop.f32.mrf.mxu0
        %v1349 = vadd.f32 %v877, %v1348
        %1350 = vdwg.mxu0
        %1351 = vmatpush.bf16.msra.mxu0 %v1153
        %1352 = vmatpush.bf16.msra.mxu0 %v1145
        %1353 = vmatpush.bf16.msra.mxu0 %v1137
        %1354 = vmatpush.bf16.msra.mxu0 %v1129
        %1355 = vmatpush.bf16.msra.mxu0 %v1121
        %1356 = vmatpush.bf16.msra.mxu0 %v1113
        %1357 = vmatpush.bf16.msra.mxu0 %v1105
        %1358 = vmatpush.bf16.msra.mxu0 %v1097
        %1359 = vmatmul.bf16.gmra.mxu0 %v290
        %v1360 = vpop.f32.mrf.mxu0
        %v1361 = vadd.f32 %v889, %v1360
        %v1362 = vpop.f32.mrf.mxu0
        %v1363 = vadd.f32 %v891, %v1362
        %1364 = vmatmul.bf16.gmra.mxu0 %v291
        %v1365 = vpop.f32.mrf.mxu0
        %v1366 = vadd.f32 %v894, %v1365
        %v1367 = vpop.f32.mrf.mxu0
        %v1368 = vadd.f32 %v896, %v1367
        %1369 = vdwg.mxu0
        %v1370 = vld [vmem:[%s4] sm:$0xff]
        %v1372 = vperm.slane %v1370, 0
        %v1373 = vperm.slane %v1370, 1
        %v1374 = vperm.slane %v1370, 2
        %v1375 = vperm.slane %v1370, 3
        %v1376 = vperm.slane %v1370, 4
        %v1377 = vperm.slane %v1370, 5
        %v1378 = vperm.slane %v1370, 6
        %v1379 = vperm.slane %v1370, 7
        %v1388 = vadd.f32 %v1228, %v1372
        %v1389 = vadd.f32 %v1247, %v1373
        %v1390 = vadd.f32 %v1266, %v1374
        %v1391 = vadd.f32 %v1285, %v1375
        %v1392 = vadd.f32 %v1304, %v1376
        %v1393 = vadd.f32 %v1323, %v1377
        %v1394 = vadd.f32 %v1342, %v1378
        %v1395 = vadd.f32 %v1361, %v1379
        %v1396 = vadd.f32 %v1230, %v1372
        %v1397 = vadd.f32 %v1249, %v1373
        %v1398 = vadd.f32 %v1268, %v1374
        %v1399 = vadd.f32 %v1287, %v1375
        %v1400 = vadd.f32 %v1306, %v1376
        %v1401 = vadd.f32 %v1325, %v1377
        %v1402 = vadd.f32 %v1344, %v1378
        %v1403 = vadd.f32 %v1363, %v1379
        %v1404 = vadd.f32 %v1233, %v1372
        %v1405 = vadd.f32 %v1252, %v1373
        %v1406 = vadd.f32 %v1271, %v1374
        %v1407 = vadd.f32 %v1290, %v1375
        %v1408 = vadd.f32 %v1309, %v1376
        %v1409 = vadd.f32 %v1328, %v1377
        %v1410 = vadd.f32 %v1347, %v1378
        %v1411 = vadd.f32 %v1366, %v1379
        %v1412 = vadd.f32 %v1235, %v1372
        %v1413 = vadd.f32 %v1254, %v1373
        %v1414 = vadd.f32 %v1273, %v1374
        %v1415 = vadd.f32 %v1292, %v1375
        %v1416 = vadd.f32 %v1311, %v1376
        %v1417 = vadd.f32 %v1330, %v1377
        %v1418 = vadd.f32 %v1349, %v1378
        %v1419 = vadd.f32 %v1368, %v1379
        %1420 = vst [vmem:[%s284] sm:$0xff] %v1388
        %1421 = vst [vmem:[%s284 + $0x8] sm:$0xff] %v1389
        %1422 = vst [vmem:[%s284 + $0x10] sm:$0xff] %v1390
        %1423 = vst [vmem:[%s284 + $0x18] sm:$0xff] %v1391
        %1424 = vst [vmem:[%s284 + $0x20] sm:$0xff] %v1392
        %1425 = vst [vmem:[%s284 + $0x28] sm:$0xff] %v1393
        %1426 = vst [vmem:[%s284 + $0x30] sm:$0xff] %v1394
        %1427 = vst [vmem:[%s284 + $0x38] sm:$0xff] %v1395
        %1428 = vst [vmem:[%s284 + $0x40] sm:$0xff] %v1396
        %1429 = vst [vmem:[%s284 + $0x48] sm:$0xff] %v1397
        %1430 = vst [vmem:[%s284 + $0x50] sm:$0xff] %v1398
        %1431 = vst [vmem:[%s284 + $0x58] sm:$0xff] %v1399
        %1432 = vst [vmem:[%s284 + $0x60] sm:$0xff] %v1400
        %1433 = vst [vmem:[%s284 + $0x68] sm:$0xff] %v1401
        %1434 = vst [vmem:[%s284 + $0x70] sm:$0xff] %v1402
        %1435 = vst [vmem:[%s284 + $0x78] sm:$0xff] %v1403
        %1436 = vst [vmem:[%s284 + $0x80] sm:$0xff] %v1404
        %1437 = vst [vmem:[%s284 + $0x88] sm:$0xff] %v1405
        %1438 = vst [vmem:[%s284 + $0x90] sm:$0xff] %v1406
        %1439 = vst [vmem:[%s284 + $0x98] sm:$0xff] %v1407
        %1440 = vst [vmem:[%s284 + $0xa0] sm:$0xff] %v1408
        %1441 = vst [vmem:[%s284 + $0xa8] sm:$0xff] %v1409
        %1442 = vst [vmem:[%s284 + $0xb0] sm:$0xff] %v1410
        %1443 = vst [vmem:[%s284 + $0xb8] sm:$0xff] %v1411
        %1444 = vst [vmem:[%s284 + $0xc0] sm:$0xff] %v1412
        %1445 = vst [vmem:[%s284 + $0xc8] sm:$0xff] %v1413
        %1446 = vst [vmem:[%s284 + $0xd0] sm:$0xff] %v1414
        %1447 = vst [vmem:[%s284 + $0xd8] sm:$0xff] %v1415
        %1448 = vst [vmem:[%s284 + $0xe0] sm:$0xff] %v1416
        %1449 = vst [vmem:[%s284 + $0xe8] sm:$0xff] %v1417
        %1450 = vst [vmem:[%s284 + $0xf0] sm:$0xff] %v1418
        %1451 = vst [vmem:[%s284 + $0xf8] sm:$0xff] %v1419
        %s1452 = smul.u32 4, %s18
        %p1453 = scmp.lt.s32.totalorder %s1452, 7
        %s1454 = scalar_select %p1453, %s1452, 7
        %s1455 = smul.addr %s1454, 8
        %s1456 = smul.addr %s1455, 8
        %s1457 = scalar_lea.vmem %s5, %s1456
        // Predicated region
        $region49: #{forward.7} parent=39 // pred_check
          %p1458 = pneg %p151
        $region50: #{forward.7} parent=39 // pred_check_branch
          %1460 = sbr.rel (%p1458) target = $region52
        $region51: #{forward.7} parent=39 // pred_region
          %s1461 = smul.u32 4, %s18
        $region52: #{forward.7} parent=39 // pred_fallthru
          _
      $region40: #{forward.7} parent=5 // pred_fallthru
        _
      %p1462 = scmp.le.s32.totalorder 2, %s13
      // Predicated region
      $region53: #{forward.7} parent=5 // pred_check
        %p1463 = pneg %p1462
      $region54: #{forward.7} parent=5 // pred_check_branch
        %1465 = sbr.rel (%p1463) target = $region56
      $region55: #{forward.7} parent=5 // pred_region
        %s1466 = ssub.s32 %s13, 2
        // Predicated region
        $region57: #{forward.7} parent=55 // pred_check
          %p1467 = pneg %p157
        $region58: #{forward.7} parent=55 // pred_check_branch
          %1469 = sbr.rel (%p1467) target = $region60
        $region59: #{forward.7} parent=55 // pred_region
          %s1470 = smul.u32 4, %s19
          %p1471 = scmp.lt.s32.totalorder %s1470, 7
          %s1472 = scalar_select %p1471, %s1470, 7
          %s1473 = smul.addr %s1472, 8
          %s1474 = smul.addr %s1473, 8
          %s1475 = scalar_lea.vmem %s5, %s1474
        $region60: #{forward.7} parent=55 // pred_fallthru
          _
      $region56: #{forward.7} parent=5 // pred_fallthru
        _
    $region6: #{forward.7} parent=1 // loop_footer
      %s17 = sadd.s32 1, %s13
    $region7: #{forward.7} parent=1 // loop_footer_branch
      %12 = sbr.rel target = $region3
    $region8: #{forward.7} parent=1 // loop_exit
      _
    %1476 = vsyncpa [#allocation3], 1
    %s1477 = scalar_lea.sflag [#allocation3], 1
    %1478 = vsyncpa %s1477, 1
    %1479 = vsyncpa [#allocation5], 1

// kernel: forward.6
$region0: #{forward.6}
  #allocation0 [shape = 'u32[]', space=smem, size = 0x4, offset = 0x4, fixed_abs, tag = 'smem constant byte address 0x4 - core index']
  #allocation1 [shape = 'u32[72,128]{1,0:T(1,128)}', space=vmem, size = 0x9000, scoped, tag = 'internal scratch']
  #allocation2 [shape = 'f32[8,128]{1,0:T(8,128)}', space=vmem, size = 0x1000, scoped, tag = 'scratch operand']
  #allocation3 [shape = 'f32[8,128]{1,0:T(8,128)}', space=vmem, size = 0x1000, scoped, tag = 'scratch operand']
  #allocation4 [shape = 'f32[8,128]{1,0:T(8,128)}', space=vmem, size = 0x1000, scoped, tag = 'scratch operand']
  #allocation5 [shape = 'f32[8,128]{1,0:T(8,128)}', space=vmem, size = 0x1000, scoped, tag = 'scratch operand']
  %s0 = inlined_call_operand.vmem [shape: f32[8,8,1024], index: 0, kind: input, shape index: {}, may-alias: {0,1}]
  %s1 = inlined_call_operand.vmem [shape: f32[8,8,1024], index: 1, kind: input, shape index: {}, may-alias: {0,1}]
  %s2 = inlined_call_operand.hbm [shape: bf16[2,128,512], index: 2, kind: input, shape index: {}]
  %s3 = inlined_call_operand.vmem [shape: f32[8,8,128], index: 3, kind: output, shape index: {0}]
  %s4 = inlined_call_operand.vmem [shape: f32[8,8,128], index: 4, kind: output, shape index: {1}]
  %5 = xla_tuple %s3, %s4
  %s6 = sld [smem:[#allocation0]]
  $region107: #{forward.6} parent=0
    _
  %s8 = ssub.s32 1, %s6
  %s9 = scalar_select 0, %s8, %s6
  $region1: #{forward.6} parent=0
    #allocation6 [shape = 'u8[131072]{0}', space=vmem, size = 0x20000, scoped, tag = 'input window, operand 0']
    #allocation7 [shape = 'u8[131072]{0}', space=vmem, size = 0x20000, scoped, tag = 'input window, operand 1']
    #allocation8 [shape = 'u8[262144]{0}', space=vmem, size = 0x40000, scoped, tag = 'input window, operand 2, single buffered']
    #allocation9 [shape = 's32[2]{0}', space=sflag, size = 0x8, scoped, tag = 'scoped memory for forward.6']
    %10 = vsyncpa [#allocation9], 0
    loop: start=0, step=1, limit=4
    $region2: #{forward.6} parent=1 // loop_pre_header
      _
    $region3: #{forward.6} parent=1 // loop_header
      %s12 = sphi 0, %s16
      %p13 = scmp.ge.s32.totalorder %s12, 4
      %s22 = sphi 0, %s24
      %s25 = sphi 0, %s22
      %s26 = sphi 0, %s25
      %s42 = sphi 0, %s26
      %s50 = sphi 0, %s52
      %s53 = sphi 0, %s50
      %s54 = sphi 0, %s53
      %s70 = sphi 0, %s54
      %s74 = sphi 0, %s74
      %s76 = sphi 0, %s74
      %s77 = sphi 0, %s76
      %s91 = sphi 0, %s77
      %s97 = sphi 0, %s99
      %s100 = sphi 0, %s97
      %s101 = sphi 0, %s100
      %s117 = sphi 0, %s101
      %s125 = sphi 0, %s127
      %s128 = sphi 0, %s125
      %s129 = sphi 0, %s128
      %s145 = sphi 0, %s129
    $region4: #{forward.6} parent=1 // loop_header_branch
      %15 = sbr.rel (%p13) target = $region8
    $region5: #{forward.6} parent=1 // loop_body
      %s17 = ssub.s32 %s12, 1
      %s18 = ssub.s32 %s12, 2
      %s19 = sadd.s32 %s12, 1
      %s20 = ssub.s32 %s12, %s19
      %p21 = scmp.eq.s32.totalorder %s20, 0
      %s23 = sadd.s32 %s22, 1
      %s24 = scalar_select %p21, %s22, %s23
      %p27 = pneg %p21
      %p28 = scmp.eq.s32.totalorder %s12, 1
      %p29 = por %p27, %p28
      %p30 = scmp.ne.s32.totalorder %s22, %s25
      %p31 = scmp.eq.s32.totalorder %s12, 0
      %p32 = por %p30, %p31
      %p33 = scmp.ne.s32.totalorder %s22, %s25
      %p34 = scmp.eq.s32.totalorder %s17, 1
      %p35 = por %p33, %p34
      %p36 = scmp.ne.s32.totalorder %s25, %s26
      %p37 = scmp.eq.s32.totalorder %s17, 0
      %p38 = por %p36, %p37
      %p39 = scmp.ne.s32.totalorder %s25, %s26
      %p40 = scmp.eq.s32.totalorder %s18, 1
      %p41 = por %p39, %p40
      %p43 = scmp.ne.s32.totalorder %s26, %s42
      %p44 = scmp.eq.s32.totalorder %s18, 0
      %p45 = por %p43, %p44
      %s46 = ssub.s32 1, %s12
      %s47 = ssub.s32 1, %s19
      %s48 = ssub.s32 %s46, %s47
      %p49 = scmp.eq.s32.totalorder %s48, 0
      %s51 = sadd.s32 %s50, 1
      %s52 = scalar_select %p49, %s50, %s51
      %p55 = pneg %p49
      %p56 = scmp.eq.s32.totalorder %s12, 1
      %p57 = por %p55, %p56
      %p58 = scmp.ne.s32.totalorder %s50, %s53
      %p59 = scmp.eq.s32.totalorder %s12, 0
      %p60 = por %p58, %p59
      %p61 = scmp.ne.s32.totalorder %s50, %s53
      %p62 = scmp.eq.s32.totalorder %s17, 1
      %p63 = por %p61, %p62
      %p64 = scmp.ne.s32.totalorder %s53, %s54
      %p65 = scmp.eq.s32.totalorder %s17, 0
      %p66 = por %p64, %p65
      %p67 = scmp.ne.s32.totalorder %s53, %s54
      %p68 = scmp.eq.s32.totalorder %s18, 1
      %p69 = por %p67, %p68
      %p71 = scmp.ne.s32.totalorder %s54, %s70
      %p72 = scmp.eq.s32.totalorder %s18, 0
      %p73 = por %p71, %p72
      %s75 = sadd.s32 %s74, 1
      %p78 = scmp.eq.s32.totalorder %s12, 1
      %p79 = scmp.ne.s32.totalorder %s74, %s76
      %p80 = scmp.eq.s32.totalorder %s12, 0
      %p81 = por %p79, %p80
      %p82 = scmp.ne.s32.totalorder %s74, %s76
      %p83 = scmp.eq.s32.totalorder %s17, 1
      %p84 = por %p82, %p83
      %p85 = scmp.ne.s32.totalorder %s76, %s77
      %p86 = scmp.eq.s32.totalorder %s17, 0
      %p87 = por %p85, %p86
      %p88 = scmp.ne.s32.totalorder %s76, %s77
      %p89 = scmp.eq.s32.totalorder %s18, 1
      %p90 = por %p88, %p89
      %p92 = scmp.ne.s32.totalorder %s77, %s91
      %p93 = scmp.eq.s32.totalorder %s18, 0
      %p94 = por %p92, %p93
      %s95 = ssub.s32 %s12, %s19
      %p96 = scmp.eq.s32.totalorder %s95, 0
      %s98 = sadd.s32 %s97, 1
      %s99 = scalar_select %p96, %s97, %s98
      %p102 = pneg %p96
      %p103 = scmp.eq.s32.totalorder %s12, 1
      %p104 = por %p102, %p103
      %p105 = scmp.ne.s32.totalorder %s97, %s100
      %p106 = scmp.eq.s32.totalorder %s12, 0
      %p107 = por %p105, %p106
      %p108 = scmp.ne.s32.totalorder %s97, %s100
      %p109 = scmp.eq.s32.totalorder %s17, 1
      %p110 = por %p108, %p109
      %p111 = scmp.ne.s32.totalorder %s100, %s101
      %p112 = scmp.eq.s32.totalorder %s17, 0
      %p113 = por %p111, %p112
      %p114 = scmp.ne.s32.totalorder %s100, %s101
      %p115 = scmp.eq.s32.totalorder %s18, 1
      %p116 = por %p114, %p115
      %p118 = scmp.ne.s32.totalorder %s101, %s117
      %p119 = scmp.eq.s32.totalorder %s18, 0
      %p120 = por %p118, %p119
      %s121 = ssub.s32 1, %s12
      %s122 = ssub.s32 1, %s19
      %s123 = ssub.s32 %s121, %s122
      %p124 = scmp.eq.s32.totalorder %s123, 0
      %s126 = sadd.s32 %s125, 1
      %s127 = scalar_select %p124, %s125, %s126
      %p130 = pneg %p124
      %p131 = scmp.eq.s32.totalorder %s12, 1
      %p132 = por %p130, %p131
      %p133 = scmp.ne.s32.totalorder %s125, %s128
      %p134 = scmp.eq.s32.totalorder %s12, 0
      %p135 = por %p133, %p134
      %p136 = scmp.ne.s32.totalorder %s125, %s128
      %p137 = scmp.eq.s32.totalorder %s17, 1
      %p138 = por %p136, %p137
      %p139 = scmp.ne.s32.totalorder %s128, %s129
      %p140 = scmp.eq.s32.totalorder %s17, 0
      %p141 = por %p139, %p140
      %p142 = scmp.ne.s32.totalorder %s128, %s129
      %p143 = scmp.eq.s32.totalorder %s18, 1
      %p144 = por %p142, %p143
      %p146 = scmp.ne.s32.totalorder %s129, %s145
      %p147 = scmp.eq.s32.totalorder %s18, 0
      %p148 = por %p146, %p147
      %p149 = scmp.le.s32.totalorder 1, %s12
      %p150 = scmp.lt.s32.totalorder %s12, 3
      %p151 = pnand %p149, %p150
      %p152 = pneg %p151
      // Predicated region
      $region9: #{forward.6} parent=5 // pred_check
        _
      $region10: #{forward.6} parent=5 // pred_check_branch
        %154 = sbr.rel (%p151) target = $region12
      $region11: #{forward.6} parent=5 // pred_region
        %s155 = ssub.s32 %s12, 1
        // Predicated region
        $region13: #{forward.6} parent=11 // pred_check
          %p156 = pneg %p87
        $region14: #{forward.6} parent=11 // pred_check_branch
          %158 = sbr.rel (%p156) target = $region16
        $region15: #{forward.6} parent=11 // pred_region
          %160 = vsyncadd [#allocation9], 0
          %s161 = sshll.u32 %s2, 4
          %s162 = int_to_ptr.hbm [resolvable:$true] %s161
          %s163 = sshll.u32 [#allocation8], 4
          %s164 = int_to_ptr.vmem [resolvable:$true] %s163
          %169 = dma.hbm_to_vmem [thread:$0]  %s162, 8192, %s164, [#allocation9], 256, 256, 16
        $region16: #{forward.6} parent=11 // pred_fallthru
          _
      $region12: #{forward.6} parent=5 // pred_fallthru
        _
      %p170 = scmp.lt.s32.totalorder %s12, 2
      // Predicated region
      $region17: #{forward.6} parent=5 // pred_check
        %p171 = pneg %p170
      $region18: #{forward.6} parent=5 // pred_check_branch
        %173 = sbr.rel (%p171) target = $region20
      $region19: #{forward.6} parent=5 // pred_region
        // Predicated region
        $region21: #{forward.6} parent=19 // pred_check
          %p174 = pneg %p32
        $region22: #{forward.6} parent=19 // pred_check_branch
          %176 = sbr.rel (%p174) target = $region24
        $region23: #{forward.6} parent=19 // pred_region
          %s177 = sand.u32 %s22, 1
          %s178 = sand.u32 %s22, 1
          %s179 = smul.addr %s178, 128
          %s180 = scalar_lea.vmem [#allocation6], %s179
          %s181 = smul.u32 4, %s12
          %s182 = smul.addr %s181, 8
          %s183 = smul.addr %s182, 8
          %s184 = scalar_lea.vmem %s0, %s183
          // Predicated region
          $region25: #{forward.6} parent=23 // pred_check
            _
          $region26: #{forward.6} parent=23 // pred_check_branch
            %186 = sbr.rel (0) target = $region28
          $region27: #{forward.6} parent=23 // pred_region
            // Predicated region
            $region29: #{forward.6} parent=27 // pred_check
              _
            $region30: #{forward.6} parent=27 // pred_check_branch
              %188 = sbr.rel (0) target = $region32
            $region31: #{forward.6} parent=27 // pred_region
              loop: start=0, step=1, limit=1
              $region33: #{forward.6} parent=31 // loop_pre_header
                _
              $region34: #{forward.6} parent=31 // loop_header
                %s190 = sphi 0, %s194
                %p191 = scmp.ge.s32.totalorder %s190, 1
                %s195 = sphi %s184, %s184
                %s196 = sphi %s180, %s180
              $region35: #{forward.6} parent=31 // loop_header_branch
                %193 = sbr.rel (%p191) target = $region39
              $region36: #{forward.6} parent=31 // loop_body
                %v197 = vld [vmem:[%s195] sm:$0xff]
                %198 = vst [vmem:[%s196] sm:$0xff] %v197
                %v199 = vld [vmem:[%s195 + $0x8] sm:$0xff]
                %200 = vst [vmem:[%s196 + $0x8] sm:$0xff] %v199
                %v201 = vld [vmem:[%s195 + $0x10] sm:$0xff]
                %202 = vst [vmem:[%s196 + $0x10] sm:$0xff] %v201
                %v203 = vld [vmem:[%s195 + $0x18] sm:$0xff]
                %204 = vst [vmem:[%s196 + $0x18] sm:$0xff] %v203
                %v205 = vld [vmem:[%s195 + $0x40] sm:$0xff]
                %206 = vst [vmem:[%s196 + $0x20] sm:$0xff] %v205
                %v207 = vld [vmem:[%s195 + $0x48] sm:$0xff]
                %208 = vst [vmem:[%s196 + $0x28] sm:$0xff] %v207
                %v209 = vld [vmem:[%s195 + $0x50] sm:$0xff]
                %210 = vst [vmem:[%s196 + $0x30] sm:$0xff] %v209
                %v211 = vld [vmem:[%s195 + $0x58] sm:$0xff]
                %212 = vst [vmem:[%s196 + $0x38] sm:$0xff] %v211
                %v213 = vld [vmem:[%s195 + $0x80] sm:$0xff]
                %214 = vst [vmem:[%s196 + $0x40] sm:$0xff] %v213
                %v215 = vld [vmem:[%s195 + $0x88] sm:$0xff]
                %216 = vst [vmem:[%s196 + $0x48] sm:$0xff] %v215
                %v217 = vld [vmem:[%s195 + $0x90] sm:$0xff]
                %218 = vst [vmem:[%s196 + $0x50] sm:$0xff] %v217
                %v219 = vld [vmem:[%s195 + $0x98] sm:$0xff]
                %220 = vst [vmem:[%s196 + $0x58] sm:$0xff] %v219
                %v221 = vld [vmem:[%s195 + $0xc0] sm:$0xff]
                %222 = vst [vmem:[%s196 + $0x60] sm:$0xff] %v221
                %v223 = vld [vmem:[%s195 + $0xc8] sm:$0xff]
                %224 = vst [vmem:[%s196 + $0x68] sm:$0xff] %v223
                %v225 = vld [vmem:[%s195 + $0xd0] sm:$0xff]
                %226 = vst [vmem:[%s196 + $0x70] sm:$0xff] %v225
                %v227 = vld [vmem:[%s195 + $0xd8] sm:$0xff]
                %228 = vst [vmem:[%s196 + $0x78] sm:$0xff] %v227
              $region37: #{forward.6} parent=31 // loop_footer
                %s194 = sadd.s32 1, %s190
              $region38: #{forward.6} parent=31 // loop_footer_branch
                %189 = sbr.rel target = $region34
              $region39: #{forward.6} parent=31 // loop_exit
                _
            $region32: #{forward.6} parent=27 // pred_fallthru
              _
            // Predicated region
            $region40: #{forward.6} parent=27 // pred_check
              _
            $region41: #{forward.6} parent=27 // pred_check_branch
              %230 = sbr.rel target = $region43
            $region42: #{forward.6} parent=27 // pred_region
              _
            $region43: #{forward.6} parent=27 // pred_fallthru
              _
          $region28: #{forward.6} parent=23 // pred_fallthru
            _
          %231 = vnop
        $region24: #{forward.6} parent=19 // pred_fallthru
          _
        // Predicated region
        $region44: #{forward.6} parent=19 // pred_check
          %p232 = pneg %p60
        $region45: #{forward.6} parent=19 // pred_check_branch
          %234 = sbr.rel (%p232) target = $region47
        $region46: #{forward.6} parent=19 // pred_region
          %s235 = sand.u32 %s50, 1
          %s236 = sand.u32 %s50, 1
          %s237 = smul.addr %s236, 128
          %s238 = scalar_lea.vmem [#allocation7], %s237
          %s239 = ssub.s32 1, %s12
          %s240 = smul.u32 4, %s239
          %s241 = smul.addr %s240, 8
          %s242 = sadd.s32 4, %s241
          %s243 = smul.addr %s242, 8
          %s244 = scalar_lea.vmem %s1, %s243
          // Predicated region
          $region48: #{forward.6} parent=46 // pred_check
            _
          $region49: #{forward.6} parent=46 // pred_check_branch
            %246 = sbr.rel (0) target = $region51
          $region50: #{forward.6} parent=46 // pred_region
            // Predicated region
            $region52: #{forward.6} parent=50 // pred_check
              _
            $region53: #{forward.6} parent=50 // pred_check_branch
              %248 = sbr.rel (0) target = $region55
            $region54: #{forward.6} parent=50 // pred_region
              loop: start=0, step=1, limit=1
              $region56: #{forward.6} parent=54 // loop_pre_header
                _
              $region57: #{forward.6} parent=54 // loop_header
                %s250 = sphi 0, %s254
                %p251 = scmp.ge.s32.totalorder %s250, 1
                %s255 = sphi %s244, %s244
                %s256 = sphi %s238, %s238
              $region58: #{forward.6} parent=54 // loop_header_branch
                %253 = sbr.rel (%p251) target = $region62
              $region59: #{forward.6} parent=54 // loop_body
                %v257 = vld [vmem:[%s255] sm:$0xff]
                %258 = vst [vmem:[%s256] sm:$0xff] %v257
                %v259 = vld [vmem:[%s255 + $0x8] sm:$0xff]
                %260 = vst [vmem:[%s256 + $0x8] sm:$0xff] %v259
                %v261 = vld [vmem:[%s255 + $0x10] sm:$0xff]
                %262 = vst [vmem:[%s256 + $0x10] sm:$0xff] %v261
                %v263 = vld [vmem:[%s255 + $0x18] sm:$0xff]
                %264 = vst [vmem:[%s256 + $0x18] sm:$0xff] %v263
                %v265 = vld [vmem:[%s255 + $0x40] sm:$0xff]
                %266 = vst [vmem:[%s256 + $0x20] sm:$0xff] %v265
                %v267 = vld [vmem:[%s255 + $0x48] sm:$0xff]
                %268 = vst [vmem:[%s256 + $0x28] sm:$0xff] %v267
                %v269 = vld [vmem:[%s255 + $0x50] sm:$0xff]
                %270 = vst [vmem:[%s256 + $0x30] sm:$0xff] %v269
                %v271 = vld [vmem:[%s255 + $0x58] sm:$0xff]
                %272 = vst [vmem:[%s256 + $0x38] sm:$0xff] %v271
                %v273 = vld [vmem:[%s255 + $0x80] sm:$0xff]
                %274 = vst [vmem:[%s256 + $0x40] sm:$0xff] %v273
                %v275 = vld [vmem:[%s255 + $0x88] sm:$0xff]
                %276 = vst [vmem:[%s256 + $0x48] sm:$0xff] %v275
                %v277 = vld [vmem:[%s255 + $0x90] sm:$0xff]
                %278 = vst [vmem:[%s256 + $0x50] sm:$0xff] %v277
                %v279 = vld [vmem:[%s255 + $0x98] sm:$0xff]
                %280 = vst [vmem:[%s256 + $0x58] sm:$0xff] %v279
                %v281 = vld [vmem:[%s255 + $0xc0] sm:$0xff]
                %282 = vst [vmem:[%s256 + $0x60] sm:$0xff] %v281
                %v283 = vld [vmem:[%s255 + $0xc8] sm:$0xff]
                %284 = vst [vmem:[%s256 + $0x68] sm:$0xff] %v283
                %v285 = vld [vmem:[%s255 + $0xd0] sm:$0xff]
                %286 = vst [vmem:[%s256 + $0x70] sm:$0xff] %v285
                %v287 = vld [vmem:[%s255 + $0xd8] sm:$0xff]
                %288 = vst [vmem:[%s256 + $0x78] sm:$0xff] %v287
              $region60: #{forward.6} parent=54 // loop_footer
                %s254 = sadd.s32 1, %s250
              $region61: #{forward.6} parent=54 // loop_footer_branch
                %249 = sbr.rel target = $region57
              $region62: #{forward.6} parent=54 // loop_exit
                _
            $region55: #{forward.6} parent=50 // pred_fallthru
              _
            // Predicated region
            $region63: #{forward.6} parent=50 // pred_check
              _
            $region64: #{forward.6} parent=50 // pred_check_branch
              %290 = sbr.rel target = $region66
            $region65: #{forward.6} parent=50 // pred_region
              _
            $region66: #{forward.6} parent=50 // pred_fallthru
              _
          $region51: #{forward.6} parent=46 // pred_fallthru
            _
          %291 = vnop
        $region47: #{forward.6} parent=19 // pred_fallthru
          _
      $region20: #{forward.6} parent=5 // pred_fallthru
        _
      %p292 = scmp.le.s32.totalorder 1, %s12
      %p293 = scmp.lt.s32.totalorder %s12, 3
      %p294 = pnand %p292, %p293
      %p295 = pneg %p294
      // Predicated region
      $region67: #{forward.6} parent=5 // pred_check
        _
      $region68: #{forward.6} parent=5 // pred_check_branch
        %297 = sbr.rel (%p294) target = $region70
      $region69: #{forward.6} parent=5 // pred_region
        %s298 = ssub.s32 %s12, 1
        %s299 = sand.u32 %s25, 1
        %s300 = sand.u32 %s25, 1
        %s301 = smul.addr %s300, 128
        %s302 = scalar_lea.vmem [#allocation6], %s301
        // Predicated region
        $region71: #{forward.6} parent=69 // pred_check
          %p303 = pneg %p38
        $region72: #{forward.6} parent=69 // pred_check_branch
          %305 = sbr.rel (%p303) target = $region74
        $region73: #{forward.6} parent=69 // pred_region
          _
        $region74: #{forward.6} parent=69 // pred_fallthru
          _
        %s306 = sand.u32 %s53, 1
        %s307 = sand.u32 %s53, 1
        %s308 = smul.addr %s307, 128
        %s309 = scalar_lea.vmem [#allocation7], %s308
        // Predicated region
        $region75: #{forward.6} parent=69 // pred_check
          %p310 = pneg %p66
        $region76: #{forward.6} parent=69 // pred_check_branch
          %312 = sbr.rel (%p310) target = $region78
        $region77: #{forward.6} parent=69 // pred_region
          _
        $region78: #{forward.6} parent=69 // pred_fallthru
          _
        // Predicated region
        $region79: #{forward.6} parent=69 // pred_check
          %p313 = pneg %p87
        $region80: #{forward.6} parent=69 // pred_check_branch
          %315 = sbr.rel (%p313) target = $region82
        $region81: #{forward.6} parent=69 // pred_region
          %317 = dma.done [#allocation9], 8192
        $region82: #{forward.6} parent=69 // pred_fallthru
          _
        %s318 = sand.u32 %s25, 1
        %s319 = sand.u32 %s25, 1
        %s320 = smul.addr %s319, 128
        %s321 = scalar_lea.vmem [#allocation6], %s320
        %p322 = pneg %p38
        %p323 = pneg %p35
        %s324 = sand.u32 %s53, 1
        %s325 = sand.u32 %s53, 1
        %s326 = smul.addr %s325, 128
        %s327 = scalar_lea.vmem [#allocation7], %s326
        %p328 = pneg %p66
        %p329 = pneg %p63
        %p330 = pneg %p87
        %p331 = pneg %p84
        %p332 = pneg %p113
        %p333 = pneg %p110
        %s334 = smul.u32 4, %s17
        %p335 = scmp.lt.s32.totalorder %s334, 7
        %s336 = scalar_select %p335, %s334, 7
        %s337 = smul.addr %s336, 8
        %s338 = scalar_lea.vmem %s3, %s337
        %p339 = pneg %p141
        %p340 = pneg %p138
        %s341 = ssub.s32 1, %s17
        %s342 = smul.u32 4, %s341
        %p343 = scmp.lt.s32.totalorder %s342, 7
        %s344 = scalar_select %p343, %s342, 7
        %s345 = smul.addr %s344, 8
        %s346 = scalar_lea.vmem %s4, %s345
        %s347 = smul.u32 4, %s17
        %s348 = ssub.s32 1, %s17
        %s349 = smul.u32 4, %s348
        %s350 = smul.u32 4, %s17
        %p351 = scmp.lt.s32.totalorder %s350, 7
        %s352 = scalar_select %p351, %s350, 7
        %s353 = smul.addr %s352, 8
        %s354 = scalar_lea.vmem %s3, %s353
        %s355 = smul.u32 4, %s17
        %s356 = ssub.s32 1, %s17
        %s357 = smul.u32 4, %s356
        %p358 = scmp.lt.s32.totalorder %s357, 7
        %s359 = scalar_select %p358, %s357, 7
        %s360 = smul.addr %s359, 8
        %s361 = scalar_lea.vmem %s4, %s360
        %s362 = ssub.s32 1, %s17
        %s363 = smul.u32 4, %s362
        %p364 = scmp.eq.s32.totalorder %s17, 0
        // Predicated region
        $region83: #{forward.6} parent=69 // pred_check
          %p365 = pneg %p364
        $region84: #{forward.6} parent=69 // pred_check_branch
          %367 = sbr.rel (%p365) target = $region86
        $region85: #{forward.6} parent=69 // pred_region
          %368 = vst [vmem:[#allocation2] sm:$0xff] 0.0
          %369 = vst [vmem:[#allocation3] sm:$0xff] 0.0
          %370 = vst [vmem:[#allocation4] sm:$0xff] 0.0
          %371 = vst [vmem:[#allocation5] sm:$0xff] 0.0
        $region86: #{forward.6} parent=69 // pred_fallthru
          _
        %v372 = vld [vmem:[#allocation8] sm:$0xff]
        %v373 = vld [vmem:[#allocation8 + $0x8] sm:$0xff]
        %v374 = vld [vmem:[#allocation8 + $0x10] sm:$0xff]
        %v375 = vld [vmem:[#allocation8 + $0x18] sm:$0xff]
        %v376 = vld [vmem:[#allocation8 + $0x20] sm:$0xff]
        %v377 = vld [vmem:[#allocation8 + $0x28] sm:$0xff]
        %v378 = vld [vmem:[#allocation8 + $0x30] sm:$0xff]
        %v379 = vld [vmem:[#allocation8 + $0x38] sm:$0xff]
        %v380 = vld [vmem:[#allocation8 + $0x40] sm:$0xff]
        %v381 = vld [vmem:[#allocation8 + $0x48] sm:$0xff]
        %v382 = vld [vmem:[#allocation8 + $0x50] sm:$0xff]
        %v383 = vld [vmem:[#allocation8 + $0x58] sm:$0xff]
        %v384 = vld [vmem:[#allocation8 + $0x60] sm:$0xff]
        %v385 = vld [vmem:[#allocation8 + $0x68] sm:$0xff]
        %v386 = vld [vmem:[#allocation8 + $0x70] sm:$0xff]
        %v387 = vld [vmem:[#allocation8 + $0x78] sm:$0xff]
        %v388 = vld [vmem:[#allocation8 + $0x80] sm:$0xff]
        %v389 = vld [vmem:[#allocation8 + $0x88] sm:$0xff]
        %v390 = vld [vmem:[#allocation8 + $0x90] sm:$0xff]
        %v391 = vld [vmem:[#allocation8 + $0x98] sm:$0xff]
        %v392 = vld [vmem:[#allocation8 + $0xa0] sm:$0xff]
        %v393 = vld [vmem:[#allocation8 + $0xa8] sm:$0xff]
        %v394 = vld [vmem:[#allocation8 + $0xb0] sm:$0xff]
        %v395 = vld [vmem:[#allocation8 + $0xb8] sm:$0xff]
        %v396 = vld [vmem:[#allocation8 + $0xc0] sm:$0xff]
        %v397 = vld [vmem:[#allocation8 + $0xc8] sm:$0xff]
        %v398 = vld [vmem:[#allocation8 + $0xd0] sm:$0xff]
        %v399 = vld [vmem:[#allocation8 + $0xd8] sm:$0xff]
        %v400 = vld [vmem:[#allocation8 + $0xe0] sm:$0xff]
        %v401 = vld [vmem:[#allocation8 + $0xe8] sm:$0xff]
        %v402 = vld [vmem:[#allocation8 + $0xf0] sm:$0xff]
        %v403 = vld [vmem:[#allocation8 + $0xf8] sm:$0xff]
        %s404 = scalar_lea.vmem [#allocation8], 256
        %v405 = vld [vmem:[%s404] sm:$0xff]
        %v406 = vld [vmem:[%s404 + $0x8] sm:$0xff]
        %v407 = vld [vmem:[%s404 + $0x10] sm:$0xff]
        %v408 = vld [vmem:[%s404 + $0x18] sm:$0xff]
        %v409 = vld [vmem:[%s404 + $0x20] sm:$0xff]
        %v410 = vld [vmem:[%s404 + $0x28] sm:$0xff]
        %v411 = vld [vmem:[%s404 + $0x30] sm:$0xff]
        %v412 = vld [vmem:[%s404 + $0x38] sm:$0xff]
        %v413 = vld [vmem:[%s404 + $0x40] sm:$0xff]
        %v414 = vld [vmem:[%s404 + $0x48] sm:$0xff]
        %v415 = vld [vmem:[%s404 + $0x50] sm:$0xff]
        %v416 = vld [vmem:[%s404 + $0x58] sm:$0xff]
        %v417 = vld [vmem:[%s404 + $0x60] sm:$0xff]
        %v418 = vld [vmem:[%s404 + $0x68] sm:$0xff]
        %v419 = vld [vmem:[%s404 + $0x70] sm:$0xff]
        %v420 = vld [vmem:[%s404 + $0x78] sm:$0xff]
        %v421 = vld [vmem:[%s404 + $0x80] sm:$0xff]
        %v422 = vld [vmem:[%s404 + $0x88] sm:$0xff]
        %v423 = vld [vmem:[%s404 + $0x90] sm:$0xff]
        %v424 = vld [vmem:[%s404 + $0x98] sm:$0xff]
        %v425 = vld [vmem:[%s404 + $0xa0] sm:$0xff]
        %v426 = vld [vmem:[%s404 + $0xa8] sm:$0xff]
        %v427 = vld [vmem:[%s404 + $0xb0] sm:$0xff]
        %v428 = vld [vmem:[%s404 + $0xb8] sm:$0xff]
        %v429 = vld [vmem:[%s404 + $0xc0] sm:$0xff]
        %v430 = vld [vmem:[%s404 + $0xc8] sm:$0xff]
        %v431 = vld [vmem:[%s404 + $0xd0] sm:$0xff]
        %v432 = vld [vmem:[%s404 + $0xd8] sm:$0xff]
        %v433 = vld [vmem:[%s404 + $0xe0] sm:$0xff]
        %v434 = vld [vmem:[%s404 + $0xe8] sm:$0xff]
        %v435 = vld [vmem:[%s404 + $0xf0] sm:$0xff]
        %v436 = vld [vmem:[%s404 + $0xf8] sm:$0xff]
        %v437 = vld [vmem:[#allocation2] sm:$0xff]
        %v438 = vld [vmem:[#allocation3] sm:$0xff]
        %v439 = vld [vmem:[#allocation4] sm:$0xff]
        %v440 = vld [vmem:[#allocation5] sm:$0xff]
        %v441 = vld [vmem:[%s302] sm:$0xff]
        %v442 = vld [vmem:[%s302 + $0x8] sm:$0xff]
        %v443 = vld [vmem:[%s302 + $0x10] sm:$0xff]
        %v444 = vld [vmem:[%s302 + $0x18] sm:$0xff]
        %v445 = vpack.c.bf16 %v437, %v437
        %v478 = vunpack.c.l.b16 %v372
        %v479 = vunpack.c.h.b16 %v372
        %v480 = vunpack.c.l.b16 %v373
        %v481 = vunpack.c.h.b16 %v373
        %v482 = vunpack.c.l.b16 %v374
        %v483 = vunpack.c.h.b16 %v374
        %v484 = vunpack.c.l.b16 %v375
        %v485 = vunpack.c.h.b16 %v375
        %v486 = vunpack.c.l.b16 %v376
        %v487 = vunpack.c.h.b16 %v376
        %v488 = vunpack.c.l.b16 %v377
        %v489 = vunpack.c.h.b16 %v377
        %v490 = vunpack.c.l.b16 %v378
        %v491 = vunpack.c.h.b16 %v378
        %v492 = vunpack.c.l.b16 %v379
        %v493 = vunpack.c.h.b16 %v379
        %v494 = vunpack.c.l.b16 %v380
        %v495 = vunpack.c.h.b16 %v380
        %v496 = vunpack.c.l.b16 %v381
        %v497 = vunpack.c.h.b16 %v381
        %v498 = vunpack.c.l.b16 %v382
        %v499 = vunpack.c.h.b16 %v382
        %v500 = vunpack.c.l.b16 %v383
        %v501 = vunpack.c.h.b16 %v383
        %v502 = vunpack.c.l.b16 %v384
        %v503 = vunpack.c.h.b16 %v384
        %v504 = vunpack.c.l.b16 %v385
        %v505 = vunpack.c.h.b16 %v385
        %v506 = vunpack.c.l.b16 %v386
        %v507 = vunpack.c.h.b16 %v386
        %v508 = vunpack.c.l.b16 %v387
        %v509 = vunpack.c.h.b16 %v387
        %v510 = vunpack.c.l.b16 %v388
        %v511 = vunpack.c.h.b16 %v388
        %v512 = vunpack.c.l.b16 %v389
        %v513 = vunpack.c.h.b16 %v389
        %v514 = vunpack.c.l.b16 %v390
        %v515 = vunpack.c.h.b16 %v390
        %v516 = vunpack.c.l.b16 %v391
        %v517 = vunpack.c.h.b16 %v391
        %v518 = vunpack.c.l.b16 %v392
        %v519 = vunpack.c.h.b16 %v392
        %v520 = vunpack.c.l.b16 %v393
        %v521 = vunpack.c.h.b16 %v393
        %v522 = vunpack.c.l.b16 %v394
        %v523 = vunpack.c.h.b16 %v394
        %v524 = vunpack.c.l.b16 %v395
        %v525 = vunpack.c.h.b16 %v395
        %v526 = vunpack.c.l.b16 %v396
        %v527 = vunpack.c.h.b16 %v396
        %v528 = vunpack.c.l.b16 %v397
        %v529 = vunpack.c.h.b16 %v397
        %v530 = vunpack.c.l.b16 %v398
        %v531 = vunpack.c.h.b16 %v398
        %v532 = vunpack.c.l.b16 %v399
        %v533 = vunpack.c.h.b16 %v399
        %v534 = vunpack.c.l.b16 %v400
        %v535 = vunpack.c.h.b16 %v400
        %v536 = vunpack.c.l.b16 %v401
        %v537 = vunpack.c.h.b16 %v401
        %v538 = vunpack.c.l.b16 %v402
        %v539 = vunpack.c.h.b16 %v402
        %v540 = vunpack.c.l.b16 %v403
        %v541 = vunpack.c.h.b16 %v403
        %v542 = vpack.c.b16 %v482, %v478
        %v543 = vpack.c.b16 %v483, %v479
        %v544 = vpack.c.b16 %v484, %v480
        %v545 = vpack.c.b16 %v485, %v481
        %v546 = vpack.c.b16 %v490, %v486
        %v547 = vpack.c.b16 %v491, %v487
        %v548 = vpack.c.b16 %v492, %v488
        %v549 = vpack.c.b16 %v493, %v489
        %v550 = vpack.c.b16 %v498, %v494
        %v551 = vpack.c.b16 %v499, %v495
        %v552 = vpack.c.b16 %v500, %v496
        %v553 = vpack.c.b16 %v501, %v497
        %v554 = vpack.c.b16 %v506, %v502
        %v555 = vpack.c.b16 %v507, %v503
        %v556 = vpack.c.b16 %v508, %v504
        %v557 = vpack.c.b16 %v509, %v505
        %v558 = vpack.c.b16 %v514, %v510
        %v559 = vpack.c.b16 %v515, %v511
        %v560 = vpack.c.b16 %v516, %v512
        %v561 = vpack.c.b16 %v517, %v513
        %v562 = vpack.c.b16 %v522, %v518
        %v563 = vpack.c.b16 %v523, %v519
        %v564 = vpack.c.b16 %v524, %v520
        %v565 = vpack.c.b16 %v525, %v521
        %v566 = vpack.c.b16 %v530, %v526
        %v567 = vpack.c.b16 %v531, %v527
        %v568 = vpack.c.b16 %v532, %v528
        %v569 = vpack.c.b16 %v533, %v529
        %v570 = vpack.c.b16 %v538, %v534
        %v571 = vpack.c.b16 %v539, %v535
        %v572 = vpack.c.b16 %v540, %v536
        %v573 = vpack.c.b16 %v541, %v537
        %606 = vmatpush.bf16.msra.mxu0 %v570
        %607 = vmatpush.bf16.msra.mxu0 %v566
        %608 = vmatpush.bf16.msra.mxu0 %v562
        %609 = vmatpush.bf16.msra.mxu0 %v558
        %610 = vmatpush.bf16.msra.mxu0 %v554
        %611 = vmatpush.bf16.msra.mxu0 %v550
        %612 = vmatpush.bf16.msra.mxu0 %v546
        %613 = vmatpush.bf16.msra.mxu0 %v542
        %614 = vmatmul.bf16.gmra.mxu0 %v445
        %v615 = vpop.f32.mrf.mxu0
        %v616 = vadd.f32 0.0, %v615
        %v617 = vpop.f32.mrf.mxu0
        %618 = vdwg.mxu0
        %619 = vmatpush.bf16.msra.mxu0 %v571
        %620 = vmatpush.bf16.msra.mxu0 %v567
        %621 = vmatpush.bf16.msra.mxu0 %v563
        %622 = vmatpush.bf16.msra.mxu0 %v559
        %623 = vmatpush.bf16.msra.mxu0 %v555
        %624 = vmatpush.bf16.msra.mxu0 %v551
        %625 = vmatpush.bf16.msra.mxu0 %v547
        %626 = vmatpush.bf16.msra.mxu0 %v543
        %627 = vmatmul.bf16.gmra.mxu0 %v445
        %v628 = vpop.f32.mrf.mxu0
        %v629 = vadd.f32 0.0, %v628
        %v630 = vpop.f32.mrf.mxu0
        %631 = vdwg.mxu0
        %632 = vmatpush.bf16.msra.mxu0 %v572
        %633 = vmatpush.bf16.msra.mxu0 %v568
        %634 = vmatpush.bf16.msra.mxu0 %v564
        %635 = vmatpush.bf16.msra.mxu0 %v560
        %636 = vmatpush.bf16.msra.mxu0 %v556
        %637 = vmatpush.bf16.msra.mxu0 %v552
        %638 = vmatpush.bf16.msra.mxu0 %v548
        %639 = vmatpush.bf16.msra.mxu0 %v544
        %640 = vmatmul.bf16.gmra.mxu0 %v445
        %v641 = vpop.f32.mrf.mxu0
        %v642 = vadd.f32 0.0, %v641
        %v643 = vpop.f32.mrf.mxu0
        %644 = vdwg.mxu0
        %645 = vmatpush.bf16.msra.mxu0 %v573
        %646 = vmatpush.bf16.msra.mxu0 %v569
        %647 = vmatpush.bf16.msra.mxu0 %v565
        %648 = vmatpush.bf16.msra.mxu0 %v561
        %649 = vmatpush.bf16.msra.mxu0 %v557
        %650 = vmatpush.bf16.msra.mxu0 %v553
        %651 = vmatpush.bf16.msra.mxu0 %v549
        %652 = vmatpush.bf16.msra.mxu0 %v545
        %653 = vmatmul.bf16.gmra.mxu0 %v445
        %v654 = vpop.f32.mrf.mxu0
        %v655 = vadd.f32 0.0, %v654
        %v656 = vpop.f32.mrf.mxu0
        %657 = vdwg.mxu0
        %v658 = vadd.f32 %v441, %v616
        %v659 = vadd.f32 %v442, %v629
        %v660 = vadd.f32 %v443, %v642
        %v661 = vadd.f32 %v444, %v655
        %s662 = scalar_lea.vmem %s309, 96 [#allocation7]
        %v663 = vld [vmem:[%s662] sm:$0xff]
        %v664 = vld [vmem:[%s662 + $0x8] sm:$0xff]
        %v665 = vld [vmem:[%s662 + $0x10] sm:$0xff]
        %v666 = vld [vmem:[%s662 + $0x18] sm:$0xff]
        %v667 = vpack.c.bf16 %v439, %v439
        %v700 = vunpack.c.l.b16 %v405
        %v701 = vunpack.c.h.b16 %v405
        %v702 = vunpack.c.l.b16 %v406
        %v703 = vunpack.c.h.b16 %v406
        %v704 = vunpack.c.l.b16 %v407
        %v705 = vunpack.c.h.b16 %v407
        %v706 = vunpack.c.l.b16 %v408
        %v707 = vunpack.c.h.b16 %v408
        %v708 = vunpack.c.l.b16 %v409
        %v709 = vunpack.c.h.b16 %v409
        %v710 = vunpack.c.l.b16 %v410
        %v711 = vunpack.c.h.b16 %v410
        %v712 = vunpack.c.l.b16 %v411
        %v713 = vunpack.c.h.b16 %v411
        %v714 = vunpack.c.l.b16 %v412
        %v715 = vunpack.c.h.b16 %v412
        %v716 = vunpack.c.l.b16 %v413
        %v717 = vunpack.c.h.b16 %v413
        %v718 = vunpack.c.l.b16 %v414
        %v719 = vunpack.c.h.b16 %v414
        %v720 = vunpack.c.l.b16 %v415
        %v721 = vunpack.c.h.b16 %v415
        %v722 = vunpack.c.l.b16 %v416
        %v723 = vunpack.c.h.b16 %v416
        %v724 = vunpack.c.l.b16 %v417
        %v725 = vunpack.c.h.b16 %v417
        %v726 = vunpack.c.l.b16 %v418
        %v727 = vunpack.c.h.b16 %v418
        %v728 = vunpack.c.l.b16 %v419
        %v729 = vunpack.c.h.b16 %v419
        %v730 = vunpack.c.l.b16 %v420
        %v731 = vunpack.c.h.b16 %v420
        %v732 = vunpack.c.l.b16 %v421
        %v733 = vunpack.c.h.b16 %v421
        %v734 = vunpack.c.l.b16 %v422
        %v735 = vunpack.c.h.b16 %v422
        %v736 = vunpack.c.l.b16 %v423
        %v737 = vunpack.c.h.b16 %v423
        %v738 = vunpack.c.l.b16 %v424
        %v739 = vunpack.c.h.b16 %v424
        %v740 = vunpack.c.l.b16 %v425
        %v741 = vunpack.c.h.b16 %v425
        %v742 = vunpack.c.l.b16 %v426
        %v743 = vunpack.c.h.b16 %v426
        %v744 = vunpack.c.l.b16 %v427
        %v745 = vunpack.c.h.b16 %v427
        %v746 = vunpack.c.l.b16 %v428
        %v747 = vunpack.c.h.b16 %v428
        %v748 = vunpack.c.l.b16 %v429
        %v749 = vunpack.c.h.b16 %v429
        %v750 = vunpack.c.l.b16 %v430
        %v751 = vunpack.c.h.b16 %v430
        %v752 = vunpack.c.l.b16 %v431
        %v753 = vunpack.c.h.b16 %v431
        %v754 = vunpack.c.l.b16 %v432
        %v755 = vunpack.c.h.b16 %v432
        %v756 = vunpack.c.l.b16 %v433
        %v757 = vunpack.c.h.b16 %v433
        %v758 = vunpack.c.l.b16 %v434
        %v759 = vunpack.c.h.b16 %v434
        %v760 = vunpack.c.l.b16 %v435
        %v761 = vunpack.c.h.b16 %v435
        %v762 = vunpack.c.l.b16 %v436
        %v763 = vunpack.c.h.b16 %v436
        %v764 = vpack.c.b16 %v704, %v700
        %v765 = vpack.c.b16 %v705, %v701
        %v766 = vpack.c.b16 %v706, %v702
        %v767 = vpack.c.b16 %v707, %v703
        %v768 = vpack.c.b16 %v712, %v708
        %v769 = vpack.c.b16 %v713, %v709
        %v770 = vpack.c.b16 %v714, %v710
        %v771 = vpack.c.b16 %v715, %v711
        %v772 = vpack.c.b16 %v720, %v716
        %v773 = vpack.c.b16 %v721, %v717
        %v774 = vpack.c.b16 %v722, %v718
        %v775 = vpack.c.b16 %v723, %v719
        %v776 = vpack.c.b16 %v728, %v724
        %v777 = vpack.c.b16 %v729, %v725
        %v778 = vpack.c.b16 %v730, %v726
        %v779 = vpack.c.b16 %v731, %v727
        %v780 = vpack.c.b16 %v736, %v732
        %v781 = vpack.c.b16 %v737, %v733
        %v782 = vpack.c.b16 %v738, %v734
        %v783 = vpack.c.b16 %v739, %v735
        %v784 = vpack.c.b16 %v744, %v740
        %v785 = vpack.c.b16 %v745, %v741
        %v786 = vpack.c.b16 %v746, %v742
        %v787 = vpack.c.b16 %v747, %v743
        %v788 = vpack.c.b16 %v752, %v748
        %v789 = vpack.c.b16 %v753, %v749
        %v790 = vpack.c.b16 %v754, %v750
        %v791 = vpack.c.b16 %v755, %v751
        %v792 = vpack.c.b16 %v760, %v756
        %v793 = vpack.c.b16 %v761, %v757
        %v794 = vpack.c.b16 %v762, %v758
        %v795 = vpack.c.b16 %v763, %v759
        %828 = vmatpush.bf16.msra.mxu0 %v792
        %829 = vmatpush.bf16.msra.mxu0 %v788
        %830 = vmatpush.bf16.msra.mxu0 %v784
        %831 = vmatpush.bf16.msra.mxu0 %v780
        %832 = vmatpush.bf16.msra.mxu0 %v776
        %833 = vmatpush.bf16.msra.mxu0 %v772
        %834 = vmatpush.bf16.msra.mxu0 %v768
        %835 = vmatpush.bf16.msra.mxu0 %v764
        %836 = vmatmul.bf16.gmra.mxu0 %v667
        %v837 = vpop.f32.mrf.mxu0
        %v838 = vadd.f32 0.0, %v837
        %v839 = vpop.f32.mrf.mxu0
        %840 = vdwg.mxu0
        %841 = vmatpush.bf16.msra.mxu0 %v793
        %842 = vmatpush.bf16.msra.mxu0 %v789
        %843 = vmatpush.bf16.msra.mxu0 %v785
        %844 = vmatpush.bf16.msra.mxu0 %v781
        %845 = vmatpush.bf16.msra.mxu0 %v777
        %846 = vmatpush.bf16.msra.mxu0 %v773
        %847 = vmatpush.bf16.msra.mxu0 %v769
        %848 = vmatpush.bf16.msra.mxu0 %v765
        %849 = vmatmul.bf16.gmra.mxu0 %v667
        %v850 = vpop.f32.mrf.mxu0
        %v851 = vadd.f32 0.0, %v850
        %v852 = vpop.f32.mrf.mxu0
        %853 = vdwg.mxu0
        %854 = vmatpush.bf16.msra.mxu0 %v794
        %855 = vmatpush.bf16.msra.mxu0 %v790
        %856 = vmatpush.bf16.msra.mxu0 %v786
        %857 = vmatpush.bf16.msra.mxu0 %v782
        %858 = vmatpush.bf16.msra.mxu0 %v778
        %859 = vmatpush.bf16.msra.mxu0 %v774
        %860 = vmatpush.bf16.msra.mxu0 %v770
        %861 = vmatpush.bf16.msra.mxu0 %v766
        %862 = vmatmul.bf16.gmra.mxu0 %v667
        %v863 = vpop.f32.mrf.mxu0
        %v864 = vadd.f32 0.0, %v863
        %v865 = vpop.f32.mrf.mxu0
        %866 = vdwg.mxu0
        %867 = vmatpush.bf16.msra.mxu0 %v795
        %868 = vmatpush.bf16.msra.mxu0 %v791
        %869 = vmatpush.bf16.msra.mxu0 %v787
        %870 = vmatpush.bf16.msra.mxu0 %v783
        %871 = vmatpush.bf16.msra.mxu0 %v779
        %872 = vmatpush.bf16.msra.mxu0 %v775
        %873 = vmatpush.bf16.msra.mxu0 %v771
        %874 = vmatpush.bf16.msra.mxu0 %v767
        %875 = vmatmul.bf16.gmra.mxu0 %v667
        %v876 = vpop.f32.mrf.mxu0
        %v877 = vadd.f32 0.0, %v876
        %v878 = vpop.f32.mrf.mxu0
        %879 = vdwg.mxu0
        %v880 = vadd.f32 %v663, %v838
        %v881 = vadd.f32 %v664, %v851
        %v882 = vadd.f32 %v665, %v864
        %v883 = vadd.f32 %v666, %v877
        %v884 = vmul.f32 %v658, 0.5
        %v885 = vtanh.pop %v884
        %v886 = vmul.f32 %v885, 0.5
        %v887 = vadd.f32 %v886, 0.5
        %v888 = vmul.f32 %v659, 0.5
        %v889 = vtanh.pop %v888
        %v890 = vmul.f32 %v889, 0.5
        %v891 = vadd.f32 %v890, 0.5
        %v892 = vtanh.pop %v660
        %v893 = vmul.f32 %v661, 0.5
        %v894 = vtanh.pop %v893
        %v895 = vmul.f32 %v894, 0.5
        %v896 = vadd.f32 %v895, 0.5
        %v897 = vmul.f32 %v891, %v438
        %v898 = vmul.f32 %v887, %v892
        %v899 = vadd.f32 %v897, %v898
        %v900 = vtanh.pop %v899
        %v901 = vmul.f32 %v896, %v900
        %v902 = vmul.f32 %v880, 0.5
        %v903 = vtanh.pop %v902
        %v904 = vmul.f32 %v903, 0.5
        %v905 = vadd.f32 %v904, 0.5
        %v906 = vmul.f32 %v881, 0.5
        %v907 = vtanh.pop %v906
        %v908 = vmul.f32 %v907, 0.5
        %v909 = vadd.f32 %v908, 0.5
        %v910 = vtanh.pop %v882
        %v911 = vmul.f32 %v883, 0.5
        %v912 = vtanh.pop %v911
        %v913 = vmul.f32 %v912, 0.5
        %v914 = vadd.f32 %v913, 0.5
        %v915 = vmul.f32 %v909, %v440
        %v916 = vmul.f32 %v905, %v910
        %v917 = vadd.f32 %v915, %v916
        %v918 = vtanh.pop %v917
        %v919 = vmul.f32 %v914, %v918
        %920 = vst [vmem:[%s354] sm:$0xff] %v901
        %s921 = scalar_lea.vmem %s361, 24
        %922 = vst [vmem:[%s921] sm:$0xff] %v919
        %s923 = scalar_lea.vmem %s302, 32 [#allocation6]
        %v924 = vld [vmem:[%s923] sm:$0xff]
        %v925 = vld [vmem:[%s923 + $0x8] sm:$0xff]
        %v926 = vld [vmem:[%s923 + $0x10] sm:$0xff]
        %v927 = vld [vmem:[%s923 + $0x18] sm:$0xff]
        %v928 = vpack.c.bf16 %v901, %v901
        %929 = vmatpush.bf16.msra.mxu0 %v570
        %930 = vmatpush.bf16.msra.mxu0 %v566
        %931 = vmatpush.bf16.msra.mxu0 %v562
        %932 = vmatpush.bf16.msra.mxu0 %v558
        %933 = vmatpush.bf16.msra.mxu0 %v554
        %934 = vmatpush.bf16.msra.mxu0 %v550
        %935 = vmatpush.bf16.msra.mxu0 %v546
        %936 = vmatpush.bf16.msra.mxu0 %v542
        %937 = vmatmul.bf16.gmra.mxu0 %v928
        %v938 = vpop.f32.mrf.mxu0
        %v939 = vadd.f32 0.0, %v938
        %v940 = vpop.f32.mrf.mxu0
        %941 = vdwg.mxu0
        %942 = vmatpush.bf16.msra.mxu0 %v571
        %943 = vmatpush.bf16.msra.mxu0 %v567
        %944 = vmatpush.bf16.msra.mxu0 %v563
        %945 = vmatpush.bf16.msra.mxu0 %v559
        %946 = vmatpush.bf16.msra.mxu0 %v555
        %947 = vmatpush.bf16.msra.mxu0 %v551
        %948 = vmatpush.bf16.msra.mxu0 %v547
        %949 = vmatpush.bf16.msra.mxu0 %v543
        %950 = vmatmul.bf16.gmra.mxu0 %v928
        %v951 = vpop.f32.mrf.mxu0
        %v952 = vadd.f32 0.0, %v951
        %v953 = vpop.f32.mrf.mxu0
        %954 = vdwg.mxu0
        %955 = vmatpush.bf16.msra.mxu0 %v572
        %956 = vmatpush.bf16.msra.mxu0 %v568
        %957 = vmatpush.bf16.msra.mxu0 %v564
        %958 = vmatpush.bf16.msra.mxu0 %v560
        %959 = vmatpush.bf16.msra.mxu0 %v556
        %960 = vmatpush.bf16.msra.mxu0 %v552
        %961 = vmatpush.bf16.msra.mxu0 %v548
        %962 = vmatpush.bf16.msra.mxu0 %v544
        %963 = vmatmul.bf16.gmra.mxu0 %v928
        %v964 = vpop.f32.mrf.mxu0
        %v965 = vadd.f32 0.0, %v964
        %v966 = vpop.f32.mrf.mxu0
        %967 = vdwg.mxu0
        %968 = vmatpush.bf16.msra.mxu0 %v573
        %969 = vmatpush.bf16.msra.mxu0 %v569
        %970 = vmatpush.bf16.msra.mxu0 %v565
        %971 = vmatpush.bf16.msra.mxu0 %v561
        %972 = vmatpush.bf16.msra.mxu0 %v557
        %973 = vmatpush.bf16.msra.mxu0 %v553
        %974 = vmatpush.bf16.msra.mxu0 %v549
        %975 = vmatpush.bf16.msra.mxu0 %v545
        %976 = vmatmul.bf16.gmra.mxu0 %v928
        %v977 = vpop.f32.mrf.mxu0
        %v978 = vadd.f32 0.0, %v977
        %v979 = vpop.f32.mrf.mxu0
        %980 = vdwg.mxu0
        %v981 = vadd.f32 %v924, %v939
        %v982 = vadd.f32 %v925, %v952
        %v983 = vadd.f32 %v926, %v965
        %v984 = vadd.f32 %v927, %v978
        %s985 = scalar_lea.vmem %s309, 64 [#allocation7]
        %v986 = vld [vmem:[%s985] sm:$0xff]
        %v987 = vld [vmem:[%s985 + $0x8] sm:$0xff]
        %v988 = vld [vmem:[%s985 + $0x10] sm:$0xff]
        %v989 = vld [vmem:[%s985 + $0x18] sm:$0xff]
        %v990 = vpack.c.bf16 %v919, %v919
        %991 = vmatpush.bf16.msra.mxu0 %v792
        %992 = vmatpush.bf16.msra.mxu0 %v788
        %993 = vmatpush.bf16.msra.mxu0 %v784
        %994 = vmatpush.bf16.msra.mxu0 %v780
        %995 = vmatpush.bf16.msra.mxu0 %v776
        %996 = vmatpush.bf16.msra.mxu0 %v772
        %997 = vmatpush.bf16.msra.mxu0 %v768
        %998 = vmatpush.bf16.msra.mxu0 %v764
        %999 = vmatmul.bf16.gmra.mxu0 %v990
        %v1000 = vpop.f32.mrf.mxu0
        %v1001 = vadd.f32 0.0, %v1000
        %v1002 = vpop.f32.mrf.mxu0
        %1003 = vdwg.mxu0
        %1004 = vmatpush.bf16.msra.mxu0 %v793
        %1005 = vmatpush.bf16.msra.mxu0 %v789
        %1006 = vmatpush.bf16.msra.mxu0 %v785
        %1007 = vmatpush.bf16.msra.mxu0 %v781
        %1008 = vmatpush.bf16.msra.mxu0 %v777
        %1009 = vmatpush.bf16.msra.mxu0 %v773
        %1010 = vmatpush.bf16.msra.mxu0 %v769
        %1011 = vmatpush.bf16.msra.mxu0 %v765
        %1012 = vmatmul.bf16.gmra.mxu0 %v990
        %v1013 = vpop.f32.mrf.mxu0
        %v1014 = vadd.f32 0.0, %v1013
        %v1015 = vpop.f32.mrf.mxu0
        %1016 = vdwg.mxu0
        %1017 = vmatpush.bf16.msra.mxu0 %v794
        %1018 = vmatpush.bf16.msra.mxu0 %v790
        %1019 = vmatpush.bf16.msra.mxu0 %v786
        %1020 = vmatpush.bf16.msra.mxu0 %v782
        %1021 = vmatpush.bf16.msra.mxu0 %v778
        %1022 = vmatpush.bf16.msra.mxu0 %v774
        %1023 = vmatpush.bf16.msra.mxu0 %v770
        %1024 = vmatpush.bf16.msra.mxu0 %v766
        %1025 = vmatmul.bf16.gmra.mxu0 %v990
        %v1026 = vpop.f32.mrf.mxu0
        %v1027 = vadd.f32 0.0, %v1026
        %v1028 = vpop.f32.mrf.mxu0
        %1029 = vdwg.mxu0
        %1030 = vmatpush.bf16.msra.mxu0 %v795
        %1031 = vmatpush.bf16.msra.mxu0 %v791
        %1032 = vmatpush.bf16.msra.mxu0 %v787
        %1033 = vmatpush.bf16.msra.mxu0 %v783
        %1034 = vmatpush.bf16.msra.mxu0 %v779
        %1035 = vmatpush.bf16.msra.mxu0 %v775
        %1036 = vmatpush.bf16.msra.mxu0 %v771
        %1037 = vmatpush.bf16.msra.mxu0 %v767
        %1038 = vmatmul.bf16.gmra.mxu0 %v990
        %v1039 = vpop.f32.mrf.mxu0
        %v1040 = vadd.f32 0.0, %v1039
        %v1041 = vpop.f32.mrf.mxu0
        %1042 = vdwg.mxu0
        %v1043 = vadd.f32 %v986, %v1001
        %v1044 = vadd.f32 %v987, %v1014
        %v1045 = vadd.f32 %v988, %v1027
        %v1046 = vadd.f32 %v989, %v1040
        %v1047 = vmul.f32 %v981, 0.5
        %v1048 = vtanh.pop %v1047
        %v1049 = vmul.f32 %v1048, 0.5
        %v1050 = vadd.f32 %v1049, 0.5
        %v1051 = vmul.f32 %v982, 0.5
        %v1052 = vtanh.pop %v1051
        %v1053 = vmul.f32 %v1052, 0.5
        %v1054 = vadd.f32 %v1053, 0.5
        %v1055 = vtanh.pop %v983
        %v1056 = vmul.f32 %v984, 0.5
        %v1057 = vtanh.pop %v1056
        %v1058 = vmul.f32 %v1057, 0.5
        %v1059 = vadd.f32 %v1058, 0.5
        %v1060 = vmul.f32 %v1054, %v899
        %v1061 = vmul.f32 %v1050, %v1055
        %v1062 = vadd.f32 %v1060, %v1061
        %v1063 = vtanh.pop %v1062
        %v1064 = vmul.f32 %v1059, %v1063
        %v1065 = vmul.f32 %v1043, 0.5
        %v1066 = vtanh.pop %v1065
        %v1067 = vmul.f32 %v1066, 0.5
        %v1068 = vadd.f32 %v1067, 0.5
        %v1069 = vmul.f32 %v1044, 0.5
        %v1070 = vtanh.pop %v1069
        %v1071 = vmul.f32 %v1070, 0.5
        %v1072 = vadd.f32 %v1071, 0.5
        %v1073 = vtanh.pop %v1045
        %v1074 = vmul.f32 %v1046, 0.5
        %v1075 = vtanh.pop %v1074
        %v1076 = vmul.f32 %v1075, 0.5
        %v1077 = vadd.f32 %v1076, 0.5
        %v1078 = vmul.f32 %v1072, %v917
        %v1079 = vmul.f32 %v1068, %v1073
        %v1080 = vadd.f32 %v1078, %v1079
        %v1081 = vtanh.pop %v1080
        %v1082 = vmul.f32 %v1077, %v1081
        %s1083 = scalar_lea.vmem %s354, 8
        %1084 = vst [vmem:[%s1083] sm:$0xff] %v1064
        %s1085 = scalar_lea.vmem %s361, 16
        %1086 = vst [vmem:[%s1085] sm:$0xff] %v1082
        %s1087 = scalar_lea.vmem %s302, 64 [#allocation6]
        %v1088 = vld [vmem:[%s1087] sm:$0xff]
        %v1089 = vld [vmem:[%s1087 + $0x8] sm:$0xff]
        %v1090 = vld [vmem:[%s1087 + $0x10] sm:$0xff]
        %v1091 = vld [vmem:[%s1087 + $0x18] sm:$0xff]
        %v1092 = vpack.c.bf16 %v1064, %v1064
        %1093 = vmatpush.bf16.msra.mxu0 %v570
        %1094 = vmatpush.bf16.msra.mxu0 %v566
        %1095 = vmatpush.bf16.msra.mxu0 %v562
        %1096 = vmatpush.bf16.msra.mxu0 %v558
        %1097 = vmatpush.bf16.msra.mxu0 %v554
        %1098 = vmatpush.bf16.msra.mxu0 %v550
        %1099 = vmatpush.bf16.msra.mxu0 %v546
        %1100 = vmatpush.bf16.msra.mxu0 %v542
        %1101 = vmatmul.bf16.gmra.mxu0 %v1092
        %v1102 = vpop.f32.mrf.mxu0
        %v1103 = vadd.f32 0.0, %v1102
        %v1104 = vpop.f32.mrf.mxu0
        %1105 = vdwg.mxu0
        %1106 = vmatpush.bf16.msra.mxu0 %v571
        %1107 = vmatpush.bf16.msra.mxu0 %v567
        %1108 = vmatpush.bf16.msra.mxu0 %v563
        %1109 = vmatpush.bf16.msra.mxu0 %v559
        %1110 = vmatpush.bf16.msra.mxu0 %v555
        %1111 = vmatpush.bf16.msra.mxu0 %v551
        %1112 = vmatpush.bf16.msra.mxu0 %v547
        %1113 = vmatpush.bf16.msra.mxu0 %v543
        %1114 = vmatmul.bf16.gmra.mxu0 %v1092
        %v1115 = vpop.f32.mrf.mxu0
        %v1116 = vadd.f32 0.0, %v1115
        %v1117 = vpop.f32.mrf.mxu0
        %1118 = vdwg.mxu0
        %1119 = vmatpush.bf16.msra.mxu0 %v572
        %1120 = vmatpush.bf16.msra.mxu0 %v568
        %1121 = vmatpush.bf16.msra.mxu0 %v564
        %1122 = vmatpush.bf16.msra.mxu0 %v560
        %1123 = vmatpush.bf16.msra.mxu0 %v556
        %1124 = vmatpush.bf16.msra.mxu0 %v552
        %1125 = vmatpush.bf16.msra.mxu0 %v548
        %1126 = vmatpush.bf16.msra.mxu0 %v544
        %1127 = vmatmul.bf16.gmra.mxu0 %v1092
        %v1128 = vpop.f32.mrf.mxu0
        %v1129 = vadd.f32 0.0, %v1128
        %v1130 = vpop.f32.mrf.mxu0
        %1131 = vdwg.mxu0
        %1132 = vmatpush.bf16.msra.mxu0 %v573
        %1133 = vmatpush.bf16.msra.mxu0 %v569
        %1134 = vmatpush.bf16.msra.mxu0 %v565
        %1135 = vmatpush.bf16.msra.mxu0 %v561
        %1136 = vmatpush.bf16.msra.mxu0 %v557
        %1137 = vmatpush.bf16.msra.mxu0 %v553
        %1138 = vmatpush.bf16.msra.mxu0 %v549
        %1139 = vmatpush.bf16.msra.mxu0 %v545
        %1140 = vmatmul.bf16.gmra.mxu0 %v1092
        %v1141 = vpop.f32.mrf.mxu0
        %v1142 = vadd.f32 0.0, %v1141
        %v1143 = vpop.f32.mrf.mxu0
        %1144 = vdwg.mxu0
        %v1145 = vadd.f32 %v1088, %v1103
        %v1146 = vadd.f32 %v1089, %v1116
        %v1147 = vadd.f32 %v1090, %v1129
        %v1148 = vadd.f32 %v1091, %v1142
        %s1149 = scalar_lea.vmem %s309, 32 [#allocation7]
        %v1150 = vld [vmem:[%s1149] sm:$0xff]
        %v1151 = vld [vmem:[%s1149 + $0x8] sm:$0xff]
        %v1152 = vld [vmem:[%s1149 + $0x10] sm:$0xff]
        %v1153 = vld [vmem:[%s1149 + $0x18] sm:$0xff]
        %v1154 = vpack.c.bf16 %v1082, %v1082
        %1155 = vmatpush.bf16.msra.mxu0 %v792
        %1156 = vmatpush.bf16.msra.mxu0 %v788
        %1157 = vmatpush.bf16.msra.mxu0 %v784
        %1158 = vmatpush.bf16.msra.mxu0 %v780
        %1159 = vmatpush.bf16.msra.mxu0 %v776
        %1160 = vmatpush.bf16.msra.mxu0 %v772
        %1161 = vmatpush.bf16.msra.mxu0 %v768
        %1162 = vmatpush.bf16.msra.mxu0 %v764
        %1163 = vmatmul.bf16.gmra.mxu0 %v1154
        %v1164 = vpop.f32.mrf.mxu0
        %v1165 = vadd.f32 0.0, %v1164
        %v1166 = vpop.f32.mrf.mxu0
        %1167 = vdwg.mxu0
        %1168 = vmatpush.bf16.msra.mxu0 %v793
        %1169 = vmatpush.bf16.msra.mxu0 %v789
        %1170 = vmatpush.bf16.msra.mxu0 %v785
        %1171 = vmatpush.bf16.msra.mxu0 %v781
        %1172 = vmatpush.bf16.msra.mxu0 %v777
        %1173 = vmatpush.bf16.msra.mxu0 %v773
        %1174 = vmatpush.bf16.msra.mxu0 %v769
        %1175 = vmatpush.bf16.msra.mxu0 %v765
        %1176 = vmatmul.bf16.gmra.mxu0 %v1154
        %v1177 = vpop.f32.mrf.mxu0
        %v1178 = vadd.f32 0.0, %v1177
        %v1179 = vpop.f32.mrf.mxu0
        %1180 = vdwg.mxu0
        %1181 = vmatpush.bf16.msra.mxu0 %v794
        %1182 = vmatpush.bf16.msra.mxu0 %v790
        %1183 = vmatpush.bf16.msra.mxu0 %v786
        %1184 = vmatpush.bf16.msra.mxu0 %v782
        %1185 = vmatpush.bf16.msra.mxu0 %v778
        %1186 = vmatpush.bf16.msra.mxu0 %v774
        %1187 = vmatpush.bf16.msra.mxu0 %v770
        %1188 = vmatpush.bf16.msra.mxu0 %v766
        %1189 = vmatmul.bf16.gmra.mxu0 %v1154
        %v1190 = vpop.f32.mrf.mxu0
        %v1191 = vadd.f32 0.0, %v1190
        %v1192 = vpop.f32.mrf.mxu0
        %1193 = vdwg.mxu0
        %1194 = vmatpush.bf16.msra.mxu0 %v795
        %1195 = vmatpush.bf16.msra.mxu0 %v791
        %1196 = vmatpush.bf16.msra.mxu0 %v787
        %1197 = vmatpush.bf16.msra.mxu0 %v783
        %1198 = vmatpush.bf16.msra.mxu0 %v779
        %1199 = vmatpush.bf16.msra.mxu0 %v775
        %1200 = vmatpush.bf16.msra.mxu0 %v771
        %1201 = vmatpush.bf16.msra.mxu0 %v767
        %1202 = vmatmul.bf16.gmra.mxu0 %v1154
        %v1203 = vpop.f32.mrf.mxu0
        %v1204 = vadd.f32 0.0, %v1203
        %v1205 = vpop.f32.mrf.mxu0
        %1206 = vdwg.mxu0
        %v1207 = vadd.f32 %v1150, %v1165
        %v1208 = vadd.f32 %v1151, %v1178
        %v1209 = vadd.f32 %v1152, %v1191
        %v1210 = vadd.f32 %v1153, %v1204
        %v1211 = vmul.f32 %v1145, 0.5
        %v1212 = vtanh.pop %v1211
        %v1213 = vmul.f32 %v1212, 0.5
        %v1214 = vadd.f32 %v1213, 0.5
        %v1215 = vmul.f32 %v1146, 0.5
        %v1216 = vtanh.pop %v1215
        %v1217 = vmul.f32 %v1216, 0.5
        %v1218 = vadd.f32 %v1217, 0.5
        %v1219 = vtanh.pop %v1147
        %v1220 = vmul.f32 %v1148, 0.5
        %v1221 = vtanh.pop %v1220
        %v1222 = vmul.f32 %v1221, 0.5
        %v1223 = vadd.f32 %v1222, 0.5
        %v1224 = vmul.f32 %v1218, %v1062
        %v1225 = vmul.f32 %v1214, %v1219
        %v1226 = vadd.f32 %v1224, %v1225
        %v1227 = vtanh.pop %v1226
        %v1228 = vmul.f32 %v1223, %v1227
        %v1229 = vmul.f32 %v1207, 0.5
        %v1230 = vtanh.pop %v1229
        %v1231 = vmul.f32 %v1230, 0.5
        %v1232 = vadd.f32 %v1231, 0.5
        %v1233 = vmul.f32 %v1208, 0.5
        %v1234 = vtanh.pop %v1233
        %v1235 = vmul.f32 %v1234, 0.5
        %v1236 = vadd.f32 %v1235, 0.5
        %v1237 = vtanh.pop %v1209
        %v1238 = vmul.f32 %v1210, 0.5
        %v1239 = vtanh.pop %v1238
        %v1240 = vmul.f32 %v1239, 0.5
        %v1241 = vadd.f32 %v1240, 0.5
        %v1242 = vmul.f32 %v1236, %v1080
        %v1243 = vmul.f32 %v1232, %v1237
        %v1244 = vadd.f32 %v1242, %v1243
        %v1245 = vtanh.pop %v1244
        %v1246 = vmul.f32 %v1241, %v1245
        %s1247 = scalar_lea.vmem %s354, 16
        %1248 = vst [vmem:[%s1247] sm:$0xff] %v1228
        %s1249 = scalar_lea.vmem %s361, 8
        %1250 = vst [vmem:[%s1249] sm:$0xff] %v1246
        %s1251 = scalar_lea.vmem %s302, 96 [#allocation6]
        %v1252 = vld [vmem:[%s1251] sm:$0xff]
        %v1253 = vld [vmem:[%s1251 + $0x8] sm:$0xff]
        %v1254 = vld [vmem:[%s1251 + $0x10] sm:$0xff]
        %v1255 = vld [vmem:[%s1251 + $0x18] sm:$0xff]
        %v1256 = vpack.c.bf16 %v1228, %v1228
        %1257 = vmatpush.bf16.msra.mxu0 %v570
        %1258 = vmatpush.bf16.msra.mxu0 %v566
        %1259 = vmatpush.bf16.msra.mxu0 %v562
        %1260 = vmatpush.bf16.msra.mxu0 %v558
        %1261 = vmatpush.bf16.msra.mxu0 %v554
        %1262 = vmatpush.bf16.msra.mxu0 %v550
        %1263 = vmatpush.bf16.msra.mxu0 %v546
        %1264 = vmatpush.bf16.msra.mxu0 %v542
        %1265 = vmatmul.bf16.gmra.mxu0 %v1256
        %v1266 = vpop.f32.mrf.mxu0
        %v1267 = vadd.f32 0.0, %v1266
        %v1268 = vpop.f32.mrf.mxu0
        %1269 = vdwg.mxu0
        %1270 = vmatpush.bf16.msra.mxu0 %v571
        %1271 = vmatpush.bf16.msra.mxu0 %v567
        %1272 = vmatpush.bf16.msra.mxu0 %v563
        %1273 = vmatpush.bf16.msra.mxu0 %v559
        %1274 = vmatpush.bf16.msra.mxu0 %v555
        %1275 = vmatpush.bf16.msra.mxu0 %v551
        %1276 = vmatpush.bf16.msra.mxu0 %v547
        %1277 = vmatpush.bf16.msra.mxu0 %v543
        %1278 = vmatmul.bf16.gmra.mxu0 %v1256
        %v1279 = vpop.f32.mrf.mxu0
        %v1280 = vadd.f32 0.0, %v1279
        %v1281 = vpop.f32.mrf.mxu0
        %1282 = vdwg.mxu0
        %1283 = vmatpush.bf16.msra.mxu0 %v572
        %1284 = vmatpush.bf16.msra.mxu0 %v568
        %1285 = vmatpush.bf16.msra.mxu0 %v564
        %1286 = vmatpush.bf16.msra.mxu0 %v560
        %1287 = vmatpush.bf16.msra.mxu0 %v556
        %1288 = vmatpush.bf16.msra.mxu0 %v552
        %1289 = vmatpush.bf16.msra.mxu0 %v548
        %1290 = vmatpush.bf16.msra.mxu0 %v544
        %1291 = vmatmul.bf16.gmra.mxu0 %v1256
        %v1292 = vpop.f32.mrf.mxu0
        %v1293 = vadd.f32 0.0, %v1292
        %v1294 = vpop.f32.mrf.mxu0
        %1295 = vdwg.mxu0
        %1296 = vmatpush.bf16.msra.mxu0 %v573
        %1297 = vmatpush.bf16.msra.mxu0 %v569
        %1298 = vmatpush.bf16.msra.mxu0 %v565
        %1299 = vmatpush.bf16.msra.mxu0 %v561
        %1300 = vmatpush.bf16.msra.mxu0 %v557
        %1301 = vmatpush.bf16.msra.mxu0 %v553
        %1302 = vmatpush.bf16.msra.mxu0 %v549
        %1303 = vmatpush.bf16.msra.mxu0 %v545
        %1304 = vmatmul.bf16.gmra.mxu0 %v1256
        %v1305 = vpop.f32.mrf.mxu0
        %v1306 = vadd.f32 0.0, %v1305
        %v1307 = vpop.f32.mrf.mxu0
        %1308 = vdwg.mxu0
        %v1309 = vadd.f32 %v1252, %v1267
        %v1310 = vadd.f32 %v1253, %v1280
        %v1311 = vadd.f32 %v1254, %v1293
        %v1312 = vadd.f32 %v1255, %v1306
        %v1313 = vld [vmem:[%s309] sm:$0xff]
        %v1314 = vld [vmem:[%s309 + $0x8] sm:$0xff]
        %v1315 = vld [vmem:[%s309 + $0x10] sm:$0xff]
        %v1316 = vld [vmem:[%s309 + $0x18] sm:$0xff]
        %v1317 = vpack.c.bf16 %v1246, %v1246
        %1318 = vmatpush.bf16.msra.mxu0 %v792
        %1319 = vmatpush.bf16.msra.mxu0 %v788
        %1320 = vmatpush.bf16.msra.mxu0 %v784
        %1321 = vmatpush.bf16.msra.mxu0 %v780
        %1322 = vmatpush.bf16.msra.mxu0 %v776
        %1323 = vmatpush.bf16.msra.mxu0 %v772
        %1324 = vmatpush.bf16.msra.mxu0 %v768
        %1325 = vmatpush.bf16.msra.mxu0 %v764
        %1326 = vmatmul.bf16.gmra.mxu0 %v1317
        %v1327 = vpop.f32.mrf.mxu0
        %v1328 = vadd.f32 0.0, %v1327
        %v1329 = vpop.f32.mrf.mxu0
        %1330 = vdwg.mxu0
        %1331 = vmatpush.bf16.msra.mxu0 %v793
        %1332 = vmatpush.bf16.msra.mxu0 %v789
        %1333 = vmatpush.bf16.msra.mxu0 %v785
        %1334 = vmatpush.bf16.msra.mxu0 %v781
        %1335 = vmatpush.bf16.msra.mxu0 %v777
        %1336 = vmatpush.bf16.msra.mxu0 %v773
        %1337 = vmatpush.bf16.msra.mxu0 %v769
        %1338 = vmatpush.bf16.msra.mxu0 %v765
        %1339 = vmatmul.bf16.gmra.mxu0 %v1317
        %v1340 = vpop.f32.mrf.mxu0
        %v1341 = vadd.f32 0.0, %v1340
        %v1342 = vpop.f32.mrf.mxu0
        %1343 = vdwg.mxu0
        %1344 = vmatpush.bf16.msra.mxu0 %v794
        %1345 = vmatpush.bf16.msra.mxu0 %v790
        %1346 = vmatpush.bf16.msra.mxu0 %v786
        %1347 = vmatpush.bf16.msra.mxu0 %v782
        %1348 = vmatpush.bf16.msra.mxu0 %v778
        %1349 = vmatpush.bf16.msra.mxu0 %v774
        %1350 = vmatpush.bf16.msra.mxu0 %v770
        %1351 = vmatpush.bf16.msra.mxu0 %v766
        %1352 = vmatmul.bf16.gmra.mxu0 %v1317
        %v1353 = vpop.f32.mrf.mxu0
        %v1354 = vadd.f32 0.0, %v1353
        %v1355 = vpop.f32.mrf.mxu0
        %1356 = vdwg.mxu0
        %1357 = vmatpush.bf16.msra.mxu0 %v795
        %1358 = vmatpush.bf16.msra.mxu0 %v791
        %1359 = vmatpush.bf16.msra.mxu0 %v787
        %1360 = vmatpush.bf16.msra.mxu0 %v783
        %1361 = vmatpush.bf16.msra.mxu0 %v779
        %1362 = vmatpush.bf16.msra.mxu0 %v775
        %1363 = vmatpush.bf16.msra.mxu0 %v771
        %1364 = vmatpush.bf16.msra.mxu0 %v767
        %1365 = vmatmul.bf16.gmra.mxu0 %v1317
        %v1366 = vpop.f32.mrf.mxu0
        %v1367 = vadd.f32 0.0, %v1366
        %v1368 = vpop.f32.mrf.mxu0
        %1369 = vdwg.mxu0
        %v1370 = vadd.f32 %v1313, %v1328
        %v1371 = vadd.f32 %v1314, %v1341
        %v1372 = vadd.f32 %v1315, %v1354
        %v1373 = vadd.f32 %v1316, %v1367
        %v1374 = vmul.f32 %v1309, 0.5
        %v1375 = vtanh.pop %v1374
        %v1376 = vmul.f32 %v1375, 0.5
        %v1377 = vadd.f32 %v1376, 0.5
        %v1378 = vmul.f32 %v1310, 0.5
        %v1379 = vtanh.pop %v1378
        %v1380 = vmul.f32 %v1379, 0.5
        %v1381 = vadd.f32 %v1380, 0.5
        %v1382 = vtanh.pop %v1311
        %v1383 = vmul.f32 %v1312, 0.5
        %v1384 = vtanh.pop %v1383
        %v1385 = vmul.f32 %v1384, 0.5
        %v1386 = vadd.f32 %v1385, 0.5
        %v1387 = vmul.f32 %v1381, %v1226
        %v1388 = vmul.f32 %v1377, %v1382
        %v1389 = vadd.f32 %v1387, %v1388
        %v1390 = vtanh.pop %v1389
        %v1391 = vmul.f32 %v1386, %v1390
        %v1392 = vmul.f32 %v1370, 0.5
        %v1393 = vtanh.pop %v1392
        %v1394 = vmul.f32 %v1393, 0.5
        %v1395 = vadd.f32 %v1394, 0.5
        %v1396 = vmul.f32 %v1371, 0.5
        %v1397 = vtanh.pop %v1396
        %v1398 = vmul.f32 %v1397, 0.5
        %v1399 = vadd.f32 %v1398, 0.5
        %v1400 = vtanh.pop %v1372
        %v1401 = vmul.f32 %v1373, 0.5
        %v1402 = vtanh.pop %v1401
        %v1403 = vmul.f32 %v1402, 0.5
        %v1404 = vadd.f32 %v1403, 0.5
        %v1405 = vmul.f32 %v1399, %v1244
        %v1406 = vmul.f32 %v1395, %v1400
        %v1407 = vadd.f32 %v1405, %v1406
        %v1408 = vtanh.pop %v1407
        %v1409 = vmul.f32 %v1404, %v1408
        %s1410 = scalar_lea.vmem %s354, 24
        %1411 = vst [vmem:[%s1410] sm:$0xff] %v1391
        %1412 = vst [vmem:[%s361] sm:$0xff] %v1409
        %1413 = vst [vmem:[#allocation2] sm:$0xff] %v1391
        %1414 = vst [vmem:[#allocation3] sm:$0xff] %v1389
        %1415 = vst [vmem:[#allocation4] sm:$0xff] %v1409
        %1416 = vst [vmem:[#allocation5] sm:$0xff] %v1407
        %s1417 = smul.u32 4, %s17
        %p1418 = scmp.lt.s32.totalorder %s1417, 7
        %s1419 = scalar_select %p1418, %s1417, 7
        %s1420 = smul.addr %s1419, 8
        %s1421 = scalar_lea.vmem %s3, %s1420
        %s1422 = ssub.s32 1, %s17
        %s1423 = smul.u32 4, %s1422
        %p1424 = scmp.lt.s32.totalorder %s1423, 7
        %s1425 = scalar_select %p1424, %s1423, 7
        %s1426 = smul.addr %s1425, 8
        %s1427 = scalar_lea.vmem %s4, %s1426
        // Predicated region
        $region87: #{forward.6} parent=69 // pred_check
          %p1428 = pneg %p110
        $region88: #{forward.6} parent=69 // pred_check_branch
          %1430 = sbr.rel (%p1428) target = $region90
        $region89: #{forward.6} parent=69 // pred_region
          %s1431 = smul.u32 4, %s17
        $region90: #{forward.6} parent=69 // pred_fallthru
          _
        // Predicated region
        $region91: #{forward.6} parent=69 // pred_check
          %p1432 = pneg %p138
        $region92: #{forward.6} parent=69 // pred_check_branch
          %1434 = sbr.rel (%p1432) target = $region94
        $region93: #{forward.6} parent=69 // pred_region
          %s1435 = ssub.s32 1, %s17
          %s1436 = smul.u32 4, %s1435
        $region94: #{forward.6} parent=69 // pred_fallthru
          _
      $region70: #{forward.6} parent=5 // pred_fallthru
        _
      %p1437 = scmp.le.s32.totalorder 2, %s12
      // Predicated region
      $region95: #{forward.6} parent=5 // pred_check
        %p1438 = pneg %p1437
      $region96: #{forward.6} parent=5 // pred_check_branch
        %1440 = sbr.rel (%p1438) target = $region98
      $region97: #{forward.6} parent=5 // pred_region
        %s1441 = ssub.s32 %s12, 2
        // Predicated region
        $region99: #{forward.6} parent=97 // pred_check
          %p1442 = pneg %p116
        $region100: #{forward.6} parent=97 // pred_check_branch
          %1444 = sbr.rel (%p1442) target = $region102
        $region101: #{forward.6} parent=97 // pred_region
          %s1445 = smul.u32 4, %s18
          %p1446 = scmp.lt.s32.totalorder %s1445, 7
          %s1447 = scalar_select %p1446, %s1445, 7
          %s1448 = smul.addr %s1447, 8
          %s1449 = scalar_lea.vmem %s3, %s1448
        $region102: #{forward.6} parent=97 // pred_fallthru
          _
        // Predicated region
        $region103: #{forward.6} parent=97 // pred_check
          %p1450 = pneg %p144
        $region104: #{forward.6} parent=97 // pred_check_branch
          %1452 = sbr.rel (%p1450) target = $region106
        $region105: #{forward.6} parent=97 // pred_region
          %s1453 = ssub.s32 1, %s18
          %s1454 = smul.u32 4, %s1453
          %p1455 = scmp.lt.s32.totalorder %s1454, 7
          %s1456 = scalar_select %p1455, %s1454, 7
          %s1457 = smul.addr %s1456, 8
          %s1458 = scalar_lea.vmem %s4, %s1457
        $region106: #{forward.6} parent=97 // pred_fallthru
          _
      $region98: #{forward.6} parent=5 // pred_fallthru
        _
    $region6: #{forward.6} parent=1 // loop_footer
      %s16 = sadd.s32 1, %s12
    $region7: #{forward.6} parent=1 // loop_footer_branch
      %11 = sbr.rel target = $region3
    $region8: #{forward.6} parent=1 // loop_exit
      _
    %1459 = vsyncpa [#allocation9], 1
    %s1460 = scalar_lea.sflag [#allocation9], 1
    %1461 = vsyncpa %s1460, 1

</llo_original>
